<compile_context>
chip_gen: v5e
topology: v5e:2x2
jax: 0.10.0
libtpu: 0.0.40
codegen_flags: <defaults>
</compile_context>

<pallas_src>
import jax
import jax.numpy as jnp
from jax.experimental import pallas as pl
from jax.experimental.pallas import tpu as pltpu


def _zero_halo(pad_ref):
    """Zero only the 1-pixel border of the padded scratch; the interior is fully
    rewritten every grid step (so this stays correct under parallel grid semantics)."""
    bt, hp, wp, c = pad_ref.shape
    zrow = jnp.zeros((bt, 1, wp, c), pad_ref.dtype)
    pad_ref[:, 0:1, :, :] = zrow
    pad_ref[:, hp - 1:hp, :, :] = zrow
    zcol = jnp.zeros((bt, hp, 1, c), pad_ref.dtype)
    pad_ref[:, :, 0:1, :] = zcol
    pad_ref[:, :, wp - 1:wp, :] = zcol


def _conv3x3_sm(pad_ref, w_ref, bt, hh, wh, c):
    """3x3 SAME conv as 9 tap matmuls, spatial-major result (Bt*Hh*Wh, Co), f32 acc."""
    m = bt * hh * wh
    acc = None
    for ky in range(3):
        for kx in range(3):
            t = ky * 3 + kx
            tap = pad_ref[:, ky:ky + hh, kx:kx + wh, :].reshape(m, c)
            d = jnp.dot(tap, w_ref[t], preferred_element_type=jnp.float32)
            acc = d if acc is None else acc + d
    return acc


def _conv3x3_cm(pad_ref, w_ref, hh, wh, c):
    """3x3 SAME conv as 9 NT tap matmuls, channel-major result (Cout, Hh*Wh), f32 acc.
    (Only used with Bt == 1.)"""
    acc = None
    for ky in range(3):
        for kx in range(3):
            t = ky * 3 + kx
            tap = pad_ref[:, ky:ky + hh, kx:kx + wh, :].reshape(hh * wh, c)
            d = jax.lax.dot_general(w_ref[t], tap, (((1,), (1,)), ((), ())),
                                    preferred_element_type=jnp.float32)
            acc = d if acc is None else acc + d
    return acc


def _make_down_kernel(channel_major):
    def kernel(x_ref, w1_ref, a1_ref, b1_ref, w2_ref, a2_ref, b2_ref, out_ref,
               pad1_ref, pad2_ref):
        # x_ref block: (2, 2, Bt, Hh, Wh, Cin) -- pool-window dims on leading axes
        bt = x_ref.shape[2]
        hh, wh, cin = x_ref.shape[3], x_ref.shape[4], x_ref.shape[5]
        cmid = w1_ref.shape[2]

        _zero_halo(pad1_ref)
        _zero_halo(pad2_ref)

        # ---- MaxPool2d(2): four aligned ref reads, max fused into the interior store ----
        pad1_ref[:, 1:hh + 1, 1:wh + 1, :] = jnp.maximum(
            jnp.maximum(x_ref[0, 0], x_ref[0, 1]),
            jnp.maximum(x_ref[1, 0], x_ref[1, 1]))

        # ---- conv1: 9-tap accumulation, folded BN + ReLU in f32 ----
        acc1 = _conv3x3_sm(pad1_ref, w1_ref, bt, hh, wh, cin)        # (Bt*Hh*Wh, Cmid) f32
        y1 = jnp.maximum(acc1 * a1_ref[...] + b1_ref[...], 0.0)
        pad2_ref[:, 1:hh + 1, 1:wh + 1, :] = (
            y1.reshape(bt, hh, wh, cmid).astype(pad2_ref.dtype))

        # ---- conv2: 9-tap accumulation, orientation chosen by Cout ----
        if channel_major:
            acc2 = _conv3x3_cm(pad2_ref, w2_ref, hh, wh, cmid)       # (Cout, Hh*Wh) f32
            y2 = jnp.maximum(acc2 * a2_ref[...] + b2_ref[...], 0.0)
            out_ref[0] = y2.astype(out_ref.dtype)
        else:
            acc2 = _conv3x3_sm(pad2_ref, w2_ref, bt, hh, wh, cmid)   # (Bt*Hh*Wh, Cout) f32
            y2 = jnp.maximum(acc2 * a2_ref[...] + b2_ref[...], 0.0)
            cout = y2.shape[1]
            out_ref[...] = y2.reshape(bt, hh * wh, cout).astype(out_ref.dtype)

    return kernel


def _pick_bt(n, hh, wh, channel_major):
    """Fold batch elements per grid step so the MXU streaming dim is ~256."""
    if channel_major:
        return 1
    target = max(1, 256 // max(1, hh * wh))
    best = 1
    for cand in range(1, min(n, target) + 1):
        if n % cand == 0:
            best = cand
    return best


def _vmem_limit_bytes(block_bytes):
    """Generation-aware VMEM limit: cover the working set, cap below physical VMEM."""
    try:
        cap = int(pltpu.get_tpu_info().vmem_capacity_bytes)
    except Exception:
        cap = 64 * 1024 * 1024  # conservative (v7x-sized) fallback
    want = int(block_bytes) + (8 << 20)
    return int(min(max(want, 32 << 20), int(cap * 0.75)))


def down_forward(x_nchw, w1, a1, b1, w2, a2, b2, out_dtype=jnp.float32):
    """x_nchw: (N, Cin, H, W) f32; w*: HWIO (3,3,Ci,Co); a*/b*: folded BN scale/shift.
    Returns (N, Cout, H//2, W//2) in out_dtype (pass bf16 to halve the HBM write)."""
    N, Cin, H, W = x_nchw.shape
    assert H % 2 == 0 and W % 2 == 0, "MaxPool2d(2) pre-split requires even H, W"
    Hh, Wh = H // 2, W // 2
    Cmid, Cout = w1.shape[3], w2.shape[3]

    channel_major = Cout >= 128          # NT conv2 only when Cout fills the MXU rows
    Bt = _pick_bt(N, Hh, Wh, channel_major)

    # NCHW -> (2, 2, N, Hh, Wh, Cin): pool-window dims leading, (Wh, Cin) dense trailing.
    x = jnp.transpose(x_nchw.reshape(N, Cin, Hh, 2, Wh, 2),
                      (3, 5, 0, 2, 4, 1)).astype(jnp.bfloat16)

    w1_t = w1.reshape(9, Cin, Cmid).astype(jnp.bfloat16)          # per-tap (Cin, Cmid)
    a1_ = a1.reshape(1, Cmid).astype(jnp.float32)
    b1_ = b1.reshape(1, Cmid).astype(jnp.float32)

    if channel_major:
        w2_t = jnp.transpose(w2.reshape(9, Cmid, Cout), (0, 2, 1)).astype(jnp.bfloat16)
        a2_ = a2.reshape(Cout, 1).astype(jnp.float32)
        b2_ = b2.reshape(Cout, 1).astype(jnp.float32)
        out_shape = jax.ShapeDtypeStruct((N, Cout, Hh * Wh), out_dtype)
        out_spec = pl.BlockSpec((1, Cout, Hh * Wh), lambda n: (n, 0, 0))
        w2_spec = pl.BlockSpec((9, Cout, Cmid), lambda n: (0, 0, 0))
        ab2_spec = pl.BlockSpec((Cout, 1), lambda n: (0, 0))
    else:
        w2_t = w2.reshape(9, Cmid, Cout).astype(jnp.bfloat16)
        a2_ = a2.reshape(1, Cout).astype(jnp.float32)
        b2_ = b2.reshape(1, Cout).astype(jnp.float32)
        out_shape = jax.ShapeDtypeStruct((N, Hh * Wh, Cout), out_dtype)
        out_spec = pl.BlockSpec((Bt, Hh * Wh, Cout), lambda n: (n, 0, 0))
        w2_spec = pl.BlockSpec((9, Cmid, Cout), lambda n: (0, 0, 0))
        ab2_spec = pl.BlockSpec((1, Cout), lambda n: (0, 0))

    out_itemsize = jax.dtypes.canonicalize_dtype(out_dtype).itemsize
    block_bytes = (
        2 * (4 * Bt * Hh * Wh * Cin * 2)                                 # dbl-buffered input
        + 2 * (Bt * Hh * Wh * Cout * out_itemsize)                       # dbl-buffered output
        + 2 * (9 * (Cin * Cmid + Cmid * Cout) * 2 + (Cmid + Cout) * 8)   # weights / BN
        + Bt * (Hh + 2) * (Wh + 2) * (Cin + Cmid) * 2                    # padded scratches
    )

    out = pl.pallas_call(
        _make_down_kernel(channel_major),
        out_shape=out_shape,
        grid=(N // Bt,),
        in_specs=[
            pl.BlockSpec((2, 2, Bt, Hh, Wh, Cin), lambda n: (0, 0, n, 0, 0, 0)),
            pl.BlockSpec((9, Cin, Cmid), lambda n: (0, 0, 0)),
            pl.BlockSpec((1, Cmid), lambda n: (0, 0)),
            pl.BlockSpec((1, Cmid), lambda n: (0, 0)),
            w2_spec, ab2_spec, ab2_spec,
        ],
        out_specs=out_spec,
        scratch_shapes=[
            pltpu.VMEM((Bt, Hh + 2, Wh + 2, Cin), jnp.bfloat16),   # padded pooled image
            pltpu.VMEM((Bt, Hh + 2, Wh + 2, Cmid), jnp.bfloat16),  # padded conv1 output
        ],
        compiler_params=pltpu.CompilerParams(
            dimension_semantics=("parallel",),
            vmem_limit_bytes=_vmem_limit_bytes(block_bytes),
        ),
    )(x, w1_t, a1_, b1_, w2_t, a2_, b2_)

    if channel_major:
        return out.reshape(N, Cout, Hh, Wh)            # already NCHW-flat
    return jnp.transpose(out.reshape(N, Hh, Wh, Cout), (0, 3, 1, 2))


def reference_forward(x_nchw, w1, a1, b1, w2, a2, b2):
    """Pure-JAX reference: maxpool(2) -> (conv3x3 + folded BN + relu) x2, same
    bf16-operand / f32-accumulate precision as the kernel."""
    x = jnp.transpose(x_nchw, (0, 2, 3, 1))  # NHWC
    N, H, W, C = x.shape
    p = x.reshape(N, H // 2, 2, W // 2, 2, C).max(axis=(2, 4))

    def conv_bn_relu(z, w, a, b):
        y = jax.lax.conv_general_dilated(
            z.astype(jnp.bfloat16), w.astype(jnp.bfloat16),
            window_strides=(1, 1), padding="SAME",
            dimension_numbers=("NHWC", "HWIO", "NHWC"),
            preferred_element_type=jnp.float32)
        return jnp.maximum(y * a + b, 0.0)

    y = conv_bn_relu(p, w1, a1, b1)
    y = conv_bn_relu(y, w2, a2, b2)
    return jnp.transpose(y, (0, 3, 1, 2))


def make_params(key, cin, cout):
    """Deterministic synthetic params. BN (eval mode) folded with conv bias into a
    per-channel scale/shift: y = conv(x, w) * scale + shift."""
    cmid = cout // 2
    k1, k2, k3, k4 = jax.random.split(key, 4)
    eps = 1e-5

    def fold(c, kb):
        cb = jax.random.normal(kb, (c,), jnp.float32) * 0.05
        i = jnp.arange(c, dtype=jnp.float32) / max(c, 1)
        g = 1.0 + 0.2 * i
        be = 0.05 * i
        mu = 0.1 * i
        var = 1.0 + 0.1 * i
        a = g / jnp.sqrt(var + eps)
        b = (cb - mu) * a + be
        return a, b

    w1 = jax.random.normal(k1, (3, 3, cin, cmid), jnp.float32) * 0.1
    a1, b1 = fold(cmid, k2)
    w2 = jax.random.normal(k3, (3, 3, cmid, cout), jnp.float32) * 0.1
    a2, b2 = fold(cout, k4)
    return w1, a1, b1, w2, a2, b2


if __name__ == "__main__":
    # Case 1: small channel counts -> spatial-major conv2 path, batch folding (Bt=2).
    key = jax.random.PRNGKey(0)
    kx, kp = jax.random.split(key)
    N, Cin, H, W, Cout = 2, 4, 16, 16, 8
    x = jax.random.normal(kx, (N, Cin, H, W), jnp.float32)
    params = make_params(kp, Cin, Cout)
    out = jax.block_until_ready(down_forward(x, *params))
    ref = reference_forward(x, *params)
    assert out.shape == (N, Cout, H // 2, W // 2), out.shape
    err1 = float(jnp.max(jnp.abs(out - ref)))
    assert jnp.allclose(out, ref, atol=1e-2, rtol=2e-3), err1

    # Case 2: wide output channels -> channel-major (NT) conv2 path, NCHW-flat output.
    kx2, kp2 = jax.random.split(jax.random.PRNGKey(1))
    N2, Cin2, H2, W2, Cout2 = 1, 4, 16, 16, 128
    x2 = jax.random.normal(kx2, (N2, Cin2, H2, W2), jnp.float32)
    params2 = make_params(kp2, Cin2, Cout2)
    out2 = jax.block_until_ready(down_forward(x2, *params2))
    ref2 = reference_forward(x2, *params2)
    assert out2.shape == (N2, Cout2, H2 // 2, W2 // 2), out2.shape
    err2 = float(jnp.max(jnp.abs(out2 - ref2)))
    assert jnp.allclose(out2, ref2, atol=1e-2, rtol=2e-3), err2

    print("KERNEL_OK")
</pallas_src>

<mosaic_0001>
module attributes {stable_mosaic.version = 11 : i64} {
  func.func @kernel(%arg0: i32, %arg1: memref<2x2x2x8x8x4xbf16, #tpu.memory_space<vmem>>, %arg2: memref<9x4x4xbf16, #tpu.memory_space<vmem>>, %arg3: memref<1x4xf32, #tpu.memory_space<vmem>>, %arg4: memref<1x4xf32, #tpu.memory_space<vmem>>, %arg5: memref<9x4x8xbf16, #tpu.memory_space<vmem>>, %arg6: memref<1x8xf32, #tpu.memory_space<vmem>>, %arg7: memref<1x8xf32, #tpu.memory_space<vmem>>, %arg8: memref<2x64x8xf32, #tpu.memory_space<vmem>>, %arg9: memref<2x10x10x4xbf16, #tpu.memory_space<vmem>>, %arg10: memref<2x10x10x4xbf16, #tpu.memory_space<vmem>>) attributes {dimension_semantics = [#tpu.dimension_semantics<parallel>], iteration_bounds = array<i64: 1>, scalar_prefetch = 0 : i64, scratch_operands = 2 : i64, tpu.core_type = #tpu.core_type<tc>, window_params = [{transform_indices = @transform_0, window_bounds = array<i64: 2, 2, 2, 8, 8, 4>}, {pipeline_mode = #tpu.pipeline_mode<synchronous>, transform_indices = @transform_1, window_bounds = array<i64: 9, 4, 4>}, {pipeline_mode = #tpu.pipeline_mode<synchronous>, transform_indices = @transform_2, window_bounds = array<i64: 1, 4>}, {pipeline_mode = #tpu.pipeline_mode<synchronous>, transform_indices = @transform_3, window_bounds = array<i64: 1, 4>}, {pipeline_mode = #tpu.pipeline_mode<synchronous>, transform_indices = @transform_4, window_bounds = array<i64: 9, 4, 8>}, {pipeline_mode = #tpu.pipeline_mode<synchronous>, transform_indices = @transform_5, window_bounds = array<i64: 1, 8>}, {pipeline_mode = #tpu.pipeline_mode<synchronous>, transform_indices = @transform_6, window_bounds = array<i64: 1, 8>}, {transform_indices = @transform_7, window_bounds = array<i64: 2, 64, 8>}]} {
    %cst = arith.constant 0.000000e+00 : bf16
    %0 = vector.broadcast %cst : bf16 to vector<2x1x10x4xbf16>
    %c0 = arith.constant 0 : index
    %c0_0 = arith.constant 0 : index
    %c0_1 = arith.constant 0 : index
    %c0_2 = arith.constant 0 : index
    %1 = vector.load %arg9[%c0, %c0_0, %c0_1, %c0_2] : memref<2x10x10x4xbf16, #tpu.memory_space<vmem>>, vector<2x1x10x4xbf16>
    tpu.vector_store %arg9[%c0, %c0_0, %c0_1, %c0_2], %0 {strides = array<i32>} : memref<2x10x10x4xbf16, #tpu.memory_space<vmem>>, vector<2x1x10x4xbf16>,
    %c0_3 = arith.constant 0 : index
    %c9 = arith.constant 9 : index
    %c0_4 = arith.constant 0 : index
    %c0_5 = arith.constant 0 : index
    %2 = vector.load %arg9[%c0_3, %c9, %c0_4, %c0_5] : memref<2x10x10x4xbf16, #tpu.memory_space<vmem>>, vector<2x1x10x4xbf16>
    tpu.vector_store %arg9[%c0_3, %c9, %c0_4, %c0_5], %0 {strides = array<i32>} : memref<2x10x10x4xbf16, #tpu.memory_space<vmem>>, vector<2x1x10x4xbf16>,
    %cst_6 = arith.constant 0.000000e+00 : bf16
    %3 = vector.broadcast %cst_6 : bf16 to vector<2x10x1x4xbf16>
    %c0_7 = arith.constant 0 : index
    %c0_8 = arith.constant 0 : index
    %c0_9 = arith.constant 0 : index
    %c0_10 = arith.constant 0 : index
    %4 = vector.load %arg9[%c0_7, %c0_8, %c0_9, %c0_10] : memref<2x10x10x4xbf16, #tpu.memory_space<vmem>>, vector<2x10x1x4xbf16>
    tpu.vector_store %arg9[%c0_7, %c0_8, %c0_9, %c0_10], %3 {strides = array<i32>} : memref<2x10x10x4xbf16, #tpu.memory_space<vmem>>, vector<2x10x1x4xbf16>,
    %c0_11 = arith.constant 0 : index
    %c0_12 = arith.constant 0 : index
    %c9_13 = arith.constant 9 : index
    %c0_14 = arith.constant 0 : index
    %5 = vector.load %arg9[%c0_11, %c0_12, %c9_13, %c0_14] : memref<2x10x10x4xbf16, #tpu.memory_space<vmem>>, vector<2x10x1x4xbf16>
    tpu.vector_store %arg9[%c0_11, %c0_12, %c9_13, %c0_14], %3 {strides = array<i32>} : memref<2x10x10x4xbf16, #tpu.memory_space<vmem>>, vector<2x10x1x4xbf16>,
    %cst_15 = arith.constant 0.000000e+00 : bf16
    %6 = vector.broadcast %cst_15 : bf16 to vector<2x1x10x4xbf16>
    %c0_16 = arith.constant 0 : index
    %c0_17 = arith.constant 0 : index
    %c0_18 = arith.constant 0 : index
    %c0_19 = arith.constant 0 : index
    %7 = vector.load %arg10[%c0_16, %c0_17, %c0_18, %c0_19] : memref<2x10x10x4xbf16, #tpu.memory_space<vmem>>, vector<2x1x10x4xbf16>
    tpu.vector_store %arg10[%c0_16, %c0_17, %c0_18, %c0_19], %6 {strides = array<i32>} : memref<2x10x10x4xbf16, #tpu.memory_space<vmem>>, vector<2x1x10x4xbf16>,
    %c0_20 = arith.constant 0 : index
    %c9_21 = arith.constant 9 : index
    %c0_22 = arith.constant 0 : index
    %c0_23 = arith.constant 0 : index
    %8 = vector.load %arg10[%c0_20, %c9_21, %c0_22, %c0_23] : memref<2x10x10x4xbf16, #tpu.memory_space<vmem>>, vector<2x1x10x4xbf16>
    tpu.vector_store %arg10[%c0_20, %c9_21, %c0_22, %c0_23], %6 {strides = array<i32>} : memref<2x10x10x4xbf16, #tpu.memory_space<vmem>>, vector<2x1x10x4xbf16>,
    %cst_24 = arith.constant 0.000000e+00 : bf16
    %9 = vector.broadcast %cst_24 : bf16 to vector<2x10x1x4xbf16>
    %c0_25 = arith.constant 0 : index
    %c0_26 = arith.constant 0 : index
    %c0_27 = arith.constant 0 : index
    %c0_28 = arith.constant 0 : index
    %10 = vector.load %arg10[%c0_25, %c0_26, %c0_27, %c0_28] : memref<2x10x10x4xbf16, #tpu.memory_space<vmem>>, vector<2x10x1x4xbf16>
    tpu.vector_store %arg10[%c0_25, %c0_26, %c0_27, %c0_28], %9 {strides = array<i32>} : memref<2x10x10x4xbf16, #tpu.memory_space<vmem>>, vector<2x10x1x4xbf16>,
    %c0_29 = arith.constant 0 : index
    %c0_30 = arith.constant 0 : index
    %c9_31 = arith.constant 9 : index
    %c0_32 = arith.constant 0 : index
    %11 = vector.load %arg10[%c0_29, %c0_30, %c9_31, %c0_32] : memref<2x10x10x4xbf16, #tpu.memory_space<vmem>>, vector<2x10x1x4xbf16>
    tpu.vector_store %arg10[%c0_29, %c0_30, %c9_31, %c0_32], %9 {strides = array<i32>} : memref<2x10x10x4xbf16, #tpu.memory_space<vmem>>, vector<2x10x1x4xbf16>,
    %c0_33 = arith.constant 0 : index
    %c0_34 = arith.constant 0 : index
    %c0_35 = arith.constant 0 : index
    %c0_36 = arith.constant 0 : index
    %c0_37 = arith.constant 0 : index
    %c0_38 = arith.constant 0 : index
    %12 = vector.load %arg1[%c0_33, %c0_34, %c0_35, %c0_36, %c0_37, %c0_38] : memref<2x2x2x8x8x4xbf16, #tpu.memory_space<vmem>>, vector<1x1x2x8x8x4xbf16>
    %13 = vector.shape_cast %12 : vector<1x1x2x8x8x4xbf16> to vector<2x8x8x4xbf16>
    %c0_39 = arith.constant 0 : index
    %c1 = arith.constant 1 : index
    %c0_40 = arith.constant 0 : index
    %c0_41 = arith.constant 0 : index
    %c0_42 = arith.constant 0 : index
    %c0_43 = arith.constant 0 : index
    %14 = vector.load %arg1[%c0_39, %c1, %c0_40, %c0_41, %c0_42, %c0_43] : memref<2x2x2x8x8x4xbf16, #tpu.memory_space<vmem>>, vector<1x1x2x8x8x4xbf16>
    %15 = vector.shape_cast %14 : vector<1x1x2x8x8x4xbf16> to vector<2x8x8x4xbf16>
    %16 = arith.maximumf %13, %15 : vector<2x8x8x4xbf16>
    %c1_44 = arith.constant 1 : index
    %c0_45 = arith.constant 0 : index
    %c0_46 = arith.constant 0 : index
    %c0_47 = arith.constant 0 : index
    %c0_48 = arith.constant 0 : index
    %c0_49 = arith.constant 0 : index
    %17 = vector.load %arg1[%c1_44, %c0_45, %c0_46, %c0_47, %c0_48, %c0_49] : memref<2x2x2x8x8x4xbf16, #tpu.memory_space<vmem>>, vector<1x1x2x8x8x4xbf16>
    %18 = vector.shape_cast %17 : vector<1x1x2x8x8x4xbf16> to vector<2x8x8x4xbf16>
    %c1_50 = arith.constant 1 : index
    %c1_51 = arith.constant 1 : index
    %c0_52 = arith.constant 0 : index
    %c0_53 = arith.constant 0 : index
    %c0_54 = arith.constant 0 : index
    %c0_55 = arith.constant 0 : index
    %19 = vector.load %arg1[%c1_50, %c1_51, %c0_52, %c0_53, %c0_54, %c0_55] : memref<2x2x2x8x8x4xbf16, #tpu.memory_space<vmem>>, vector<1x1x2x8x8x4xbf16>
    %20 = vector.shape_cast %19 : vector<1x1x2x8x8x4xbf16> to vector<2x8x8x4xbf16>
    %21 = arith.maximumf %18, %20 : vector<2x8x8x4xbf16>
    %22 = arith.maximumf %16, %21 : vector<2x8x8x4xbf16>
    %c0_56 = arith.constant 0 : index
    %c1_57 = arith.constant 1 : index
    %c1_58 = arith.constant 1 : index
    %c0_59 = arith.constant 0 : index
    %23 = vector.load %arg9[%c0_56, %c1_57, %c1_58, %c0_59] : memref<2x10x10x4xbf16, #tpu.memory_space<vmem>>, vector<2x8x8x4xbf16>
    tpu.vector_store %arg9[%c0_56, %c1_57, %c1_58, %c0_59], %22 {strides = array<i32>} : memref<2x10x10x4xbf16, #tpu.memory_space<vmem>>, vector<2x8x8x4xbf16>,
    %c0_60 = arith.constant 0 : index
    %c0_61 = arith.constant 0 : index
    %c0_62 = arith.constant 0 : index
    %c0_63 = arith.constant 0 : index
    %24 = vector.load %arg9[%c0_60, %c0_61, %c0_62, %c0_63] : memref<2x10x10x4xbf16, #tpu.memory_space<vmem>>, vector<2x8x8x4xbf16>
    %25 = vector.shape_cast %24 : vector<2x8x8x4xbf16> to vector<128x4xbf16>
    %c0_64 = arith.constant 0 : index
    %c0_65 = arith.constant 0 : index
    %c0_66 = arith.constant 0 : index
    %26 = vector.load %arg2[%c0_64, %c0_65, %c0_66] : memref<9x4x4xbf16, #tpu.memory_space<vmem>>, vector<1x4x4xbf16>
    %27 = vector.shape_cast %26 : vector<1x4x4xbf16> to vector<4x4xbf16>
    %cst_67 = arith.constant dense<0.000000e+00> : vector<128x4xf32>
    %28 = tpu.matmul %25, %27, %cst_67 {dimension_numbers = #tpu.dot_dimension_numbers<[1], [0], [0], [1], [0, 0, 1, 1], [], []>} : vector<128x4xbf16>, vector<4x4xbf16>, vector<128x4xf32> -> vector<128x4xf32>
    %c0_68 = arith.constant 0 : index
    %c0_69 = arith.constant 0 : index
    %c1_70 = arith.constant 1 : index
    %c0_71 = arith.constant 0 : index
    %29 = vector.load %arg9[%c0_68, %c0_69, %c1_70, %c0_71] : memref<2x10x10x4xbf16, #tpu.memory_space<vmem>>, vector<2x8x8x4xbf16>
    %30 = vector.shape_cast %29 : vector<2x8x8x4xbf16> to vector<128x4xbf16>
    %c1_72 = arith.constant 1 : index
    %c0_73 = arith.constant 0 : index
    %c0_74 = arith.constant 0 : index
    %31 = vector.load %arg2[%c1_72, %c0_73, %c0_74] : memref<9x4x4xbf16, #tpu.memory_space<vmem>>, vector<1x4x4xbf16>
    %32 = vector.shape_cast %31 : vector<1x4x4xbf16> to vector<4x4xbf16>
    %cst_75 = arith.constant dense<0.000000e+00> : vector<128x4xf32>
    %33 = tpu.matmul %30, %32, %cst_75 {dimension_numbers = #tpu.dot_dimension_numbers<[1], [0], [0], [1], [0, 0, 1, 1], [], []>} : vector<128x4xbf16>, vector<4x4xbf16>, vector<128x4xf32> -> vector<128x4xf32>
    %34 = arith.addf %28, %33 : vector<128x4xf32>
    %c0_76 = arith.constant 0 : index
    %c0_77 = arith.constant 0 : index
    %c2 = arith.constant 2 : index
    %c0_78 = arith.constant 0 : index
    %35 = vector.load %arg9[%c0_76, %c0_77, %c2, %c0_78] : memref<2x10x10x4xbf16, #tpu.memory_space<vmem>>, vector<2x8x8x4xbf16>
    %36 = vector.shape_cast %35 : vector<2x8x8x4xbf16> to vector<128x4xbf16>
    %c2_79 = arith.constant 2 : index
    %c0_80 = arith.constant 0 : index
    %c0_81 = arith.constant 0 : index
    %37 = vector.load %arg2[%c2_79, %c0_80, %c0_81] : memref<9x4x4xbf16, #tpu.memory_space<vmem>>, vector<1x4x4xbf16>
    %38 = vector.shape_cast %37 : vector<1x4x4xbf16> to vector<4x4xbf16>
    %cst_82 = arith.constant dense<0.000000e+00> : vector<128x4xf32>
    %39 = tpu.matmul %36, %38, %cst_82 {dimension_numbers = #tpu.dot_dimension_numbers<[1], [0], [0], [1], [0, 0, 1, 1], [], []>} : vector<128x4xbf16>, vector<4x4xbf16>, vector<128x4xf32> -> vector<128x4xf32>
    %40 = arith.addf %34, %39 : vector<128x4xf32>
    %c0_83 = arith.constant 0 : index
    %c1_84 = arith.constant 1 : index
    %c0_85 = arith.constant 0 : index
    %c0_86 = arith.constant 0 : index
    %41 = vector.load %arg9[%c0_83, %c1_84, %c0_85, %c0_86] : memref<2x10x10x4xbf16, #tpu.memory_space<vmem>>, vector<2x8x8x4xbf16>
    %42 = vector.shape_cast %41 : vector<2x8x8x4xbf16> to vector<128x4xbf16>
    %c3 = arith.constant 3 : index
    %c0_87 = arith.constant 0 : index
    %c0_88 = arith.constant 0 : index
    %43 = vector.load %arg2[%c3, %c0_87, %c0_88] : memref<9x4x4xbf16, #tpu.memory_space<vmem>>, vector<1x4x4xbf16>
    %44 = vector.shape_cast %43 : vector<1x4x4xbf16> to vector<4x4xbf16>
    %cst_89 = arith.constant dense<0.000000e+00> : vector<128x4xf32>
    %45 = tpu.matmul %42, %44, %cst_89 {dimension_numbers = #tpu.dot_dimension_numbers<[1], [0], [0], [1], [0, 0, 1, 1], [], []>} : vector<128x4xbf16>, vector<4x4xbf16>, vector<128x4xf32> -> vector<128x4xf32>
    %46 = arith.addf %40, %45 : vector<128x4xf32>
    %c0_90 = arith.constant 0 : index
    %c1_91 = arith.constant 1 : index
    %c1_92 = arith.constant 1 : index
    %c0_93 = arith.constant 0 : index
    %47 = vector.load %arg9[%c0_90, %c1_91, %c1_92, %c0_93] : memref<2x10x10x4xbf16, #tpu.memory_space<vmem>>, vector<2x8x8x4xbf16>
    %48 = vector.shape_cast %47 : vector<2x8x8x4xbf16> to vector<128x4xbf16>
    %c4 = arith.constant 4 : index
    %c0_94 = arith.constant 0 : index
    %c0_95 = arith.constant 0 : index
    %49 = vector.load %arg2[%c4, %c0_94, %c0_95] : memref<9x4x4xbf16, #tpu.memory_space<vmem>>, vector<1x4x4xbf16>
    %50 = vector.shape_cast %49 : vector<1x4x4xbf16> to vector<4x4xbf16>
    %cst_96 = arith.constant dense<0.000000e+00> : vector<128x4xf32>
    %51 = tpu.matmul %48, %50, %cst_96 {dimension_numbers = #tpu.dot_dimension_numbers<[1], [0], [0], [1], [0, 0, 1, 1], [], []>} : vector<128x4xbf16>, vector<4x4xbf16>, vector<128x4xf32> -> vector<128x4xf32>
    %52 = arith.addf %46, %51 : vector<128x4xf32>
    %c0_97 = arith.constant 0 : index
    %c1_98 = arith.constant 1 : index
    %c2_99 = arith.constant 2 : index
    %c0_100 = arith.constant 0 : index
    %53 = vector.load %arg9[%c0_97, %c1_98, %c2_99, %c0_100] : memref<2x10x10x4xbf16, #tpu.memory_space<vmem>>, vector<2x8x8x4xbf16>
    %54 = vector.shape_cast %53 : vector<2x8x8x4xbf16> to vector<128x4xbf16>
    %c5 = arith.constant 5 : index
    %c0_101 = arith.constant 0 : index
    %c0_102 = arith.constant 0 : index
    %55 = vector.load %arg2[%c5, %c0_101, %c0_102] : memref<9x4x4xbf16, #tpu.memory_space<vmem>>, vector<1x4x4xbf16>
    %56 = vector.shape_cast %55 : vector<1x4x4xbf16> to vector<4x4xbf16>
    %cst_103 = arith.constant dense<0.000000e+00> : vector<128x4xf32>
    %57 = tpu.matmul %54, %56, %cst_103 {dimension_numbers = #tpu.dot_dimension_numbers<[1], [0], [0], [1], [0, 0, 1, 1], [], []>} : vector<128x4xbf16>, vector<4x4xbf16>, vector<128x4xf32> -> vector<128x4xf32>
    %58 = arith.addf %52, %57 : vector<128x4xf32>
    %c0_104 = arith.constant 0 : index
    %c2_105 = arith.constant 2 : index
    %c0_106 = arith.constant 0 : index
    %c0_107 = arith.constant 0 : index
    %59 = vector.load %arg9[%c0_104, %c2_105, %c0_106, %c0_107] : memref<2x10x10x4xbf16, #tpu.memory_space<vmem>>, vector<2x8x8x4xbf16>
    %60 = vector.shape_cast %59 : vector<2x8x8x4xbf16> to vector<128x4xbf16>
    %c6 = arith.constant 6 : index
    %c0_108 = arith.constant 0 : index
    %c0_109 = arith.constant 0 : index
    %61 = vector.load %arg2[%c6, %c0_108, %c0_109] : memref<9x4x4xbf16, #tpu.memory_space<vmem>>, vector<1x4x4xbf16>
    %62 = vector.shape_cast %61 : vector<1x4x4xbf16> to vector<4x4xbf16>
    %cst_110 = arith.constant dense<0.000000e+00> : vector<128x4xf32>
    %63 = tpu.matmul %60, %62, %cst_110 {dimension_numbers = #tpu.dot_dimension_numbers<[1], [0], [0], [1], [0, 0, 1, 1], [], []>} : vector<128x4xbf16>, vector<4x4xbf16>, vector<128x4xf32> -> vector<128x4xf32>
    %64 = arith.addf %58, %63 : vector<128x4xf32>
    %c0_111 = arith.constant 0 : index
    %c2_112 = arith.constant 2 : index
    %c1_113 = arith.constant 1 : index
    %c0_114 = arith.constant 0 : index
    %65 = vector.load %arg9[%c0_111, %c2_112, %c1_113, %c0_114] : memref<2x10x10x4xbf16, #tpu.memory_space<vmem>>, vector<2x8x8x4xbf16>
    %66 = vector.shape_cast %65 : vector<2x8x8x4xbf16> to vector<128x4xbf16>
    %c7 = arith.constant 7 : index
    %c0_115 = arith.constant 0 : index
    %c0_116 = arith.constant 0 : index
    %67 = vector.load %arg2[%c7, %c0_115, %c0_116] : memref<9x4x4xbf16, #tpu.memory_space<vmem>>, vector<1x4x4xbf16>
    %68 = vector.shape_cast %67 : vector<1x4x4xbf16> to vector<4x4xbf16>
    %cst_117 = arith.constant dense<0.000000e+00> : vector<128x4xf32>
    %69 = tpu.matmul %66, %68, %cst_117 {dimension_numbers = #tpu.dot_dimension_numbers<[1], [0], [0], [1], [0, 0, 1, 1], [], []>} : vector<128x4xbf16>, vector<4x4xbf16>, vector<128x4xf32> -> vector<128x4xf32>
    %70 = arith.addf %64, %69 : vector<128x4xf32>
    %c0_118 = arith.constant 0 : index
    %c2_119 = arith.constant 2 : index
    %c2_120 = arith.constant 2 : index
    %c0_121 = arith.constant 0 : index
    %71 = vector.load %arg9[%c0_118, %c2_119, %c2_120, %c0_121] : memref<2x10x10x4xbf16, #tpu.memory_space<vmem>>, vector<2x8x8x4xbf16>
    %72 = vector.shape_cast %71 : vector<2x8x8x4xbf16> to vector<128x4xbf16>
    %c8 = arith.constant 8 : index
    %c0_122 = arith.constant 0 : index
    %c0_123 = arith.constant 0 : index
    %73 = vector.load %arg2[%c8, %c0_122, %c0_123] : memref<9x4x4xbf16, #tpu.memory_space<vmem>>, vector<1x4x4xbf16>
    %74 = vector.shape_cast %73 : vector<1x4x4xbf16> to vector<4x4xbf16>
    %cst_124 = arith.constant dense<0.000000e+00> : vector<128x4xf32>
    %75 = tpu.matmul %72, %74, %cst_124 {dimension_numbers = #tpu.dot_dimension_numbers<[1], [0], [0], [1], [0, 0, 1, 1], [], []>} : vector<128x4xbf16>, vector<4x4xbf16>, vector<128x4xf32> -> vector<128x4xf32>
    %76 = arith.addf %70, %75 : vector<128x4xf32>
    %c0_125 = arith.constant 0 : index
    %c0_126 = arith.constant 0 : index
    %77 = vector.load %arg3[%c0_125, %c0_126] : memref<1x4xf32, #tpu.memory_space<vmem>>, vector<1x4xf32>
    %78 = vector.broadcast %77 : vector<1x4xf32> to vector<128x4xf32>
    %79 = arith.mulf %76, %78 : vector<128x4xf32>
    %c0_127 = arith.constant 0 : index
    %c0_128 = arith.constant 0 : index
    %80 = vector.load %arg4[%c0_127, %c0_128] : memref<1x4xf32, #tpu.memory_space<vmem>>, vector<1x4xf32>
    %81 = vector.broadcast %80 : vector<1x4xf32> to vector<128x4xf32>
    %82 = arith.addf %79, %81 : vector<128x4xf32>
    %cst_129 = arith.constant 0.000000e+00 : f32
    %83 = vector.broadcast %cst_129 : f32 to vector<128x4xf32>
    %84 = arith.maximumf %82, %83 : vector<128x4xf32>
    %85 = vector.shape_cast %84 : vector<128x4xf32> to vector<2x8x8x4xf32>
    %86 = arith.truncf %85 : vector<2x8x8x4xf32> to vector<2x8x8x4xbf16>
    %c0_130 = arith.constant 0 : index
    %c1_131 = arith.constant 1 : index
    %c1_132 = arith.constant 1 : index
    %c0_133 = arith.constant 0 : index
    %87 = vector.load %arg10[%c0_130, %c1_131, %c1_132, %c0_133] : memref<2x10x10x4xbf16, #tpu.memory_space<vmem>>, vector<2x8x8x4xbf16>
    tpu.vector_store %arg10[%c0_130, %c1_131, %c1_132, %c0_133], %86 {strides = array<i32>} : memref<2x10x10x4xbf16, #tpu.memory_space<vmem>>, vector<2x8x8x4xbf16>,
    %c0_134 = arith.constant 0 : index
    %c0_135 = arith.constant 0 : index
    %c0_136 = arith.constant 0 : index
    %c0_137 = arith.constant 0 : index
    %88 = vector.load %arg10[%c0_134, %c0_135, %c0_136, %c0_137] : memref<2x10x10x4xbf16, #tpu.memory_space<vmem>>, vector<2x8x8x4xbf16>
    %89 = vector.shape_cast %88 : vector<2x8x8x4xbf16> to vector<128x4xbf16>
    %c0_138 = arith.constant 0 : index
    %c0_139 = arith.constant 0 : index
    %c0_140 = arith.constant 0 : index
    %90 = vector.load %arg5[%c0_138, %c0_139, %c0_140] : memref<9x4x8xbf16, #tpu.memory_space<vmem>>, vector<1x4x8xbf16>
    %91 = vector.shape_cast %90 : vector<1x4x8xbf16> to vector<4x8xbf16>
    %cst_141 = arith.constant dense<0.000000e+00> : vector<128x8xf32>
    %92 = tpu.matmul %89, %91, %cst_141 {dimension_numbers = #tpu.dot_dimension_numbers<[1], [0], [0], [1], [0, 0, 1, 1], [], []>} : vector<128x4xbf16>, vector<4x8xbf16>, vector<128x8xf32> -> vector<128x8xf32>
    %c0_142 = arith.constant 0 : index
    %c0_143 = arith.constant 0 : index
    %c1_144 = arith.constant 1 : index
    %c0_145 = arith.constant 0 : index
    %93 = vector.load %arg10[%c0_142, %c0_143, %c1_144, %c0_145] : memref<2x10x10x4xbf16, #tpu.memory_space<vmem>>, vector<2x8x8x4xbf16>
    %94 = vector.shape_cast %93 : vector<2x8x8x4xbf16> to vector<128x4xbf16>
    %c1_146 = arith.constant 1 : index
    %c0_147 = arith.constant 0 : index
    %c0_148 = arith.constant 0 : index
    %95 = vector.load %arg5[%c1_146, %c0_147, %c0_148] : memref<9x4x8xbf16, #tpu.memory_space<vmem>>, vector<1x4x8xbf16>
    %96 = vector.shape_cast %95 : vector<1x4x8xbf16> to vector<4x8xbf16>
    %cst_149 = arith.constant dense<0.000000e+00> : vector<128x8xf32>
    %97 = tpu.matmul %94, %96, %cst_149 {dimension_numbers = #tpu.dot_dimension_numbers<[1], [0], [0], [1], [0, 0, 1, 1], [], []>} : vector<128x4xbf16>, vector<4x8xbf16>, vector<128x8xf32> -> vector<128x8xf32>
    %98 = arith.addf %92, %97 : vector<128x8xf32>
    %c0_150 = arith.constant 0 : index
    %c0_151 = arith.constant 0 : index
    %c2_152 = arith.constant 2 : index
    %c0_153 = arith.constant 0 : index
    %99 = vector.load %arg10[%c0_150, %c0_151, %c2_152, %c0_153] : memref<2x10x10x4xbf16, #tpu.memory_space<vmem>>, vector<2x8x8x4xbf16>
    %100 = vector.shape_cast %99 : vector<2x8x8x4xbf16> to vector<128x4xbf16>
    %c2_154 = arith.constant 2 : index
    %c0_155 = arith.constant 0 : index
    %c0_156 = arith.constant 0 : index
    %101 = vector.load %arg5[%c2_154, %c0_155, %c0_156] : memref<9x4x8xbf16, #tpu.memory_space<vmem>>, vector<1x4x8xbf16>
    %102 = vector.shape_cast %101 : vector<1x4x8xbf16> to vector<4x8xbf16>
    %cst_157 = arith.constant dense<0.000000e+00> : vector<128x8xf32>
    %103 = tpu.matmul %100, %102, %cst_157 {dimension_numbers = #tpu.dot_dimension_numbers<[1], [0], [0], [1], [0, 0, 1, 1], [], []>} : vector<128x4xbf16>, vector<4x8xbf16>, vector<128x8xf32> -> vector<128x8xf32>
    %104 = arith.addf %98, %103 : vector<128x8xf32>
    %c0_158 = arith.constant 0 : index
    %c1_159 = arith.constant 1 : index
    %c0_160 = arith.constant 0 : index
    %c0_161 = arith.constant 0 : index
    %105 = vector.load %arg10[%c0_158, %c1_159, %c0_160, %c0_161] : memref<2x10x10x4xbf16, #tpu.memory_space<vmem>>, vector<2x8x8x4xbf16>
    %106 = vector.shape_cast %105 : vector<2x8x8x4xbf16> to vector<128x4xbf16>
    %c3_162 = arith.constant 3 : index
    %c0_163 = arith.constant 0 : index
    %c0_164 = arith.constant 0 : index
    %107 = vector.load %arg5[%c3_162, %c0_163, %c0_164] : memref<9x4x8xbf16, #tpu.memory_space<vmem>>, vector<1x4x8xbf16>
    %108 = vector.shape_cast %107 : vector<1x4x8xbf16> to vector<4x8xbf16>
    %cst_165 = arith.constant dense<0.000000e+00> : vector<128x8xf32>
    %109 = tpu.matmul %106, %108, %cst_165 {dimension_numbers = #tpu.dot_dimension_numbers<[1], [0], [0], [1], [0, 0, 1, 1], [], []>} : vector<128x4xbf16>, vector<4x8xbf16>, vector<128x8xf32> -> vector<128x8xf32>
    %110 = arith.addf %104, %109 : vector<128x8xf32>
    %c0_166 = arith.constant 0 : index
    %c1_167 = arith.constant 1 : index
    %c1_168 = arith.constant 1 : index
    %c0_169 = arith.constant 0 : index
    %111 = vector.load %arg10[%c0_166, %c1_167, %c1_168, %c0_169] : memref<2x10x10x4xbf16, #tpu.memory_space<vmem>>, vector<2x8x8x4xbf16>
    %112 = vector.shape_cast %111 : vector<2x8x8x4xbf16> to vector<128x4xbf16>
    %c4_170 = arith.constant 4 : index
    %c0_171 = arith.constant 0 : index
    %c0_172 = arith.constant 0 : index
    %113 = vector.load %arg5[%c4_170, %c0_171, %c0_172] : memref<9x4x8xbf16, #tpu.memory_space<vmem>>, vector<1x4x8xbf16>
    %114 = vector.shape_cast %113 : vector<1x4x8xbf16> to vector<4x8xbf16>
    %cst_173 = arith.constant dense<0.000000e+00> : vector<128x8xf32>
    %115 = tpu.matmul %112, %114, %cst_173 {dimension_numbers = #tpu.dot_dimension_numbers<[1], [0], [0], [1], [0, 0, 1, 1], [], []>} : vector<128x4xbf16>, vector<4x8xbf16>, vector<128x8xf32> -> vector<128x8xf32>
    %116 = arith.addf %110, %115 : vector<128x8xf32>
    %c0_174 = arith.constant 0 : index
    %c1_175 = arith.constant 1 : index
    %c2_176 = arith.constant 2 : index
    %c0_177 = arith.constant 0 : index
    %117 = vector.load %arg10[%c0_174, %c1_175, %c2_176, %c0_177] : memref<2x10x10x4xbf16, #tpu.memory_space<vmem>>, vector<2x8x8x4xbf16>
    %118 = vector.shape_cast %117 : vector<2x8x8x4xbf16> to vector<128x4xbf16>
    %c5_178 = arith.constant 5 : index
    %c0_179 = arith.constant 0 : index
    %c0_180 = arith.constant 0 : index
    %119 = vector.load %arg5[%c5_178, %c0_179, %c0_180] : memref<9x4x8xbf16, #tpu.memory_space<vmem>>, vector<1x4x8xbf16>
    %120 = vector.shape_cast %119 : vector<1x4x8xbf16> to vector<4x8xbf16>
    %cst_181 = arith.constant dense<0.000000e+00> : vector<128x8xf32>
    %121 = tpu.matmul %118, %120, %cst_181 {dimension_numbers = #tpu.dot_dimension_numbers<[1], [0], [0], [1], [0, 0, 1, 1], [], []>} : vector<128x4xbf16>, vector<4x8xbf16>, vector<128x8xf32> -> vector<128x8xf32>
    %122 = arith.addf %116, %121 : vector<128x8xf32>
    %c0_182 = arith.constant 0 : index
    %c2_183 = arith.constant 2 : index
    %c0_184 = arith.constant 0 : index
    %c0_185 = arith.constant 0 : index
    %123 = vector.load %arg10[%c0_182, %c2_183, %c0_184, %c0_185] : memref<2x10x10x4xbf16, #tpu.memory_space<vmem>>, vector<2x8x8x4xbf16>
    %124 = vector.shape_cast %123 : vector<2x8x8x4xbf16> to vector<128x4xbf16>
    %c6_186 = arith.constant 6 : index
    %c0_187 = arith.constant 0 : index
    %c0_188 = arith.constant 0 : index
    %125 = vector.load %arg5[%c6_186, %c0_187, %c0_188] : memref<9x4x8xbf16, #tpu.memory_space<vmem>>, vector<1x4x8xbf16>
    %126 = vector.shape_cast %125 : vector<1x4x8xbf16> to vector<4x8xbf16>
    %cst_189 = arith.constant dense<0.000000e+00> : vector<128x8xf32>
    %127 = tpu.matmul %124, %126, %cst_189 {dimension_numbers = #tpu.dot_dimension_numbers<[1], [0], [0], [1], [0, 0, 1, 1], [], []>} : vector<128x4xbf16>, vector<4x8xbf16>, vector<128x8xf32> -> vector<128x8xf32>
    %128 = arith.addf %122, %127 : vector<128x8xf32>
    %c0_190 = arith.constant 0 : index
    %c2_191 = arith.constant 2 : index
    %c1_192 = arith.constant 1 : index
    %c0_193 = arith.constant 0 : index
    %129 = vector.load %arg10[%c0_190, %c2_191, %c1_192, %c0_193] : memref<2x10x10x4xbf16, #tpu.memory_space<vmem>>, vector<2x8x8x4xbf16>
    %130 = vector.shape_cast %129 : vector<2x8x8x4xbf16> to vector<128x4xbf16>
    %c7_194 = arith.constant 7 : index
    %c0_195 = arith.constant 0 : index
    %c0_196 = arith.constant 0 : index
    %131 = vector.load %arg5[%c7_194, %c0_195, %c0_196] : memref<9x4x8xbf16, #tpu.memory_space<vmem>>, vector<1x4x8xbf16>
    %132 = vector.shape_cast %131 : vector<1x4x8xbf16> to vector<4x8xbf16>
    %cst_197 = arith.constant dense<0.000000e+00> : vector<128x8xf32>
    %133 = tpu.matmul %130, %132, %cst_197 {dimension_numbers = #tpu.dot_dimension_numbers<[1], [0], [0], [1], [0, 0, 1, 1], [], []>} : vector<128x4xbf16>, vector<4x8xbf16>, vector<128x8xf32> -> vector<128x8xf32>
    %134 = arith.addf %128, %133 : vector<128x8xf32>
    %c0_198 = arith.constant 0 : index
    %c2_199 = arith.constant 2 : index
    %c2_200 = arith.constant 2 : index
    %c0_201 = arith.constant 0 : index
    %135 = vector.load %arg10[%c0_198, %c2_199, %c2_200, %c0_201] : memref<2x10x10x4xbf16, #tpu.memory_space<vmem>>, vector<2x8x8x4xbf16>
    %136 = vector.shape_cast %135 : vector<2x8x8x4xbf16> to vector<128x4xbf16>
    %c8_202 = arith.constant 8 : index
    %c0_203 = arith.constant 0 : index
    %c0_204 = arith.constant 0 : index
    %137 = vector.load %arg5[%c8_202, %c0_203, %c0_204] : memref<9x4x8xbf16, #tpu.memory_space<vmem>>, vector<1x4x8xbf16>
    %138 = vector.shape_cast %137 : vector<1x4x8xbf16> to vector<4x8xbf16>
    %cst_205 = arith.constant dense<0.000000e+00> : vector<128x8xf32>
    %139 = tpu.matmul %136, %138, %cst_205 {dimension_numbers = #tpu.dot_dimension_numbers<[1], [0], [0], [1], [0, 0, 1, 1], [], []>} : vector<128x4xbf16>, vector<4x8xbf16>, vector<128x8xf32> -> vector<128x8xf32>
    %140 = arith.addf %134, %139 : vector<128x8xf32>
    %c0_206 = arith.constant 0 : index
    %c0_207 = arith.constant 0 : index
    %141 = vector.load %arg6[%c0_206, %c0_207] : memref<1x8xf32, #tpu.memory_space<vmem>>, vector<1x8xf32>
    %142 = vector.broadcast %141 : vector<1x8xf32> to vector<128x8xf32>
    %143 = arith.mulf %140, %142 : vector<128x8xf32>
    %c0_208 = arith.constant 0 : index
    %c0_209 = arith.constant 0 : index
    %144 = vector.load %arg7[%c0_208, %c0_209] : memref<1x8xf32, #tpu.memory_space<vmem>>, vector<1x8xf32>
    %145 = vector.broadcast %144 : vector<1x8xf32> to vector<128x8xf32>
    %146 = arith.addf %143, %145 : vector<128x8xf32>
    %cst_210 = arith.constant 0.000000e+00 : f32
    %147 = vector.broadcast %cst_210 : f32 to vector<128x8xf32>
    %148 = arith.maximumf %146, %147 : vector<128x8xf32>
    %149 = vector.shape_cast %148 : vector<128x8xf32> to vector<2x64x8xf32>
    %c0_211 = arith.constant 0 : index
    %c0_212 = arith.constant 0 : index
    %c0_213 = arith.constant 0 : index
    %150 = vector.load %arg8[%c0_211, %c0_212, %c0_213] : memref<2x64x8xf32, #tpu.memory_space<vmem>>, vector<2x64x8xf32>
    tpu.vector_store %arg8[%c0_211, %c0_212, %c0_213], %149 {strides = array<i32>} : memref<2x64x8xf32, #tpu.memory_space<vmem>>, vector<2x64x8xf32>,
    return
  }
  func.func @transform_0(%arg0: i32) -> (i32, i32, i32, i32, i32, i32) {
    %c0_i32 = arith.constant 0 : i32
    %c0_i32_0 = arith.constant 0 : i32
    %c0_i32_1 = arith.constant 0 : i32
    %c0_i32_2 = arith.constant 0 : i32
    %c0_i32_3 = arith.constant 0 : i32
    %c0_i32_4 = arith.constant 0 : i32
    return %c0_i32, %c0_i32_0, %arg0, %c0_i32_1, %c0_i32_2, %c0_i32_3 : i32, i32, i32, i32, i32, i32
  }
  func.func @transform_1(%arg0: i32) -> (i32, i32, i32) {
    %c0_i32 = arith.constant 0 : i32
    %c0_i32_0 = arith.constant 0 : i32
    %c0_i32_1 = arith.constant 0 : i32
    %c0_i32_2 = arith.constant 0 : i32
    return %c0_i32, %c0_i32_0, %c0_i32_1 : i32, i32, i32
  }
  func.func @transform_2(%arg0: i32) -> (i32, i32) {
    %c0_i32 = arith.constant 0 : i32
    %c0_i32_0 = arith.constant 0 : i32
    %c0_i32_1 = arith.constant 0 : i32
    return %c0_i32, %c0_i32_0 : i32, i32
  }
  func.func @transform_3(%arg0: i32) -> (i32, i32) {
    %c0_i32 = arith.constant 0 : i32
    %c0_i32_0 = arith.constant 0 : i32
    %c0_i32_1 = arith.constant 0 : i32
    return %c0_i32, %c0_i32_0 : i32, i32
  }
  func.func @transform_4(%arg0: i32) -> (i32, i32, i32) {
    %c0_i32 = arith.constant 0 : i32
    %c0_i32_0 = arith.constant 0 : i32
    %c0_i32_1 = arith.constant 0 : i32
    %c0_i32_2 = arith.constant 0 : i32
    return %c0_i32, %c0_i32_0, %c0_i32_1 : i32, i32, i32
  }
  func.func @transform_5(%arg0: i32) -> (i32, i32) {
    %c0_i32 = arith.constant 0 : i32
    %c0_i32_0 = arith.constant 0 : i32
    %c0_i32_1 = arith.constant 0 : i32
    return %c0_i32, %c0_i32_0 : i32, i32
  }
  func.func @transform_6(%arg0: i32) -> (i32, i32) {
    %c0_i32 = arith.constant 0 : i32
    %c0_i32_0 = arith.constant 0 : i32
    %c0_i32_1 = arith.constant 0 : i32
    return %c0_i32, %c0_i32_0 : i32, i32
  }
  func.func @transform_7(%arg0: i32) -> (i32, i32, i32) {
    %c0_i32 = arith.constant 0 : i32
    %c0_i32_0 = arith.constant 0 : i32
    %c0_i32_1 = arith.constant 0 : i32
    return %arg0, %c0_i32, %c0_i32_0 : i32, i32, i32
  }
}

</mosaic_0001>

<llo_original>
// kernel: tpu_custom_call.1
$region0: #{tpu_custom_call.1}
  #allocation0 [shape = 'u32[]', space=smem, size = 0x4, offset = 0x4, fixed_abs, tag = 'smem constant byte address 0x4 - core index']
  #allocation1 [shape = 'u32[72,128]{1,0:T(1,128)}', space=vmem, size = 0x9000, scoped, tag = 'internal scratch']
  #allocation2 [shape = 'bf16[2,10,10,4]{3,2,1,0:T(8,128)(2,1)}', space=vmem, size = 0x14000, scoped, tag = 'scratch operand']
  #allocation3 [shape = 'bf16[2,10,10,4]{3,2,1,0:T(8,128)(2,1)}', space=vmem, size = 0x14000, scoped, tag = 'scratch operand']
  %s0 = inlined_call_operand.vmem [shape: bf16[2,2,2,8,8,4], index: 0, kind: input, shape index: {}]
  %s1 = inlined_call_operand.vmem [shape: bf16[9,4,4], index: 1, kind: input, shape index: {}]
  %s2 = inlined_call_operand.vmem [shape: f32[1,4], index: 2, kind: input, shape index: {}]
  %s3 = inlined_call_operand.vmem [shape: f32[1,4], index: 3, kind: input, shape index: {}]
  %s4 = inlined_call_operand.vmem [shape: bf16[9,4,8], index: 4, kind: input, shape index: {}]
  %s5 = inlined_call_operand.vmem [shape: f32[1,8], index: 5, kind: input, shape index: {}]
  %s6 = inlined_call_operand.vmem [shape: f32[1,8], index: 6, kind: input, shape index: {}]
  %s7 = inlined_call_operand.vmem [shape: f32[2,64,8], index: 7, kind: output, shape index: {}]
  %s8 = sld [smem:[#allocation0]]
  $region38: #{tpu_custom_call.1} parent=0
    _
  %s10 = ssub.s32 1, %s8
  %s11 = scalar_select 0, %s10, %s8
  // Predicated region
  $region2: #{tpu_custom_call.1} parent=0 // pred_check
    _
  $region3: #{tpu_custom_call.1} parent=0 // pred_check_branch
    %13 = sbr.rel (0) target = $region5
  $region4: #{tpu_custom_call.1} parent=0 // pred_region
    _
  $region5: #{tpu_custom_call.1} parent=0 // pred_fallthru
    _
  // Predicated region
  $region6: #{tpu_custom_call.1} parent=0 // pred_check
    _
  $region7: #{tpu_custom_call.1} parent=0 // pred_check_branch
    %15 = sbr.rel (0) target = $region9
  $region8: #{tpu_custom_call.1} parent=0 // pred_region
    _
  $region9: #{tpu_custom_call.1} parent=0 // pred_fallthru
    _
  // Predicated region
  $region10: #{tpu_custom_call.1} parent=0 // pred_check
    _
  $region11: #{tpu_custom_call.1} parent=0 // pred_check_branch
    %17 = sbr.rel (0) target = $region13
  $region12: #{tpu_custom_call.1} parent=0 // pred_region
    _
  $region13: #{tpu_custom_call.1} parent=0 // pred_fallthru
    _
  // Predicated region
  $region14: #{tpu_custom_call.1} parent=0 // pred_check
    _
  $region15: #{tpu_custom_call.1} parent=0 // pred_check_branch
    %19 = sbr.rel (0) target = $region17
  $region16: #{tpu_custom_call.1} parent=0 // pred_region
    _
  $region17: #{tpu_custom_call.1} parent=0 // pred_fallthru
    _
  // Predicated region
  $region18: #{tpu_custom_call.1} parent=0 // pred_check
    _
  $region19: #{tpu_custom_call.1} parent=0 // pred_check_branch
    %21 = sbr.rel (0) target = $region21
  $region20: #{tpu_custom_call.1} parent=0 // pred_region
    _
  $region21: #{tpu_custom_call.1} parent=0 // pred_fallthru
    _
  // Predicated region
  $region22: #{tpu_custom_call.1} parent=0 // pred_check
    _
  $region23: #{tpu_custom_call.1} parent=0 // pred_check_branch
    %23 = sbr.rel (0) target = $region25
  $region24: #{tpu_custom_call.1} parent=0 // pred_region
    _
  $region25: #{tpu_custom_call.1} parent=0 // pred_fallthru
    _
  // Predicated region
  $region26: #{tpu_custom_call.1} parent=0 // pred_check
    _
  $region27: #{tpu_custom_call.1} parent=0 // pred_check_branch
    %25 = sbr.rel (0) target = $region29
  $region28: #{tpu_custom_call.1} parent=0 // pred_region
    _
  $region29: #{tpu_custom_call.1} parent=0 // pred_fallthru
    _
  %vm27 = vcmask 27648
  %28 = vst.msk [vmem:[#allocation2] sm:$0xf] %vm27, 0
  %vm29 = vcmask 24576
  %30 = vst.msk [vmem:[#allocation2 + $0x4] sm:$0x1] %vm29, 0
  %31 = vst.msk [vmem:[#allocation2 + $0x50] sm:$0xf] %vm27, 0
  %32 = vst.msk [vmem:[#allocation2 + $0x54] sm:$0x1] %vm29, 0
  %s33 = scalar_lea.vmem [#allocation2], 72
  %34 = vst.msk [vmem:[%s33] sm:$0xf] %vm27, 0
  %35 = vst.msk [vmem:[%s33 + $0x4] sm:$0x1] %vm29, 0
  %36 = vst.msk [vmem:[%s33 + $0x50] sm:$0xf] %vm27, 0
  %37 = vst.msk [vmem:[%s33 + $0x54] sm:$0x1] %vm29, 0
  %vm38 = vcmask 24576
  %vm39 = vsmask.f32 256
  %vm40 = vmand %vm38, %vm39
  %v41 = vld [vmem:[#allocation2] sm:$0x1]
  %v42 = vsel %vm40, 0, %v41
  %43 = vst [vmem:[#allocation2] sm:$0x1] %v42
  %v44 = vld [vmem:[#allocation2 + $0x8] sm:$0x1]
  %v45 = vsel %vm40, 0, %v44
  %46 = vst [vmem:[#allocation2 + $0x8] sm:$0x1] %v45
  %v47 = vld [vmem:[#allocation2 + $0x10] sm:$0x1]
  %v48 = vsel %vm40, 0, %v47
  %49 = vst [vmem:[#allocation2 + $0x10] sm:$0x1] %v48
  %v50 = vld [vmem:[#allocation2 + $0x18] sm:$0x1]
  %v51 = vsel %vm40, 0, %v50
  %52 = vst [vmem:[#allocation2 + $0x18] sm:$0x1] %v51
  %v53 = vld [vmem:[#allocation2 + $0x20] sm:$0x1]
  %v54 = vsel %vm40, 0, %v53
  %55 = vst [vmem:[#allocation2 + $0x20] sm:$0x1] %v54
  %v56 = vld [vmem:[#allocation2 + $0x28] sm:$0x1]
  %v57 = vsel %vm40, 0, %v56
  %58 = vst [vmem:[#allocation2 + $0x28] sm:$0x1] %v57
  %v59 = vld [vmem:[#allocation2 + $0x30] sm:$0x1]
  %v60 = vsel %vm40, 0, %v59
  %61 = vst [vmem:[#allocation2 + $0x30] sm:$0x1] %v60
  %v62 = vld [vmem:[#allocation2 + $0x38] sm:$0x1]
  %v63 = vsel %vm40, 0, %v62
  %64 = vst [vmem:[#allocation2 + $0x38] sm:$0x1] %v63
  %v65 = vld [vmem:[#allocation2 + $0x40] sm:$0x1]
  %v66 = vsel %vm40, 0, %v65
  %67 = vst [vmem:[#allocation2 + $0x40] sm:$0x1] %v66
  %v68 = vld [vmem:[#allocation2 + $0x48] sm:$0x1]
  %v69 = vsel %vm40, 0, %v68
  %70 = vst [vmem:[#allocation2 + $0x48] sm:$0x1] %v69
  %v71 = vld [vmem:[#allocation2 + $0x50] sm:$0x1]
  %v72 = vsel %vm40, 0, %v71
  %73 = vst [vmem:[#allocation2 + $0x50] sm:$0x1] %v72
  %v74 = vld [vmem:[#allocation2 + $0x58] sm:$0x1]
  %v75 = vsel %vm40, 0, %v74
  %76 = vst [vmem:[#allocation2 + $0x58] sm:$0x1] %v75
  %v77 = vld [vmem:[#allocation2 + $0x60] sm:$0x1]
  %v78 = vsel %vm40, 0, %v77
  %79 = vst [vmem:[#allocation2 + $0x60] sm:$0x1] %v78
  %v80 = vld [vmem:[#allocation2 + $0x68] sm:$0x1]
  %v81 = vsel %vm40, 0, %v80
  %82 = vst [vmem:[#allocation2 + $0x68] sm:$0x1] %v81
  %v83 = vld [vmem:[#allocation2 + $0x70] sm:$0x1]
  %v84 = vsel %vm40, 0, %v83
  %85 = vst [vmem:[#allocation2 + $0x70] sm:$0x1] %v84
  %v86 = vld [vmem:[#allocation2 + $0x78] sm:$0x1]
  %v87 = vsel %vm40, 0, %v86
  %88 = vst [vmem:[#allocation2 + $0x78] sm:$0x1] %v87
  %v89 = vld [vmem:[#allocation2 + $0x80] sm:$0x1]
  %v90 = vsel %vm40, 0, %v89
  %91 = vst [vmem:[#allocation2 + $0x80] sm:$0x1] %v90
  %v92 = vld [vmem:[#allocation2 + $0x88] sm:$0x1]
  %v93 = vsel %vm40, 0, %v92
  %94 = vst [vmem:[#allocation2 + $0x88] sm:$0x1] %v93
  %v95 = vld [vmem:[#allocation2 + $0x90] sm:$0x1]
  %v96 = vsel %vm40, 0, %v95
  %97 = vst [vmem:[#allocation2 + $0x90] sm:$0x1] %v96
  %v98 = vld [vmem:[#allocation2 + $0x98] sm:$0x1]
  %v99 = vsel %vm40, 0, %v98
  %100 = vst [vmem:[#allocation2 + $0x98] sm:$0x1] %v99
  %vm101 = vsmask.f32 7938
  %vm102 = vmand %vm38, %vm101
  %v103 = vld [vmem:[#allocation2 + $0x4] sm:$0x1]
  %v104 = vsel %vm102, 0, %v103
  %105 = vst [vmem:[#allocation2 + $0x4] sm:$0x1] %v104
  %v106 = vld [vmem:[#allocation2 + $0xc] sm:$0x1]
  %v107 = vsel %vm102, 0, %v106
  %108 = vst [vmem:[#allocation2 + $0xc] sm:$0x1] %v107
  %v109 = vld [vmem:[#allocation2 + $0x14] sm:$0x1]
  %v110 = vsel %vm102, 0, %v109
  %111 = vst [vmem:[#allocation2 + $0x14] sm:$0x1] %v110
  %v112 = vld [vmem:[#allocation2 + $0x1c] sm:$0x1]
  %v113 = vsel %vm102, 0, %v112
  %114 = vst [vmem:[#allocation2 + $0x1c] sm:$0x1] %v113
  %v115 = vld [vmem:[#allocation2 + $0x24] sm:$0x1]
  %v116 = vsel %vm102, 0, %v115
  %117 = vst [vmem:[#allocation2 + $0x24] sm:$0x1] %v116
  %v118 = vld [vmem:[#allocation2 + $0x2c] sm:$0x1]
  %v119 = vsel %vm102, 0, %v118
  %120 = vst [vmem:[#allocation2 + $0x2c] sm:$0x1] %v119
  %v121 = vld [vmem:[#allocation2 + $0x34] sm:$0x1]
  %v122 = vsel %vm102, 0, %v121
  %123 = vst [vmem:[#allocation2 + $0x34] sm:$0x1] %v122
  %v124 = vld [vmem:[#allocation2 + $0x3c] sm:$0x1]
  %v125 = vsel %vm102, 0, %v124
  %126 = vst [vmem:[#allocation2 + $0x3c] sm:$0x1] %v125
  %v127 = vld [vmem:[#allocation2 + $0x44] sm:$0x1]
  %v128 = vsel %vm102, 0, %v127
  %129 = vst [vmem:[#allocation2 + $0x44] sm:$0x1] %v128
  %v130 = vld [vmem:[#allocation2 + $0x4c] sm:$0x1]
  %v131 = vsel %vm102, 0, %v130
  %132 = vst [vmem:[#allocation2 + $0x4c] sm:$0x1] %v131
  %v133 = vld [vmem:[#allocation2 + $0x54] sm:$0x1]
  %v134 = vsel %vm102, 0, %v133
  %135 = vst [vmem:[#allocation2 + $0x54] sm:$0x1] %v134
  %v136 = vld [vmem:[#allocation2 + $0x5c] sm:$0x1]
  %v137 = vsel %vm102, 0, %v136
  %138 = vst [vmem:[#allocation2 + $0x5c] sm:$0x1] %v137
  %v139 = vld [vmem:[#allocation2 + $0x64] sm:$0x1]
  %v140 = vsel %vm102, 0, %v139
  %141 = vst [vmem:[#allocation2 + $0x64] sm:$0x1] %v140
  %v142 = vld [vmem:[#allocation2 + $0x6c] sm:$0x1]
  %v143 = vsel %vm102, 0, %v142
  %144 = vst [vmem:[#allocation2 + $0x6c] sm:$0x1] %v143
  %v145 = vld [vmem:[#allocation2 + $0x74] sm:$0x1]
  %v146 = vsel %vm102, 0, %v145
  %147 = vst [vmem:[#allocation2 + $0x74] sm:$0x1] %v146
  %v148 = vld [vmem:[#allocation2 + $0x7c] sm:$0x1]
  %v149 = vsel %vm102, 0, %v148
  %150 = vst [vmem:[#allocation2 + $0x7c] sm:$0x1] %v149
  %v151 = vld [vmem:[#allocation2 + $0x84] sm:$0x1]
  %v152 = vsel %vm102, 0, %v151
  %153 = vst [vmem:[#allocation2 + $0x84] sm:$0x1] %v152
  %v154 = vld [vmem:[#allocation2 + $0x8c] sm:$0x1]
  %v155 = vsel %vm102, 0, %v154
  %156 = vst [vmem:[#allocation2 + $0x8c] sm:$0x1] %v155
  %v157 = vld [vmem:[#allocation2 + $0x94] sm:$0x1]
  %v158 = vsel %vm102, 0, %v157
  %159 = vst [vmem:[#allocation2 + $0x94] sm:$0x1] %v158
  %v160 = vld [vmem:[#allocation2 + $0x9c] sm:$0x1]
  %v161 = vsel %vm102, 0, %v160
  %162 = vst [vmem:[#allocation2 + $0x9c] sm:$0x1] %v161
  %163 = vst.msk [vmem:[#allocation3] sm:$0xf] %vm27, 0
  %164 = vst.msk [vmem:[#allocation3 + $0x4] sm:$0x1] %vm29, 0
  %165 = vst.msk [vmem:[#allocation3 + $0x50] sm:$0xf] %vm27, 0
  %166 = vst.msk [vmem:[#allocation3 + $0x54] sm:$0x1] %vm29, 0
  %s167 = scalar_lea.vmem [#allocation3], 72
  %168 = vst.msk [vmem:[%s167] sm:$0xf] %vm27, 0
  %169 = vst.msk [vmem:[%s167 + $0x4] sm:$0x1] %vm29, 0
  %170 = vst.msk [vmem:[%s167 + $0x50] sm:$0xf] %vm27, 0
  %171 = vst.msk [vmem:[%s167 + $0x54] sm:$0x1] %vm29, 0
  %v172 = vld [vmem:[#allocation3] sm:$0x1]
  %v173 = vsel %vm40, 0, %v172
  %174 = vst [vmem:[#allocation3] sm:$0x1] %v173
  %v175 = vld [vmem:[#allocation3 + $0x8] sm:$0x1]
  %v176 = vsel %vm40, 0, %v175
  %177 = vst [vmem:[#allocation3 + $0x8] sm:$0x1] %v176
  %v178 = vld [vmem:[#allocation3 + $0x10] sm:$0x1]
  %v179 = vsel %vm40, 0, %v178
  %180 = vst [vmem:[#allocation3 + $0x10] sm:$0x1] %v179
  %v181 = vld [vmem:[#allocation3 + $0x18] sm:$0x1]
  %v182 = vsel %vm40, 0, %v181
  %183 = vst [vmem:[#allocation3 + $0x18] sm:$0x1] %v182
  %v184 = vld [vmem:[#allocation3 + $0x20] sm:$0x1]
  %v185 = vsel %vm40, 0, %v184
  %186 = vst [vmem:[#allocation3 + $0x20] sm:$0x1] %v185
  %v187 = vld [vmem:[#allocation3 + $0x28] sm:$0x1]
  %v188 = vsel %vm40, 0, %v187
  %189 = vst [vmem:[#allocation3 + $0x28] sm:$0x1] %v188
  %v190 = vld [vmem:[#allocation3 + $0x30] sm:$0x1]
  %v191 = vsel %vm40, 0, %v190
  %192 = vst [vmem:[#allocation3 + $0x30] sm:$0x1] %v191
  %v193 = vld [vmem:[#allocation3 + $0x38] sm:$0x1]
  %v194 = vsel %vm40, 0, %v193
  %195 = vst [vmem:[#allocation3 + $0x38] sm:$0x1] %v194
  %v196 = vld [vmem:[#allocation3 + $0x40] sm:$0x1]
  %v197 = vsel %vm40, 0, %v196
  %198 = vst [vmem:[#allocation3 + $0x40] sm:$0x1] %v197
  %v199 = vld [vmem:[#allocation3 + $0x48] sm:$0x1]
  %v200 = vsel %vm40, 0, %v199
  %201 = vst [vmem:[#allocation3 + $0x48] sm:$0x1] %v200
  %v202 = vld [vmem:[#allocation3 + $0x50] sm:$0x1]
  %v203 = vsel %vm40, 0, %v202
  %204 = vst [vmem:[#allocation3 + $0x50] sm:$0x1] %v203
  %v205 = vld [vmem:[#allocation3 + $0x58] sm:$0x1]
  %v206 = vsel %vm40, 0, %v205
  %207 = vst [vmem:[#allocation3 + $0x58] sm:$0x1] %v206
  %v208 = vld [vmem:[#allocation3 + $0x60] sm:$0x1]
  %v209 = vsel %vm40, 0, %v208
  %210 = vst [vmem:[#allocation3 + $0x60] sm:$0x1] %v209
  %v211 = vld [vmem:[#allocation3 + $0x68] sm:$0x1]
  %v212 = vsel %vm40, 0, %v211
  %213 = vst [vmem:[#allocation3 + $0x68] sm:$0x1] %v212
  %v214 = vld [vmem:[#allocation3 + $0x70] sm:$0x1]
  %v215 = vsel %vm40, 0, %v214
  %216 = vst [vmem:[#allocation3 + $0x70] sm:$0x1] %v215
  %v217 = vld [vmem:[#allocation3 + $0x78] sm:$0x1]
  %v218 = vsel %vm40, 0, %v217
  %219 = vst [vmem:[#allocation3 + $0x78] sm:$0x1] %v218
  %v220 = vld [vmem:[#allocation3 + $0x80] sm:$0x1]
  %v221 = vsel %vm40, 0, %v220
  %222 = vst [vmem:[#allocation3 + $0x80] sm:$0x1] %v221
  %v223 = vld [vmem:[#allocation3 + $0x88] sm:$0x1]
  %v224 = vsel %vm40, 0, %v223
  %225 = vst [vmem:[#allocation3 + $0x88] sm:$0x1] %v224
  %v226 = vld [vmem:[#allocation3 + $0x90] sm:$0x1]
  %v227 = vsel %vm40, 0, %v226
  %228 = vst [vmem:[#allocation3 + $0x90] sm:$0x1] %v227
  %v229 = vld [vmem:[#allocation3 + $0x98] sm:$0x1]
  %v230 = vsel %vm40, 0, %v229
  %231 = vst [vmem:[#allocation3 + $0x98] sm:$0x1] %v230
  %v232 = vld [vmem:[#allocation3 + $0x4] sm:$0x1]
  %v233 = vsel %vm102, 0, %v232
  %234 = vst [vmem:[#allocation3 + $0x4] sm:$0x1] %v233
  %v235 = vld [vmem:[#allocation3 + $0xc] sm:$0x1]
  %v236 = vsel %vm102, 0, %v235
  %237 = vst [vmem:[#allocation3 + $0xc] sm:$0x1] %v236
  %v238 = vld [vmem:[#allocation3 + $0x14] sm:$0x1]
  %v239 = vsel %vm102, 0, %v238
  %240 = vst [vmem:[#allocation3 + $0x14] sm:$0x1] %v239
  %v241 = vld [vmem:[#allocation3 + $0x1c] sm:$0x1]
  %v242 = vsel %vm102, 0, %v241
  %243 = vst [vmem:[#allocation3 + $0x1c] sm:$0x1] %v242
  %v244 = vld [vmem:[#allocation3 + $0x24] sm:$0x1]
  %v245 = vsel %vm102, 0, %v244
  %246 = vst [vmem:[#allocation3 + $0x24] sm:$0x1] %v245
  %v247 = vld [vmem:[#allocation3 + $0x2c] sm:$0x1]
  %v248 = vsel %vm102, 0, %v247
  %249 = vst [vmem:[#allocation3 + $0x2c] sm:$0x1] %v248
  %v250 = vld [vmem:[#allocation3 + $0x34] sm:$0x1]
  %v251 = vsel %vm102, 0, %v250
  %252 = vst [vmem:[#allocation3 + $0x34] sm:$0x1] %v251
  %v253 = vld [vmem:[#allocation3 + $0x3c] sm:$0x1]
  %v254 = vsel %vm102, 0, %v253
  %255 = vst [vmem:[#allocation3 + $0x3c] sm:$0x1] %v254
  %v256 = vld [vmem:[#allocation3 + $0x44] sm:$0x1]
  %v257 = vsel %vm102, 0, %v256
  %258 = vst [vmem:[#allocation3 + $0x44] sm:$0x1] %v257
  %v259 = vld [vmem:[#allocation3 + $0x4c] sm:$0x1]
  %v260 = vsel %vm102, 0, %v259
  %261 = vst [vmem:[#allocation3 + $0x4c] sm:$0x1] %v260
  %v262 = vld [vmem:[#allocation3 + $0x54] sm:$0x1]
  %v263 = vsel %vm102, 0, %v262
  %264 = vst [vmem:[#allocation3 + $0x54] sm:$0x1] %v263
  %v265 = vld [vmem:[#allocation3 + $0x5c] sm:$0x1]
  %v266 = vsel %vm102, 0, %v265
  %267 = vst [vmem:[#allocation3 + $0x5c] sm:$0x1] %v266
  %v268 = vld [vmem:[#allocation3 + $0x64] sm:$0x1]
  %v269 = vsel %vm102, 0, %v268
  %270 = vst [vmem:[#allocation3 + $0x64] sm:$0x1] %v269
  %v271 = vld [vmem:[#allocation3 + $0x6c] sm:$0x1]
  %v272 = vsel %vm102, 0, %v271
  %273 = vst [vmem:[#allocation3 + $0x6c] sm:$0x1] %v272
  %v274 = vld [vmem:[#allocation3 + $0x74] sm:$0x1]
  %v275 = vsel %vm102, 0, %v274
  %276 = vst [vmem:[#allocation3 + $0x74] sm:$0x1] %v275
  %v277 = vld [vmem:[#allocation3 + $0x7c] sm:$0x1]
  %v278 = vsel %vm102, 0, %v277
  %279 = vst [vmem:[#allocation3 + $0x7c] sm:$0x1] %v278
  %v280 = vld [vmem:[#allocation3 + $0x84] sm:$0x1]
  %v281 = vsel %vm102, 0, %v280
  %282 = vst [vmem:[#allocation3 + $0x84] sm:$0x1] %v281
  %v283 = vld [vmem:[#allocation3 + $0x8c] sm:$0x1]
  %v284 = vsel %vm102, 0, %v283
  %285 = vst [vmem:[#allocation3 + $0x8c] sm:$0x1] %v284
  %v286 = vld [vmem:[#allocation3 + $0x94] sm:$0x1]
  %v287 = vsel %vm102, 0, %v286
  %288 = vst [vmem:[#allocation3 + $0x94] sm:$0x1] %v287
  %v289 = vld [vmem:[#allocation3 + $0x9c] sm:$0x1]
  %v290 = vsel %vm102, 0, %v289
  %291 = vst [vmem:[#allocation3 + $0x9c] sm:$0x1] %v290
  %v292 = vld [vmem:[%s0] sm:$0xf]
  %v293 = vld [vmem:[%s0 + $0x4] sm:$0xf]
  %v294 = vld [vmem:[%s0 + $0x8] sm:$0xf]
  %v295 = vld [vmem:[%s0 + $0xc] sm:$0xf]
  %v296 = vld [vmem:[%s0 + $0x10] sm:$0xf]
  %v297 = vld [vmem:[%s0 + $0x14] sm:$0xf]
  %v298 = vld [vmem:[%s0 + $0x18] sm:$0xf]
  %v299 = vld [vmem:[%s0 + $0x1c] sm:$0xf]
  %v300 = vld [vmem:[%s0 + $0x20] sm:$0xf]
  %v301 = vld [vmem:[%s0 + $0x24] sm:$0xf]
  %v302 = vld [vmem:[%s0 + $0x28] sm:$0xf]
  %v303 = vld [vmem:[%s0 + $0x2c] sm:$0xf]
  %v304 = vld [vmem:[%s0 + $0x30] sm:$0xf]
  %v305 = vld [vmem:[%s0 + $0x34] sm:$0xf]
  %v306 = vld [vmem:[%s0 + $0x38] sm:$0xf]
  %v307 = vld [vmem:[%s0 + $0x3c] sm:$0xf]
  %s308 = scalar_lea.vmem %s0, 64
  %v309 = vld [vmem:[%s308] sm:$0xf]
  %v310 = vld [vmem:[%s308 + $0x4] sm:$0xf]
  %v311 = vld [vmem:[%s308 + $0x8] sm:$0xf]
  %v312 = vld [vmem:[%s308 + $0xc] sm:$0xf]
  %v313 = vld [vmem:[%s308 + $0x10] sm:$0xf]
  %v314 = vld [vmem:[%s308 + $0x14] sm:$0xf]
  %v315 = vld [vmem:[%s308 + $0x18] sm:$0xf]
  %v316 = vld [vmem:[%s308 + $0x1c] sm:$0xf]
  %v317 = vld [vmem:[%s308 + $0x20] sm:$0xf]
  %v318 = vld [vmem:[%s308 + $0x24] sm:$0xf]
  %v319 = vld [vmem:[%s308 + $0x28] sm:$0xf]
  %v320 = vld [vmem:[%s308 + $0x2c] sm:$0xf]
  %v321 = vld [vmem:[%s308 + $0x30] sm:$0xf]
  %v322 = vld [vmem:[%s308 + $0x34] sm:$0xf]
  %v323 = vld [vmem:[%s308 + $0x38] sm:$0xf]
  %v324 = vld [vmem:[%s308 + $0x3c] sm:$0xf]
  %v325 = vunpack.c.l.bf16 %v292
  %v326 = vunpack.c.l.bf16 %v293
  %v327 = vunpack.c.l.bf16 %v294
  %v328 = vunpack.c.l.bf16 %v295
  %v329 = vunpack.c.l.bf16 %v296
  %v330 = vunpack.c.l.bf16 %v297
  %v331 = vunpack.c.l.bf16 %v298
  %v332 = vunpack.c.l.bf16 %v299
  %v333 = vunpack.c.l.bf16 %v300
  %v334 = vunpack.c.l.bf16 %v301
  %v335 = vunpack.c.l.bf16 %v302
  %v336 = vunpack.c.l.bf16 %v303
  %v337 = vunpack.c.l.bf16 %v304
  %v338 = vunpack.c.l.bf16 %v305
  %v339 = vunpack.c.l.bf16 %v306
  %v340 = vunpack.c.l.bf16 %v307
  %v341 = vunpack.c.l.bf16 %v309
  %v342 = vunpack.c.l.bf16 %v310
  %v343 = vunpack.c.l.bf16 %v311
  %v344 = vunpack.c.l.bf16 %v312
  %v345 = vunpack.c.l.bf16 %v313
  %v346 = vunpack.c.l.bf16 %v314
  %v347 = vunpack.c.l.bf16 %v315
  %v348 = vunpack.c.l.bf16 %v316
  %v349 = vunpack.c.l.bf16 %v317
  %v350 = vunpack.c.l.bf16 %v318
  %v351 = vunpack.c.l.bf16 %v319
  %v352 = vunpack.c.l.bf16 %v320
  %v353 = vunpack.c.l.bf16 %v321
  %v354 = vunpack.c.l.bf16 %v322
  %v355 = vunpack.c.l.bf16 %v323
  %v356 = vunpack.c.l.bf16 %v324
  %v357 = vmax.f32 %v325, %v341
  %v358 = vmax.f32 %v326, %v342
  %v359 = vmax.f32 %v327, %v343
  %v360 = vmax.f32 %v328, %v344
  %v361 = vmax.f32 %v329, %v345
  %v362 = vmax.f32 %v330, %v346
  %v363 = vmax.f32 %v331, %v347
  %v364 = vmax.f32 %v332, %v348
  %v365 = vmax.f32 %v333, %v349
  %v366 = vmax.f32 %v334, %v350
  %v367 = vmax.f32 %v335, %v351
  %v368 = vmax.f32 %v336, %v352
  %v369 = vmax.f32 %v337, %v353
  %v370 = vmax.f32 %v338, %v354
  %v371 = vmax.f32 %v339, %v355
  %v372 = vmax.f32 %v340, %v356
  %v373 = vpack.c.bf16 %v357, %v357
  %v374 = vpack.c.bf16 %v358, %v358
  %v375 = vpack.c.bf16 %v359, %v359
  %v376 = vpack.c.bf16 %v360, %v360
  %v377 = vpack.c.bf16 %v361, %v361
  %v378 = vpack.c.bf16 %v362, %v362
  %v379 = vpack.c.bf16 %v363, %v363
  %v380 = vpack.c.bf16 %v364, %v364
  %v381 = vpack.c.bf16 %v365, %v365
  %v382 = vpack.c.bf16 %v366, %v366
  %v383 = vpack.c.bf16 %v367, %v367
  %v384 = vpack.c.bf16 %v368, %v368
  %v385 = vpack.c.bf16 %v369, %v369
  %v386 = vpack.c.bf16 %v370, %v370
  %v387 = vpack.c.bf16 %v371, %v371
  %v388 = vpack.c.bf16 %v372, %v372
  %s389 = scalar_lea.vmem %s0, 128
  %v390 = vld [vmem:[%s389] sm:$0xf]
  %v391 = vld [vmem:[%s389 + $0x4] sm:$0xf]
  %v392 = vld [vmem:[%s389 + $0x8] sm:$0xf]
  %v393 = vld [vmem:[%s389 + $0xc] sm:$0xf]
  %v394 = vld [vmem:[%s389 + $0x10] sm:$0xf]
  %v395 = vld [vmem:[%s389 + $0x14] sm:$0xf]
  %v396 = vld [vmem:[%s389 + $0x18] sm:$0xf]
  %v397 = vld [vmem:[%s389 + $0x1c] sm:$0xf]
  %v398 = vld [vmem:[%s389 + $0x20] sm:$0xf]
  %v399 = vld [vmem:[%s389 + $0x24] sm:$0xf]
  %v400 = vld [vmem:[%s389 + $0x28] sm:$0xf]
  %v401 = vld [vmem:[%s389 + $0x2c] sm:$0xf]
  %v402 = vld [vmem:[%s389 + $0x30] sm:$0xf]
  %v403 = vld [vmem:[%s389 + $0x34] sm:$0xf]
  %v404 = vld [vmem:[%s389 + $0x38] sm:$0xf]
  %v405 = vld [vmem:[%s389 + $0x3c] sm:$0xf]
  %s406 = scalar_lea.vmem %s0, 192
  %v407 = vld [vmem:[%s406] sm:$0xf]
  %v408 = vld [vmem:[%s406 + $0x4] sm:$0xf]
  %v409 = vld [vmem:[%s406 + $0x8] sm:$0xf]
  %v410 = vld [vmem:[%s406 + $0xc] sm:$0xf]
  %v411 = vld [vmem:[%s406 + $0x10] sm:$0xf]
  %v412 = vld [vmem:[%s406 + $0x14] sm:$0xf]
  %v413 = vld [vmem:[%s406 + $0x18] sm:$0xf]
  %v414 = vld [vmem:[%s406 + $0x1c] sm:$0xf]
  %v415 = vld [vmem:[%s406 + $0x20] sm:$0xf]
  %v416 = vld [vmem:[%s406 + $0x24] sm:$0xf]
  %v417 = vld [vmem:[%s406 + $0x28] sm:$0xf]
  %v418 = vld [vmem:[%s406 + $0x2c] sm:$0xf]
  %v419 = vld [vmem:[%s406 + $0x30] sm:$0xf]
  %v420 = vld [vmem:[%s406 + $0x34] sm:$0xf]
  %v421 = vld [vmem:[%s406 + $0x38] sm:$0xf]
  %v422 = vld [vmem:[%s406 + $0x3c] sm:$0xf]
  %v423 = vunpack.c.l.bf16 %v390
  %v424 = vunpack.c.l.bf16 %v391
  %v425 = vunpack.c.l.bf16 %v392
  %v426 = vunpack.c.l.bf16 %v393
  %v427 = vunpack.c.l.bf16 %v394
  %v428 = vunpack.c.l.bf16 %v395
  %v429 = vunpack.c.l.bf16 %v396
  %v430 = vunpack.c.l.bf16 %v397
  %v431 = vunpack.c.l.bf16 %v398
  %v432 = vunpack.c.l.bf16 %v399
  %v433 = vunpack.c.l.bf16 %v400
  %v434 = vunpack.c.l.bf16 %v401
  %v435 = vunpack.c.l.bf16 %v402
  %v436 = vunpack.c.l.bf16 %v403
  %v437 = vunpack.c.l.bf16 %v404
  %v438 = vunpack.c.l.bf16 %v405
  %v439 = vunpack.c.l.bf16 %v407
  %v440 = vunpack.c.l.bf16 %v408
  %v441 = vunpack.c.l.bf16 %v409
  %v442 = vunpack.c.l.bf16 %v410
  %v443 = vunpack.c.l.bf16 %v411
  %v444 = vunpack.c.l.bf16 %v412
  %v445 = vunpack.c.l.bf16 %v413
  %v446 = vunpack.c.l.bf16 %v414
  %v447 = vunpack.c.l.bf16 %v415
  %v448 = vunpack.c.l.bf16 %v416
  %v449 = vunpack.c.l.bf16 %v417
  %v450 = vunpack.c.l.bf16 %v418
  %v451 = vunpack.c.l.bf16 %v419
  %v452 = vunpack.c.l.bf16 %v420
  %v453 = vunpack.c.l.bf16 %v421
  %v454 = vunpack.c.l.bf16 %v422
  %v455 = vmax.f32 %v423, %v439
  %v456 = vmax.f32 %v424, %v440
  %v457 = vmax.f32 %v425, %v441
  %v458 = vmax.f32 %v426, %v442
  %v459 = vmax.f32 %v427, %v443
  %v460 = vmax.f32 %v428, %v444
  %v461 = vmax.f32 %v429, %v445
  %v462 = vmax.f32 %v430, %v446
  %v463 = vmax.f32 %v431, %v447
  %v464 = vmax.f32 %v432, %v448
  %v465 = vmax.f32 %v433, %v449
  %v466 = vmax.f32 %v434, %v450
  %v467 = vmax.f32 %v435, %v451
  %v468 = vmax.f32 %v436, %v452
  %v469 = vmax.f32 %v437, %v453
  %v470 = vmax.f32 %v438, %v454
  %v471 = vpack.c.bf16 %v455, %v455
  %v472 = vpack.c.bf16 %v456, %v456
  %v473 = vpack.c.bf16 %v457, %v457
  %v474 = vpack.c.bf16 %v458, %v458
  %v475 = vpack.c.bf16 %v459, %v459
  %v476 = vpack.c.bf16 %v460, %v460
  %v477 = vpack.c.bf16 %v461, %v461
  %v478 = vpack.c.bf16 %v462, %v462
  %v479 = vpack.c.bf16 %v463, %v463
  %v480 = vpack.c.bf16 %v464, %v464
  %v481 = vpack.c.bf16 %v465, %v465
  %v482 = vpack.c.bf16 %v466, %v466
  %v483 = vpack.c.bf16 %v467, %v467
  %v484 = vpack.c.bf16 %v468, %v468
  %v485 = vpack.c.bf16 %v469, %v469
  %v486 = vpack.c.bf16 %v470, %v470
  %v487 = vunpack.c.l.bf16 %v373
  %v488 = vunpack.c.l.bf16 %v374
  %v489 = vunpack.c.l.bf16 %v375
  %v490 = vunpack.c.l.bf16 %v376
  %v491 = vunpack.c.l.bf16 %v377
  %v492 = vunpack.c.l.bf16 %v378
  %v493 = vunpack.c.l.bf16 %v379
  %v494 = vunpack.c.l.bf16 %v380
  %v495 = vunpack.c.l.bf16 %v381
  %v496 = vunpack.c.l.bf16 %v382
  %v497 = vunpack.c.l.bf16 %v383
  %v498 = vunpack.c.l.bf16 %v384
  %v499 = vunpack.c.l.bf16 %v385
  %v500 = vunpack.c.l.bf16 %v386
  %v501 = vunpack.c.l.bf16 %v387
  %v502 = vunpack.c.l.bf16 %v388
  %v503 = vunpack.c.l.bf16 %v471
  %v504 = vunpack.c.l.bf16 %v472
  %v505 = vunpack.c.l.bf16 %v473
  %v506 = vunpack.c.l.bf16 %v474
  %v507 = vunpack.c.l.bf16 %v475
  %v508 = vunpack.c.l.bf16 %v476
  %v509 = vunpack.c.l.bf16 %v477
  %v510 = vunpack.c.l.bf16 %v478
  %v511 = vunpack.c.l.bf16 %v479
  %v512 = vunpack.c.l.bf16 %v480
  %v513 = vunpack.c.l.bf16 %v481
  %v514 = vunpack.c.l.bf16 %v482
  %v515 = vunpack.c.l.bf16 %v483
  %v516 = vunpack.c.l.bf16 %v484
  %v517 = vunpack.c.l.bf16 %v485
  %v518 = vunpack.c.l.bf16 %v486
  %v519 = vmax.f32 %v487, %v503
  %v520 = vmax.f32 %v488, %v504
  %v521 = vmax.f32 %v489, %v505
  %v522 = vmax.f32 %v490, %v506
  %v523 = vmax.f32 %v491, %v507
  %v524 = vmax.f32 %v492, %v508
  %v525 = vmax.f32 %v493, %v509
  %v526 = vmax.f32 %v494, %v510
  %v527 = vmax.f32 %v495, %v511
  %v528 = vmax.f32 %v496, %v512
  %v529 = vmax.f32 %v497, %v513
  %v530 = vmax.f32 %v498, %v514
  %v531 = vmax.f32 %v499, %v515
  %v532 = vmax.f32 %v500, %v516
  %v533 = vmax.f32 %v501, %v517
  %v534 = vmax.f32 %v502, %v518
  %v535 = vpack.c.bf16 %v519, %v519
  %v536 = vpack.c.bf16 %v520, %v520
  %v537 = vpack.c.bf16 %v521, %v521
  %v538 = vpack.c.bf16 %v522, %v522
  %v539 = vpack.c.bf16 %v523, %v523
  %v540 = vpack.c.bf16 %v524, %v524
  %v541 = vpack.c.bf16 %v525, %v525
  %v542 = vpack.c.bf16 %v526, %v526
  %v543 = vpack.c.bf16 %v527, %v527
  %v544 = vpack.c.bf16 %v528, %v528
  %v545 = vpack.c.bf16 %v529, %v529
  %v546 = vpack.c.bf16 %v530, %v530
  %v547 = vpack.c.bf16 %v531, %v531
  %v548 = vpack.c.bf16 %v532, %v532
  %v549 = vpack.c.bf16 %v533, %v533
  %v550 = vpack.c.bf16 %v534, %v534
  %v552 = vshrl.u32 %v535, 16
  %v554 = vrot.slane %v552, 7
  %v555 = vshll.u32 %v535, 16
  %v557 = vor.u32 %v554, %v555
  %v558 = vrot.slane %v554, 4
  %v560 = vshrl.u32 %v536, 16
  %v562 = vrot.slane %v560, 7
  %v563 = vshll.u32 %v536, 16
  %v565 = vor.u32 %v562, %v563
  %v566 = vrot.slane %v562, 4
  %v568 = vshrl.u32 %v537, 16
  %v570 = vrot.slane %v568, 7
  %v571 = vshll.u32 %v537, 16
  %v573 = vor.u32 %v570, %v571
  %v574 = vrot.slane %v570, 4
  %v576 = vshrl.u32 %v538, 16
  %v578 = vrot.slane %v576, 7
  %v579 = vshll.u32 %v538, 16
  %v581 = vor.u32 %v578, %v579
  %v582 = vrot.slane %v578, 4
  %v584 = vshrl.u32 %v539, 16
  %v586 = vrot.slane %v584, 7
  %v587 = vshll.u32 %v539, 16
  %v589 = vor.u32 %v586, %v587
  %v590 = vrot.slane %v586, 4
  %v592 = vshrl.u32 %v540, 16
  %v594 = vrot.slane %v592, 7
  %v595 = vshll.u32 %v540, 16
  %v597 = vor.u32 %v594, %v595
  %v598 = vrot.slane %v594, 4
  %v600 = vshrl.u32 %v541, 16
  %v602 = vrot.slane %v600, 7
  %v603 = vshll.u32 %v541, 16
  %v605 = vor.u32 %v602, %v603
  %v606 = vrot.slane %v602, 4
  %v608 = vshrl.u32 %v542, 16
  %v610 = vrot.slane %v608, 7
  %v611 = vshll.u32 %v542, 16
  %v613 = vor.u32 %v610, %v611
  %v614 = vrot.slane %v610, 4
  %v616 = vshrl.u32 %v543, 16
  %v618 = vrot.slane %v616, 7
  %v619 = vshll.u32 %v543, 16
  %v621 = vor.u32 %v618, %v619
  %v622 = vrot.slane %v618, 4
  %v624 = vshrl.u32 %v544, 16
  %v626 = vrot.slane %v624, 7
  %v627 = vshll.u32 %v544, 16
  %v629 = vor.u32 %v626, %v627
  %v630 = vrot.slane %v626, 4
  %v632 = vshrl.u32 %v545, 16
  %v634 = vrot.slane %v632, 7
  %v635 = vshll.u32 %v545, 16
  %v637 = vor.u32 %v634, %v635
  %v638 = vrot.slane %v634, 4
  %v640 = vshrl.u32 %v546, 16
  %v642 = vrot.slane %v640, 7
  %v643 = vshll.u32 %v546, 16
  %v645 = vor.u32 %v642, %v643
  %v646 = vrot.slane %v642, 4
  %v648 = vshrl.u32 %v547, 16
  %v650 = vrot.slane %v648, 7
  %v651 = vshll.u32 %v547, 16
  %v653 = vor.u32 %v650, %v651
  %v654 = vrot.slane %v650, 4
  %v656 = vshrl.u32 %v548, 16
  %v658 = vrot.slane %v656, 7
  %v659 = vshll.u32 %v548, 16
  %v661 = vor.u32 %v658, %v659
  %v662 = vrot.slane %v658, 4
  %v664 = vshrl.u32 %v549, 16
  %v666 = vrot.slane %v664, 7
  %v667 = vshll.u32 %v549, 16
  %v669 = vor.u32 %v666, %v667
  %v670 = vrot.slane %v666, 4
  %v672 = vshrl.u32 %v550, 16
  %v674 = vrot.slane %v672, 7
  %v675 = vshll.u32 %v550, 16
  %v677 = vor.u32 %v674, %v675
  %v678 = vrot.slane %v674, 4
  %s711 = scalar_lea.vmem [#allocation2], 8
  %vm712 = vcmask 27648
  %vm713 = vmand %vm712, %vm101
  %v714 = vld [vmem:[%s711] sm:$0xf]
  %v715 = vsel %vm713, %v557, %v714
  %716 = vst [vmem:[%s711] sm:$0xf] %v715
  %v717 = vld [vmem:[%s711 + $0x4] sm:$0x1]
  %v718 = vsel %vm40, %v558, %v717
  %719 = vst [vmem:[%s711 + $0x4] sm:$0x1] %v718
  %v720 = vld [vmem:[%s711 + $0x8] sm:$0xf]
  %v721 = vsel %vm713, %v565, %v720
  %722 = vst [vmem:[%s711 + $0x8] sm:$0xf] %v721
  %v723 = vld [vmem:[%s711 + $0xc] sm:$0x1]
  %v724 = vsel %vm40, %v566, %v723
  %725 = vst [vmem:[%s711 + $0xc] sm:$0x1] %v724
  %v726 = vld [vmem:[%s711 + $0x10] sm:$0xf]
  %v727 = vsel %vm713, %v573, %v726
  %728 = vst [vmem:[%s711 + $0x10] sm:$0xf] %v727
  %v729 = vld [vmem:[%s711 + $0x14] sm:$0x1]
  %v730 = vsel %vm40, %v574, %v729
  %731 = vst [vmem:[%s711 + $0x14] sm:$0x1] %v730
  %v732 = vld [vmem:[%s711 + $0x18] sm:$0xf]
  %v733 = vsel %vm713, %v581, %v732
  %734 = vst [vmem:[%s711 + $0x18] sm:$0xf] %v733
  %v735 = vld [vmem:[%s711 + $0x1c] sm:$0x1]
  %v736 = vsel %vm40, %v582, %v735
  %737 = vst [vmem:[%s711 + $0x1c] sm:$0x1] %v736
  %v738 = vld [vmem:[%s711 + $0x20] sm:$0xf]
  %v739 = vsel %vm713, %v589, %v738
  %740 = vst [vmem:[%s711 + $0x20] sm:$0xf] %v739
  %v741 = vld [vmem:[%s711 + $0x24] sm:$0x1]
  %v742 = vsel %vm40, %v590, %v741
  %743 = vst [vmem:[%s711 + $0x24] sm:$0x1] %v742
  %v744 = vld [vmem:[%s711 + $0x28] sm:$0xf]
  %v745 = vsel %vm713, %v597, %v744
  %746 = vst [vmem:[%s711 + $0x28] sm:$0xf] %v745
  %v747 = vld [vmem:[%s711 + $0x2c] sm:$0x1]
  %v748 = vsel %vm40, %v598, %v747
  %749 = vst [vmem:[%s711 + $0x2c] sm:$0x1] %v748
  %v750 = vld [vmem:[%s711 + $0x30] sm:$0xf]
  %v751 = vsel %vm713, %v605, %v750
  %752 = vst [vmem:[%s711 + $0x30] sm:$0xf] %v751
  %v753 = vld [vmem:[%s711 + $0x34] sm:$0x1]
  %v754 = vsel %vm40, %v606, %v753
  %755 = vst [vmem:[%s711 + $0x34] sm:$0x1] %v754
  %v756 = vld [vmem:[%s711 + $0x38] sm:$0xf]
  %v757 = vsel %vm713, %v613, %v756
  %758 = vst [vmem:[%s711 + $0x38] sm:$0xf] %v757
  %v759 = vld [vmem:[%s711 + $0x3c] sm:$0x1]
  %v760 = vsel %vm40, %v614, %v759
  %761 = vst [vmem:[%s711 + $0x3c] sm:$0x1] %v760
  %v762 = vld [vmem:[%s711 + $0x50] sm:$0xf]
  %v763 = vsel %vm713, %v621, %v762
  %764 = vst [vmem:[%s711 + $0x50] sm:$0xf] %v763
  %v765 = vld [vmem:[%s711 + $0x54] sm:$0x1]
  %v766 = vsel %vm40, %v622, %v765
  %767 = vst [vmem:[%s711 + $0x54] sm:$0x1] %v766
  %v768 = vld [vmem:[%s711 + $0x58] sm:$0xf]
  %v769 = vsel %vm713, %v629, %v768
  %770 = vst [vmem:[%s711 + $0x58] sm:$0xf] %v769
  %v771 = vld [vmem:[%s711 + $0x5c] sm:$0x1]
  %v772 = vsel %vm40, %v630, %v771
  %773 = vst [vmem:[%s711 + $0x5c] sm:$0x1] %v772
  %v774 = vld [vmem:[%s711 + $0x60] sm:$0xf]
  %v775 = vsel %vm713, %v637, %v774
  %776 = vst [vmem:[%s711 + $0x60] sm:$0xf] %v775
  %v777 = vld [vmem:[%s711 + $0x64] sm:$0x1]
  %v778 = vsel %vm40, %v638, %v777
  %779 = vst [vmem:[%s711 + $0x64] sm:$0x1] %v778
  %v780 = vld [vmem:[%s711 + $0x68] sm:$0xf]
  %v781 = vsel %vm713, %v645, %v780
  %782 = vst [vmem:[%s711 + $0x68] sm:$0xf] %v781
  %v783 = vld [vmem:[%s711 + $0x6c] sm:$0x1]
  %v784 = vsel %vm40, %v646, %v783
  %785 = vst [vmem:[%s711 + $0x6c] sm:$0x1] %v784
  %v786 = vld [vmem:[%s711 + $0x70] sm:$0xf]
  %v787 = vsel %vm713, %v653, %v786
  %788 = vst [vmem:[%s711 + $0x70] sm:$0xf] %v787
  %v789 = vld [vmem:[%s711 + $0x74] sm:$0x1]
  %v790 = vsel %vm40, %v654, %v789
  %791 = vst [vmem:[%s711 + $0x74] sm:$0x1] %v790
  %v792 = vld [vmem:[%s711 + $0x78] sm:$0xf]
  %v793 = vsel %vm713, %v661, %v792
  %794 = vst [vmem:[%s711 + $0x78] sm:$0xf] %v793
  %v795 = vld [vmem:[%s711 + $0x7c] sm:$0x1]
  %v796 = vsel %vm40, %v662, %v795
  %797 = vst [vmem:[%s711 + $0x7c] sm:$0x1] %v796
  %v798 = vld [vmem:[%s711 + $0x80] sm:$0xf]
  %v799 = vsel %vm713, %v669, %v798
  %800 = vst [vmem:[%s711 + $0x80] sm:$0xf] %v799
  %v801 = vld [vmem:[%s711 + $0x84] sm:$0x1]
  %v802 = vsel %vm40, %v670, %v801
  %803 = vst [vmem:[%s711 + $0x84] sm:$0x1] %v802
  %v804 = vld [vmem:[%s711 + $0x88] sm:$0xf]
  %v805 = vsel %vm713, %v677, %v804
  %806 = vst [vmem:[%s711 + $0x88] sm:$0xf] %v805
  %v807 = vld [vmem:[%s711 + $0x8c] sm:$0x1]
  %v808 = vsel %vm40, %v678, %v807
  %809 = vst [vmem:[%s711 + $0x8c] sm:$0x1] %v808
  %v810 = vld [vmem:[#allocation2] sm:$0xf]
  %v811 = vld [vmem:[#allocation2 + $0x8] sm:$0xf]
  %v812 = vld [vmem:[#allocation2 + $0x10] sm:$0xf]
  %v813 = vld [vmem:[#allocation2 + $0x18] sm:$0xf]
  %v814 = vld [vmem:[#allocation2 + $0x20] sm:$0xf]
  %v815 = vld [vmem:[#allocation2 + $0x28] sm:$0xf]
  %v816 = vld [vmem:[#allocation2 + $0x30] sm:$0xf]
  %v817 = vld [vmem:[#allocation2 + $0x38] sm:$0xf]
  %v818 = vld [vmem:[#allocation2 + $0x50] sm:$0xf]
  %v819 = vld [vmem:[#allocation2 + $0x58] sm:$0xf]
  %v820 = vld [vmem:[#allocation2 + $0x60] sm:$0xf]
  %v821 = vld [vmem:[#allocation2 + $0x68] sm:$0xf]
  %v822 = vld [vmem:[#allocation2 + $0x70] sm:$0xf]
  %v823 = vld [vmem:[#allocation2 + $0x78] sm:$0xf]
  %v824 = vld [vmem:[#allocation2 + $0x80] sm:$0xf]
  %v825 = vld [vmem:[#allocation2 + $0x88] sm:$0xf]
  %v826 = vld [vmem:[%s1] sm:$0x3]
  %v827 = vld [vmem:[#allocation2 + $0x4] sm:$0x1]
  %v828 = vld [vmem:[#allocation2 + $0xc] sm:$0x1]
  %v829 = vld [vmem:[#allocation2 + $0x14] sm:$0x1]
  %v830 = vld [vmem:[#allocation2 + $0x1c] sm:$0x1]
  %v831 = vld [vmem:[#allocation2 + $0x24] sm:$0x1]
  %v832 = vld [vmem:[#allocation2 + $0x2c] sm:$0x1]
  %v833 = vld [vmem:[#allocation2 + $0x34] sm:$0x1]
  %v834 = vld [vmem:[#allocation2 + $0x3c] sm:$0x1]
  %v835 = vld [vmem:[#allocation2 + $0x54] sm:$0x1]
  %v836 = vld [vmem:[#allocation2 + $0x5c] sm:$0x1]
  %v837 = vld [vmem:[#allocation2 + $0x64] sm:$0x1]
  %v838 = vld [vmem:[#allocation2 + $0x6c] sm:$0x1]
  %v839 = vld [vmem:[#allocation2 + $0x74] sm:$0x1]
  %v840 = vld [vmem:[#allocation2 + $0x7c] sm:$0x1]
  %v841 = vld [vmem:[#allocation2 + $0x84] sm:$0x1]
  %v842 = vld [vmem:[#allocation2 + $0x8c] sm:$0x1]
  %vm843 = vsmask.f32 3328
  %vm844 = vsmask.f32 7440
  %vm845 = vmor %vm843, %vm844
  %v847 = vshrl.u32 %v810, 16
  %v849 = vrot.slane %v847, 4
  %v850 = vshll.u32 %v810, 16
  %v852 = vrot.slane %v850, 5
  %v853 = vor.u32 %v849, %v852
  %v854 = vrot.slane %v853, 4
  %v856 = vshll.u32 %v827, 16
  %v858 = vrot.slane %v856, 5
  %v859 = vsel %vm845, %v854, %v858
  %v861 = vshrl.u32 %v811, 16
  %v863 = vrot.slane %v861, 4
  %v864 = vshll.u32 %v811, 16
  %v866 = vrot.slane %v864, 5
  %v867 = vor.u32 %v863, %v866
  %v868 = vrot.slane %v867, 4
  %v870 = vshll.u32 %v828, 16
  %v872 = vrot.slane %v870, 5
  %v873 = vsel %vm845, %v868, %v872
  %v875 = vshrl.u32 %v812, 16
  %v877 = vrot.slane %v875, 4
  %v878 = vshll.u32 %v812, 16
  %v880 = vrot.slane %v878, 5
  %v881 = vor.u32 %v877, %v880
  %v882 = vrot.slane %v881, 4
  %v884 = vshll.u32 %v829, 16
  %v886 = vrot.slane %v884, 5
  %v887 = vsel %vm845, %v882, %v886
  %v889 = vshrl.u32 %v813, 16
  %v891 = vrot.slane %v889, 4
  %v892 = vshll.u32 %v813, 16
  %v894 = vrot.slane %v892, 5
  %v895 = vor.u32 %v891, %v894
  %v896 = vrot.slane %v895, 4
  %v898 = vshll.u32 %v830, 16
  %v900 = vrot.slane %v898, 5
  %v901 = vsel %vm845, %v896, %v900
  %v903 = vshrl.u32 %v814, 16
  %v905 = vrot.slane %v903, 4
  %v906 = vshll.u32 %v814, 16
  %v908 = vrot.slane %v906, 5
  %v909 = vor.u32 %v905, %v908
  %v910 = vrot.slane %v909, 4
  %v912 = vshll.u32 %v831, 16
  %v914 = vrot.slane %v912, 5
  %v915 = vsel %vm845, %v910, %v914
  %v917 = vshrl.u32 %v815, 16
  %v919 = vrot.slane %v917, 4
  %v920 = vshll.u32 %v815, 16
  %v922 = vrot.slane %v920, 5
  %v923 = vor.u32 %v919, %v922
  %v924 = vrot.slane %v923, 4
  %v926 = vshll.u32 %v832, 16
  %v928 = vrot.slane %v926, 5
  %v929 = vsel %vm845, %v924, %v928
  %v931 = vshrl.u32 %v816, 16
  %v933 = vrot.slane %v931, 4
  %v934 = vshll.u32 %v816, 16
  %v936 = vrot.slane %v934, 5
  %v937 = vor.u32 %v933, %v936
  %v938 = vrot.slane %v937, 4
  %v940 = vshll.u32 %v833, 16
  %v942 = vrot.slane %v940, 5
  %v943 = vsel %vm845, %v938, %v942
  %v945 = vshrl.u32 %v817, 16
  %v947 = vrot.slane %v945, 4
  %v948 = vshll.u32 %v817, 16
  %v950 = vrot.slane %v948, 5
  %v951 = vor.u32 %v947, %v950
  %v952 = vrot.slane %v951, 4
  %v954 = vshll.u32 %v834, 16
  %v956 = vrot.slane %v954, 5
  %v957 = vsel %vm845, %v952, %v956
  %v959 = vshrl.u32 %v818, 16
  %v961 = vrot.slane %v959, 4
  %v962 = vshll.u32 %v818, 16
  %v964 = vrot.slane %v962, 5
  %v965 = vor.u32 %v961, %v964
  %v966 = vrot.slane %v965, 4
  %v968 = vshll.u32 %v835, 16
  %v970 = vrot.slane %v968, 5
  %v971 = vsel %vm845, %v966, %v970
  %v973 = vshrl.u32 %v819, 16
  %v975 = vrot.slane %v973, 4
  %v976 = vshll.u32 %v819, 16
  %v978 = vrot.slane %v976, 5
  %v979 = vor.u32 %v975, %v978
  %v980 = vrot.slane %v979, 4
  %v982 = vshll.u32 %v836, 16
  %v984 = vrot.slane %v982, 5
  %v985 = vsel %vm845, %v980, %v984
  %v987 = vshrl.u32 %v820, 16
  %v989 = vrot.slane %v987, 4
  %v990 = vshll.u32 %v820, 16
  %v992 = vrot.slane %v990, 5
  %v993 = vor.u32 %v989, %v992
  %v994 = vrot.slane %v993, 4
  %v996 = vshll.u32 %v837, 16
  %v998 = vrot.slane %v996, 5
  %v999 = vsel %vm845, %v994, %v998
  %v1001 = vshrl.u32 %v821, 16
  %v1003 = vrot.slane %v1001, 4
  %v1004 = vshll.u32 %v821, 16
  %v1006 = vrot.slane %v1004, 5
  %v1007 = vor.u32 %v1003, %v1006
  %v1008 = vrot.slane %v1007, 4
  %v1010 = vshll.u32 %v838, 16
  %v1012 = vrot.slane %v1010, 5
  %v1013 = vsel %vm845, %v1008, %v1012
  %v1015 = vshrl.u32 %v822, 16
  %v1017 = vrot.slane %v1015, 4
  %v1018 = vshll.u32 %v822, 16
  %v1020 = vrot.slane %v1018, 5
  %v1021 = vor.u32 %v1017, %v1020
  %v1022 = vrot.slane %v1021, 4
  %v1024 = vshll.u32 %v839, 16
  %v1026 = vrot.slane %v1024, 5
  %v1027 = vsel %vm845, %v1022, %v1026
  %v1029 = vshrl.u32 %v823, 16
  %v1031 = vrot.slane %v1029, 4
  %v1032 = vshll.u32 %v823, 16
  %v1034 = vrot.slane %v1032, 5
  %v1035 = vor.u32 %v1031, %v1034
  %v1036 = vrot.slane %v1035, 4
  %v1038 = vshll.u32 %v840, 16
  %v1040 = vrot.slane %v1038, 5
  %v1041 = vsel %vm845, %v1036, %v1040
  %v1043 = vshrl.u32 %v824, 16
  %v1045 = vrot.slane %v1043, 4
  %v1046 = vshll.u32 %v824, 16
  %v1048 = vrot.slane %v1046, 5
  %v1049 = vor.u32 %v1045, %v1048
  %v1050 = vrot.slane %v1049, 4
  %v1052 = vshll.u32 %v841, 16
  %v1054 = vrot.slane %v1052, 5
  %v1055 = vsel %vm845, %v1050, %v1054
  %v1057 = vshrl.u32 %v825, 16
  %v1059 = vrot.slane %v1057, 4
  %v1060 = vshll.u32 %v825, 16
  %v1062 = vrot.slane %v1060, 5
  %v1063 = vor.u32 %v1059, %v1062
  %v1064 = vrot.slane %v1063, 4
  %v1066 = vshll.u32 %v842, 16
  %v1068 = vrot.slane %v1066, 5
  %v1069 = vsel %vm845, %v1064, %v1068
  %s1070 = scalar_lea.vmem %s1, 2
  %v1071 = vld [vmem:[%s1070] sm:$0x3]
  %v1072 = vunpack.c.l.b16 %v859
  %v1073 = vunpack.c.l.b16 %v873
  %v1074 = vunpack.c.l.b16 %v887
  %v1075 = vunpack.c.l.b16 %v901
  %v1076 = vunpack.c.l.b16 %v915
  %v1077 = vunpack.c.l.b16 %v929
  %v1078 = vunpack.c.l.b16 %v943
  %v1079 = vunpack.c.l.b16 %v957
  %v1080 = vunpack.c.l.b16 %v971
  %v1081 = vunpack.c.l.b16 %v985
  %v1082 = vunpack.c.l.b16 %v999
  %v1083 = vunpack.c.l.b16 %v1013
  %v1084 = vunpack.c.l.b16 %v1027
  %v1085 = vunpack.c.l.b16 %v1041
  %v1086 = vunpack.c.l.b16 %v1055
  %v1087 = vunpack.c.l.b16 %v1069
  %v1088 = vpack.c.b16 %v1073, %v1072
  %v1089 = vpack.c.b16 %v1075, %v1074
  %v1090 = vpack.c.b16 %v1077, %v1076
  %v1091 = vpack.c.b16 %v1079, %v1078
  %v1092 = vpack.c.b16 %v1081, %v1080
  %v1093 = vpack.c.b16 %v1083, %v1082
  %v1094 = vpack.c.b16 %v1085, %v1084
  %v1095 = vpack.c.b16 %v1087, %v1086
  %vm1096 = vcmask 31744
  %v1098 = vsel %vm1096, %v1088, 0
  %v1101 = vsel %vm1096, %v1089, 0
  %v1104 = vsel %vm1096, %v1090, 0
  %v1107 = vsel %vm1096, %v1091, 0
  %v1110 = vsel %vm1096, %v1092, 0
  %v1113 = vsel %vm1096, %v1093, 0
  %v1116 = vsel %vm1096, %v1094, 0
  %v1119 = vsel %vm1096, %v1095, 0
  %vm1121 = vcmask 1041408
  %v1123 = vsel %vm1121, %v1071, 0
  %1125 = vmatpush.bf16.msra.mxu0 0
  %1126 = vmatpush.bf16.msra.mxu0 0
  %1127 = vmatpush.bf16.msra.mxu0 0
  %1128 = vmatpush.bf16.msra.mxu0 0
  %1129 = vmatpush.bf16.msra.mxu0 0
  %1130 = vmatpush.bf16.msra.mxu0 0
  %1131 = vmatpush.bf16.msra.mxu0 0
  %1132 = vmatpush.bf16.msra.mxu0 %v1123
  %1133 = vmatmul.bf16.gmra.mxu0 %v1098
  %v1134 = vpop.f32.mrf.mxu0
  %v1135 = vadd.f32 0.0, %v1134
  %v1136 = vpop.f32.mrf.mxu0
  %v1137 = vadd.f32 0.0, %v1136
  %1138 = vmatmul.bf16.gmra.mxu0 %v1101
  %v1139 = vpop.f32.mrf.mxu0
  %v1140 = vadd.f32 0.0, %v1139
  %v1141 = vpop.f32.mrf.mxu0
  %v1142 = vadd.f32 0.0, %v1141
  %1143 = vmatmul.bf16.gmra.mxu0 %v1104
  %v1144 = vpop.f32.mrf.mxu0
  %v1145 = vadd.f32 0.0, %v1144
  %v1146 = vpop.f32.mrf.mxu0
  %v1147 = vadd.f32 0.0, %v1146
  %1148 = vmatmul.bf16.gmra.mxu0 %v1107
  %v1149 = vpop.f32.mrf.mxu0
  %v1150 = vadd.f32 0.0, %v1149
  %v1151 = vpop.f32.mrf.mxu0
  %v1152 = vadd.f32 0.0, %v1151
  %1153 = vmatmul.bf16.gmra.mxu0 %v1110
  %v1154 = vpop.f32.mrf.mxu0
  %v1155 = vadd.f32 0.0, %v1154
  %v1156 = vpop.f32.mrf.mxu0
  %v1157 = vadd.f32 0.0, %v1156
  %1158 = vmatmul.bf16.gmra.mxu0 %v1113
  %v1159 = vpop.f32.mrf.mxu0
  %v1160 = vadd.f32 0.0, %v1159
  %v1161 = vpop.f32.mrf.mxu0
  %v1162 = vadd.f32 0.0, %v1161
  %1163 = vmatmul.bf16.gmra.mxu0 %v1116
  %v1164 = vpop.f32.mrf.mxu0
  %v1165 = vadd.f32 0.0, %v1164
  %v1166 = vpop.f32.mrf.mxu0
  %v1167 = vadd.f32 0.0, %v1166
  %1168 = vmatmul.bf16.gmra.mxu0 %v1119
  %v1169 = vpop.f32.mrf.mxu0
  %v1170 = vadd.f32 0.0, %v1169
  %v1171 = vpop.f32.mrf.mxu0
  %v1172 = vadd.f32 0.0, %v1171
  %1173 = vdwg.mxu0
  %v1190 = vunpack.c.l.b16 %v810
  %v1191 = vunpack.c.l.b16 %v811
  %v1192 = vunpack.c.l.b16 %v812
  %v1193 = vunpack.c.l.b16 %v813
  %v1194 = vunpack.c.l.b16 %v814
  %v1195 = vunpack.c.l.b16 %v815
  %v1196 = vunpack.c.l.b16 %v816
  %v1197 = vunpack.c.l.b16 %v817
  %v1198 = vunpack.c.l.b16 %v818
  %v1199 = vunpack.c.l.b16 %v819
  %v1200 = vunpack.c.l.b16 %v820
  %v1201 = vunpack.c.l.b16 %v821
  %v1202 = vunpack.c.l.b16 %v822
  %v1203 = vunpack.c.l.b16 %v823
  %v1204 = vunpack.c.l.b16 %v824
  %v1205 = vunpack.c.l.b16 %v825
  %v1206 = vpack.c.b16 %v1191, %v1190
  %v1207 = vpack.c.b16 %v1193, %v1192
  %v1208 = vpack.c.b16 %v1195, %v1194
  %v1209 = vpack.c.b16 %v1197, %v1196
  %v1210 = vpack.c.b16 %v1199, %v1198
  %v1211 = vpack.c.b16 %v1201, %v1200
  %v1212 = vpack.c.b16 %v1203, %v1202
  %v1213 = vpack.c.b16 %v1205, %v1204
  %v1215 = vsel %vm1096, %v1206, 0
  %v1218 = vsel %vm1096, %v1207, 0
  %v1221 = vsel %vm1096, %v1208, 0
  %v1224 = vsel %vm1096, %v1209, 0
  %v1227 = vsel %vm1096, %v1210, 0
  %v1230 = vsel %vm1096, %v1211, 0
  %v1233 = vsel %vm1096, %v1212, 0
  %v1236 = vsel %vm1096, %v1213, 0
  %v1239 = vsel %vm1121, %v826, 0
  %1241 = vmatpush.bf16.msra.mxu0 0
  %1242 = vmatpush.bf16.msra.mxu0 0
  %1243 = vmatpush.bf16.msra.mxu0 0
  %1244 = vmatpush.bf16.msra.mxu0 0
  %1245 = vmatpush.bf16.msra.mxu0 0
  %1246 = vmatpush.bf16.msra.mxu0 0
  %1247 = vmatpush.bf16.msra.mxu0 0
  %1248 = vmatpush.bf16.msra.mxu0 %v1239
  %1249 = vmatmul.bf16.gmra.mxu0 %v1215
  %v1250 = vpop.f32.mrf.mxu0
  %v1251 = vadd.f32 %v1135, %v1250
  %v1252 = vpop.f32.mrf.mxu0
  %v1253 = vadd.f32 %v1137, %v1252
  %1254 = vmatmul.bf16.gmra.mxu0 %v1218
  %v1255 = vpop.f32.mrf.mxu0
  %v1256 = vadd.f32 %v1140, %v1255
  %v1257 = vpop.f32.mrf.mxu0
  %v1258 = vadd.f32 %v1142, %v1257
  %1259 = vmatmul.bf16.gmra.mxu0 %v1221
  %v1260 = vpop.f32.mrf.mxu0
  %v1261 = vadd.f32 %v1145, %v1260
  %v1262 = vpop.f32.mrf.mxu0
  %v1263 = vadd.f32 %v1147, %v1262
  %1264 = vmatmul.bf16.gmra.mxu0 %v1224
  %v1265 = vpop.f32.mrf.mxu0
  %v1266 = vadd.f32 %v1150, %v1265
  %v1267 = vpop.f32.mrf.mxu0
  %v1268 = vadd.f32 %v1152, %v1267
  %1269 = vmatmul.bf16.gmra.mxu0 %v1227
  %v1270 = vpop.f32.mrf.mxu0
  %v1271 = vadd.f32 %v1155, %v1270
  %v1272 = vpop.f32.mrf.mxu0
  %v1273 = vadd.f32 %v1157, %v1272
  %1274 = vmatmul.bf16.gmra.mxu0 %v1230
  %v1275 = vpop.f32.mrf.mxu0
  %v1276 = vadd.f32 %v1160, %v1275
  %v1277 = vpop.f32.mrf.mxu0
  %v1278 = vadd.f32 %v1162, %v1277
  %1279 = vmatmul.bf16.gmra.mxu0 %v1233
  %v1280 = vpop.f32.mrf.mxu0
  %v1281 = vadd.f32 %v1165, %v1280
  %v1282 = vpop.f32.mrf.mxu0
  %v1283 = vadd.f32 %v1167, %v1282
  %1284 = vmatmul.bf16.gmra.mxu0 %v1236
  %v1285 = vpop.f32.mrf.mxu0
  %v1286 = vadd.f32 %v1170, %v1285
  %v1287 = vpop.f32.mrf.mxu0
  %v1288 = vadd.f32 %v1172, %v1287
  %1289 = vdwg.mxu0
  %v1290 = vld [vmem:[#allocation2] sm:$0xe]
  %v1291 = vld [vmem:[#allocation2 + $0x8] sm:$0xe]
  %v1292 = vld [vmem:[#allocation2 + $0x10] sm:$0xe]
  %v1293 = vld [vmem:[#allocation2 + $0x18] sm:$0xe]
  %v1294 = vld [vmem:[#allocation2 + $0x20] sm:$0xe]
  %v1295 = vld [vmem:[#allocation2 + $0x28] sm:$0xe]
  %v1296 = vld [vmem:[#allocation2 + $0x30] sm:$0xe]
  %v1297 = vld [vmem:[#allocation2 + $0x38] sm:$0xe]
  %v1298 = vld [vmem:[#allocation2 + $0x50] sm:$0xe]
  %v1299 = vld [vmem:[#allocation2 + $0x58] sm:$0xe]
  %v1300 = vld [vmem:[#allocation2 + $0x60] sm:$0xe]
  %v1301 = vld [vmem:[#allocation2 + $0x68] sm:$0xe]
  %v1302 = vld [vmem:[#allocation2 + $0x70] sm:$0xe]
  %v1303 = vld [vmem:[#allocation2 + $0x78] sm:$0xe]
  %v1304 = vld [vmem:[#allocation2 + $0x80] sm:$0xe]
  %v1305 = vld [vmem:[#allocation2 + $0x88] sm:$0xe]
  %vm1338 = vcmask 1042432
  %vm1339 = vcmask 1046532
  %vm1340 = vmor %vm1338, %vm1339
  %v1341 = vrot.slane %v1290, 5
  %v1342 = vrot.slane %v1341, 4
  %v1343 = vrot.slane %v827, 5
  %v1344 = vsel %vm1340, %v1342, %v1343
  %v1345 = vrot.slane %v1291, 5
  %v1346 = vrot.slane %v1345, 4
  %v1347 = vrot.slane %v828, 5
  %v1348 = vsel %vm1340, %v1346, %v1347
  %v1349 = vrot.slane %v1292, 5
  %v1350 = vrot.slane %v1349, 4
  %v1351 = vrot.slane %v829, 5
  %v1352 = vsel %vm1340, %v1350, %v1351
  %v1353 = vrot.slane %v1293, 5
  %v1354 = vrot.slane %v1353, 4
  %v1355 = vrot.slane %v830, 5
  %v1356 = vsel %vm1340, %v1354, %v1355
  %v1357 = vrot.slane %v1294, 5
  %v1358 = vrot.slane %v1357, 4
  %v1359 = vrot.slane %v831, 5
  %v1360 = vsel %vm1340, %v1358, %v1359
  %v1361 = vrot.slane %v1295, 5
  %v1362 = vrot.slane %v1361, 4
  %v1363 = vrot.slane %v832, 5
  %v1364 = vsel %vm1340, %v1362, %v1363
  %v1365 = vrot.slane %v1296, 5
  %v1366 = vrot.slane %v1365, 4
  %v1367 = vrot.slane %v833, 5
  %v1368 = vsel %vm1340, %v1366, %v1367
  %v1369 = vrot.slane %v1297, 5
  %v1370 = vrot.slane %v1369, 4
  %v1371 = vrot.slane %v834, 5
  %v1372 = vsel %vm1340, %v1370, %v1371
  %v1373 = vrot.slane %v1298, 5
  %v1374 = vrot.slane %v1373, 4
  %v1375 = vrot.slane %v835, 5
  %v1376 = vsel %vm1340, %v1374, %v1375
  %v1377 = vrot.slane %v1299, 5
  %v1378 = vrot.slane %v1377, 4
  %v1379 = vrot.slane %v836, 5
  %v1380 = vsel %vm1340, %v1378, %v1379
  %v1381 = vrot.slane %v1300, 5
  %v1382 = vrot.slane %v1381, 4
  %v1383 = vrot.slane %v837, 5
  %v1384 = vsel %vm1340, %v1382, %v1383
  %v1385 = vrot.slane %v1301, 5
  %v1386 = vrot.slane %v1385, 4
  %v1387 = vrot.slane %v838, 5
  %v1388 = vsel %vm1340, %v1386, %v1387
  %v1389 = vrot.slane %v1302, 5
  %v1390 = vrot.slane %v1389, 4
  %v1391 = vrot.slane %v839, 5
  %v1392 = vsel %vm1340, %v1390, %v1391
  %v1393 = vrot.slane %v1303, 5
  %v1394 = vrot.slane %v1393, 4
  %v1395 = vrot.slane %v840, 5
  %v1396 = vsel %vm1340, %v1394, %v1395
  %v1397 = vrot.slane %v1304, 5
  %v1398 = vrot.slane %v1397, 4
  %v1399 = vrot.slane %v841, 5
  %v1400 = vsel %vm1340, %v1398, %v1399
  %v1401 = vrot.slane %v1305, 5
  %v1402 = vrot.slane %v1401, 4
  %v1403 = vrot.slane %v842, 5
  %v1404 = vsel %vm1340, %v1402, %v1403
  %s1405 = scalar_lea.vmem %s1, 4
  %v1406 = vld [vmem:[%s1405] sm:$0x3]
  %v1407 = vunpack.c.l.b16 %v1344
  %v1408 = vunpack.c.l.b16 %v1348
  %v1409 = vunpack.c.l.b16 %v1352
  %v1410 = vunpack.c.l.b16 %v1356
  %v1411 = vunpack.c.l.b16 %v1360
  %v1412 = vunpack.c.l.b16 %v1364
  %v1413 = vunpack.c.l.b16 %v1368
  %v1414 = vunpack.c.l.b16 %v1372
  %v1415 = vunpack.c.l.b16 %v1376
  %v1416 = vunpack.c.l.b16 %v1380
  %v1417 = vunpack.c.l.b16 %v1384
  %v1418 = vunpack.c.l.b16 %v1388
  %v1419 = vunpack.c.l.b16 %v1392
  %v1420 = vunpack.c.l.b16 %v1396
  %v1421 = vunpack.c.l.b16 %v1400
  %v1422 = vunpack.c.l.b16 %v1404
  %v1423 = vpack.c.b16 %v1408, %v1407
  %v1424 = vpack.c.b16 %v1410, %v1409
  %v1425 = vpack.c.b16 %v1412, %v1411
  %v1426 = vpack.c.b16 %v1414, %v1413
  %v1427 = vpack.c.b16 %v1416, %v1415
  %v1428 = vpack.c.b16 %v1418, %v1417
  %v1429 = vpack.c.b16 %v1420, %v1419
  %v1430 = vpack.c.b16 %v1422, %v1421
  %v1432 = vsel %vm1096, %v1423, 0
  %v1435 = vsel %vm1096, %v1424, 0
  %v1438 = vsel %vm1096, %v1425, 0
  %v1441 = vsel %vm1096, %v1426, 0
  %v1444 = vsel %vm1096, %v1427, 0
  %v1447 = vsel %vm1096, %v1428, 0
  %v1450 = vsel %vm1096, %v1429, 0
  %v1453 = vsel %vm1096, %v1430, 0
  %v1456 = vsel %vm1121, %v1406, 0
  %1458 = vmatpush.bf16.msra.mxu0 0
  %1459 = vmatpush.bf16.msra.mxu0 0
  %1460 = vmatpush.bf16.msra.mxu0 0
  %1461 = vmatpush.bf16.msra.mxu0 0
  %1462 = vmatpush.bf16.msra.mxu0 0
  %1463 = vmatpush.bf16.msra.mxu0 0
  %1464 = vmatpush.bf16.msra.mxu0 0
  %1465 = vmatpush.bf16.msra.mxu0 %v1456
  %1466 = vmatmul.bf16.gmra.mxu0 %v1432
  %v1467 = vpop.f32.mrf.mxu0
  %v1468 = vadd.f32 0.0, %v1467
  %v1469 = vpop.f32.mrf.mxu0
  %v1470 = vadd.f32 0.0, %v1469
  %1471 = vmatmul.bf16.gmra.mxu0 %v1435
  %v1472 = vpop.f32.mrf.mxu0
  %v1473 = vadd.f32 0.0, %v1472
  %v1474 = vpop.f32.mrf.mxu0
  %v1475 = vadd.f32 0.0, %v1474
  %1476 = vmatmul.bf16.gmra.mxu0 %v1438
  %v1477 = vpop.f32.mrf.mxu0
  %v1478 = vadd.f32 0.0, %v1477
  %v1479 = vpop.f32.mrf.mxu0
  %v1480 = vadd.f32 0.0, %v1479
  %1481 = vmatmul.bf16.gmra.mxu0 %v1441
  %v1482 = vpop.f32.mrf.mxu0
  %v1483 = vadd.f32 0.0, %v1482
  %v1484 = vpop.f32.mrf.mxu0
  %v1485 = vadd.f32 0.0, %v1484
  %1486 = vmatmul.bf16.gmra.mxu0 %v1444
  %v1487 = vpop.f32.mrf.mxu0
  %v1488 = vadd.f32 0.0, %v1487
  %v1489 = vpop.f32.mrf.mxu0
  %v1490 = vadd.f32 0.0, %v1489
  %1491 = vmatmul.bf16.gmra.mxu0 %v1447
  %v1492 = vpop.f32.mrf.mxu0
  %v1493 = vadd.f32 0.0, %v1492
  %v1494 = vpop.f32.mrf.mxu0
  %v1495 = vadd.f32 0.0, %v1494
  %1496 = vmatmul.bf16.gmra.mxu0 %v1450
  %v1497 = vpop.f32.mrf.mxu0
  %v1498 = vadd.f32 0.0, %v1497
  %v1499 = vpop.f32.mrf.mxu0
  %v1500 = vadd.f32 0.0, %v1499
  %1501 = vmatmul.bf16.gmra.mxu0 %v1453
  %v1502 = vpop.f32.mrf.mxu0
  %v1503 = vadd.f32 0.0, %v1502
  %v1504 = vpop.f32.mrf.mxu0
  %v1505 = vadd.f32 0.0, %v1504
  %1506 = vdwg.mxu0
  %v1507 = vadd.f32 %v1251, %v1468
  %v1508 = vadd.f32 %v1253, %v1470
  %v1509 = vadd.f32 %v1256, %v1473
  %v1510 = vadd.f32 %v1258, %v1475
  %v1511 = vadd.f32 %v1261, %v1478
  %v1512 = vadd.f32 %v1263, %v1480
  %v1513 = vadd.f32 %v1266, %v1483
  %v1514 = vadd.f32 %v1268, %v1485
  %v1515 = vadd.f32 %v1271, %v1488
  %v1516 = vadd.f32 %v1273, %v1490
  %v1517 = vadd.f32 %v1276, %v1493
  %v1518 = vadd.f32 %v1278, %v1495
  %v1519 = vadd.f32 %v1281, %v1498
  %v1520 = vadd.f32 %v1283, %v1500
  %v1521 = vadd.f32 %v1286, %v1503
  %v1522 = vadd.f32 %v1288, %v1505
  %v1523 = vld [vmem:[%s711] sm:$0xf]
  %v1524 = vld [vmem:[%s711 + $0x8] sm:$0xf]
  %v1525 = vld [vmem:[%s711 + $0x10] sm:$0xf]
  %v1526 = vld [vmem:[%s711 + $0x18] sm:$0xf]
  %v1527 = vld [vmem:[%s711 + $0x20] sm:$0xf]
  %v1528 = vld [vmem:[%s711 + $0x28] sm:$0xf]
  %v1529 = vld [vmem:[%s711 + $0x30] sm:$0xf]
  %v1530 = vld [vmem:[%s711 + $0x38] sm:$0xf]
  %v1531 = vld [vmem:[%s711 + $0x50] sm:$0xf]
  %v1532 = vld [vmem:[%s711 + $0x58] sm:$0xf]
  %v1533 = vld [vmem:[%s711 + $0x60] sm:$0xf]
  %v1534 = vld [vmem:[%s711 + $0x68] sm:$0xf]
  %v1535 = vld [vmem:[%s711 + $0x70] sm:$0xf]
  %v1536 = vld [vmem:[%s711 + $0x78] sm:$0xf]
  %v1537 = vld [vmem:[%s711 + $0x80] sm:$0xf]
  %v1538 = vld [vmem:[%s711 + $0x88] sm:$0xf]
  %s1539 = scalar_lea.vmem %s1, 6
  %v1540 = vld [vmem:[%s1539] sm:$0x3]
  %v1557 = vunpack.c.l.b16 %v1523
  %v1558 = vunpack.c.l.b16 %v1524
  %v1559 = vunpack.c.l.b16 %v1525
  %v1560 = vunpack.c.l.b16 %v1526
  %v1561 = vunpack.c.l.b16 %v1527
  %v1562 = vunpack.c.l.b16 %v1528
  %v1563 = vunpack.c.l.b16 %v1529
  %v1564 = vunpack.c.l.b16 %v1530
  %v1565 = vunpack.c.l.b16 %v1531
  %v1566 = vunpack.c.l.b16 %v1532
  %v1567 = vunpack.c.l.b16 %v1533
  %v1568 = vunpack.c.l.b16 %v1534
  %v1569 = vunpack.c.l.b16 %v1535
  %v1570 = vunpack.c.l.b16 %v1536
  %v1571 = vunpack.c.l.b16 %v1537
  %v1572 = vunpack.c.l.b16 %v1538
  %v1573 = vpack.c.b16 %v1558, %v1557
  %v1574 = vpack.c.b16 %v1560, %v1559
  %v1575 = vpack.c.b16 %v1562, %v1561
  %v1576 = vpack.c.b16 %v1564, %v1563
  %v1577 = vpack.c.b16 %v1566, %v1565
  %v1578 = vpack.c.b16 %v1568, %v1567
  %v1579 = vpack.c.b16 %v1570, %v1569
  %v1580 = vpack.c.b16 %v1572, %v1571
  %v1582 = vsel %vm1096, %v1573, 0
  %v1585 = vsel %vm1096, %v1574, 0
  %v1588 = vsel %vm1096, %v1575, 0
  %v1591 = vsel %vm1096, %v1576, 0
  %v1594 = vsel %vm1096, %v1577, 0
  %v1597 = vsel %vm1096, %v1578, 0
  %v1600 = vsel %vm1096, %v1579, 0
  %v1603 = vsel %vm1096, %v1580, 0
  %v1606 = vsel %vm1121, %v1540, 0
  %1608 = vmatpush.bf16.msra.mxu0 0
  %1609 = vmatpush.bf16.msra.mxu0 0
  %1610 = vmatpush.bf16.msra.mxu0 0
  %1611 = vmatpush.bf16.msra.mxu0 0
  %1612 = vmatpush.bf16.msra.mxu0 0
  %1613 = vmatpush.bf16.msra.mxu0 0
  %1614 = vmatpush.bf16.msra.mxu0 0
  %1615 = vmatpush.bf16.msra.mxu0 %v1606
  %1616 = vmatmul.bf16.gmra.mxu0 %v1582
  %v1617 = vpop.f32.mrf.mxu0
  %v1618 = vadd.f32 0.0, %v1617
  %v1619 = vpop.f32.mrf.mxu0
  %v1620 = vadd.f32 0.0, %v1619
  %1621 = vmatmul.bf16.gmra.mxu0 %v1585
  %v1622 = vpop.f32.mrf.mxu0
  %v1623 = vadd.f32 0.0, %v1622
  %v1624 = vpop.f32.mrf.mxu0
  %v1625 = vadd.f32 0.0, %v1624
  %1626 = vmatmul.bf16.gmra.mxu0 %v1588
  %v1627 = vpop.f32.mrf.mxu0
  %v1628 = vadd.f32 0.0, %v1627
  %v1629 = vpop.f32.mrf.mxu0
  %v1630 = vadd.f32 0.0, %v1629
  %1631 = vmatmul.bf16.gmra.mxu0 %v1591
  %v1632 = vpop.f32.mrf.mxu0
  %v1633 = vadd.f32 0.0, %v1632
  %v1634 = vpop.f32.mrf.mxu0
  %v1635 = vadd.f32 0.0, %v1634
  %1636 = vmatmul.bf16.gmra.mxu0 %v1594
  %v1637 = vpop.f32.mrf.mxu0
  %v1638 = vadd.f32 0.0, %v1637
  %v1639 = vpop.f32.mrf.mxu0
  %v1640 = vadd.f32 0.0, %v1639
  %1641 = vmatmul.bf16.gmra.mxu0 %v1597
  %v1642 = vpop.f32.mrf.mxu0
  %v1643 = vadd.f32 0.0, %v1642
  %v1644 = vpop.f32.mrf.mxu0
  %v1645 = vadd.f32 0.0, %v1644
  %1646 = vmatmul.bf16.gmra.mxu0 %v1600
  %v1647 = vpop.f32.mrf.mxu0
  %v1648 = vadd.f32 0.0, %v1647
  %v1649 = vpop.f32.mrf.mxu0
  %v1650 = vadd.f32 0.0, %v1649
  %1651 = vmatmul.bf16.gmra.mxu0 %v1603
  %v1652 = vpop.f32.mrf.mxu0
  %v1653 = vadd.f32 0.0, %v1652
  %v1654 = vpop.f32.mrf.mxu0
  %v1655 = vadd.f32 0.0, %v1654
  %1656 = vdwg.mxu0
  %v1657 = vadd.f32 %v1507, %v1618
  %v1658 = vadd.f32 %v1508, %v1620
  %v1659 = vadd.f32 %v1509, %v1623
  %v1660 = vadd.f32 %v1510, %v1625
  %v1661 = vadd.f32 %v1511, %v1628
  %v1662 = vadd.f32 %v1512, %v1630
  %v1663 = vadd.f32 %v1513, %v1633
  %v1664 = vadd.f32 %v1514, %v1635
  %v1665 = vadd.f32 %v1515, %v1638
  %v1666 = vadd.f32 %v1516, %v1640
  %v1667 = vadd.f32 %v1517, %v1643
  %v1668 = vadd.f32 %v1518, %v1645
  %v1669 = vadd.f32 %v1519, %v1648
  %v1670 = vadd.f32 %v1520, %v1650
  %v1671 = vadd.f32 %v1521, %v1653
  %v1672 = vadd.f32 %v1522, %v1655
  %v1673 = vld [vmem:[%s711] sm:$0xf]
  %v1674 = vld [vmem:[%s711 + $0x4] sm:$0x1]
  %v1675 = vld [vmem:[%s711 + $0x8] sm:$0xf]
  %v1676 = vld [vmem:[%s711 + $0xc] sm:$0x1]
  %v1677 = vld [vmem:[%s711 + $0x10] sm:$0xf]
  %v1678 = vld [vmem:[%s711 + $0x14] sm:$0x1]
  %v1679 = vld [vmem:[%s711 + $0x18] sm:$0xf]
  %v1680 = vld [vmem:[%s711 + $0x1c] sm:$0x1]
  %v1681 = vld [vmem:[%s711 + $0x20] sm:$0xf]
  %v1682 = vld [vmem:[%s711 + $0x24] sm:$0x1]
  %v1683 = vld [vmem:[%s711 + $0x28] sm:$0xf]
  %v1684 = vld [vmem:[%s711 + $0x2c] sm:$0x1]
  %v1685 = vld [vmem:[%s711 + $0x30] sm:$0xf]
  %v1686 = vld [vmem:[%s711 + $0x34] sm:$0x1]
  %v1687 = vld [vmem:[%s711 + $0x38] sm:$0xf]
  %v1688 = vld [vmem:[%s711 + $0x3c] sm:$0x1]
  %v1689 = vld [vmem:[%s711 + $0x50] sm:$0xf]
  %v1690 = vld [vmem:[%s711 + $0x54] sm:$0x1]
  %v1691 = vld [vmem:[%s711 + $0x58] sm:$0xf]
  %v1692 = vld [vmem:[%s711 + $0x5c] sm:$0x1]
  %v1693 = vld [vmem:[%s711 + $0x60] sm:$0xf]
  %v1694 = vld [vmem:[%s711 + $0x64] sm:$0x1]
  %v1695 = vld [vmem:[%s711 + $0x68] sm:$0xf]
  %v1696 = vld [vmem:[%s711 + $0x6c] sm:$0x1]
  %v1697 = vld [vmem:[%s711 + $0x70] sm:$0xf]
  %v1698 = vld [vmem:[%s711 + $0x74] sm:$0x1]
  %v1699 = vld [vmem:[%s711 + $0x78] sm:$0xf]
  %v1700 = vld [vmem:[%s711 + $0x7c] sm:$0x1]
  %v1701 = vld [vmem:[%s711 + $0x80] sm:$0xf]
  %v1702 = vld [vmem:[%s711 + $0x84] sm:$0x1]
  %v1703 = vld [vmem:[%s711 + $0x88] sm:$0xf]
  %v1704 = vld [vmem:[%s711 + $0x8c] sm:$0x1]
  %v1706 = vshrl.u32 %v1673, 16
  %v1708 = vrot.slane %v1706, 4
  %v1709 = vshll.u32 %v1673, 16
  %v1711 = vrot.slane %v1709, 5
  %v1712 = vor.u32 %v1708, %v1711
  %v1713 = vrot.slane %v1712, 4
  %v1715 = vshll.u32 %v1674, 16
  %v1717 = vrot.slane %v1715, 5
  %v1718 = vsel %vm845, %v1713, %v1717
  %v1720 = vshrl.u32 %v1675, 16
  %v1722 = vrot.slane %v1720, 4
  %v1723 = vshll.u32 %v1675, 16
  %v1725 = vrot.slane %v1723, 5
  %v1726 = vor.u32 %v1722, %v1725
  %v1727 = vrot.slane %v1726, 4
  %v1729 = vshll.u32 %v1676, 16
  %v1731 = vrot.slane %v1729, 5
  %v1732 = vsel %vm845, %v1727, %v1731
  %v1734 = vshrl.u32 %v1677, 16
  %v1736 = vrot.slane %v1734, 4
  %v1737 = vshll.u32 %v1677, 16
  %v1739 = vrot.slane %v1737, 5
  %v1740 = vor.u32 %v1736, %v1739
  %v1741 = vrot.slane %v1740, 4
  %v1743 = vshll.u32 %v1678, 16
  %v1745 = vrot.slane %v1743, 5
  %v1746 = vsel %vm845, %v1741, %v1745
  %v1748 = vshrl.u32 %v1679, 16
  %v1750 = vrot.slane %v1748, 4
  %v1751 = vshll.u32 %v1679, 16
  %v1753 = vrot.slane %v1751, 5
  %v1754 = vor.u32 %v1750, %v1753
  %v1755 = vrot.slane %v1754, 4
  %v1757 = vshll.u32 %v1680, 16
  %v1759 = vrot.slane %v1757, 5
  %v1760 = vsel %vm845, %v1755, %v1759
  %v1762 = vshrl.u32 %v1681, 16
  %v1764 = vrot.slane %v1762, 4
  %v1765 = vshll.u32 %v1681, 16
  %v1767 = vrot.slane %v1765, 5
  %v1768 = vor.u32 %v1764, %v1767
  %v1769 = vrot.slane %v1768, 4
  %v1771 = vshll.u32 %v1682, 16
  %v1773 = vrot.slane %v1771, 5
  %v1774 = vsel %vm845, %v1769, %v1773
  %v1776 = vshrl.u32 %v1683, 16
  %v1778 = vrot.slane %v1776, 4
  %v1779 = vshll.u32 %v1683, 16
  %v1781 = vrot.slane %v1779, 5
  %v1782 = vor.u32 %v1778, %v1781
  %v1783 = vrot.slane %v1782, 4
  %v1785 = vshll.u32 %v1684, 16
  %v1787 = vrot.slane %v1785, 5
  %v1788 = vsel %vm845, %v1783, %v1787
  %v1790 = vshrl.u32 %v1685, 16
  %v1792 = vrot.slane %v1790, 4
  %v1793 = vshll.u32 %v1685, 16
  %v1795 = vrot.slane %v1793, 5
  %v1796 = vor.u32 %v1792, %v1795
  %v1797 = vrot.slane %v1796, 4
  %v1799 = vshll.u32 %v1686, 16
  %v1801 = vrot.slane %v1799, 5
  %v1802 = vsel %vm845, %v1797, %v1801
  %v1804 = vshrl.u32 %v1687, 16
  %v1806 = vrot.slane %v1804, 4
  %v1807 = vshll.u32 %v1687, 16
  %v1809 = vrot.slane %v1807, 5
  %v1810 = vor.u32 %v1806, %v1809
  %v1811 = vrot.slane %v1810, 4
  %v1813 = vshll.u32 %v1688, 16
  %v1815 = vrot.slane %v1813, 5
  %v1816 = vsel %vm845, %v1811, %v1815
  %v1818 = vshrl.u32 %v1689, 16
  %v1820 = vrot.slane %v1818, 4
  %v1821 = vshll.u32 %v1689, 16
  %v1823 = vrot.slane %v1821, 5
  %v1824 = vor.u32 %v1820, %v1823
  %v1825 = vrot.slane %v1824, 4
  %v1827 = vshll.u32 %v1690, 16
  %v1829 = vrot.slane %v1827, 5
  %v1830 = vsel %vm845, %v1825, %v1829
  %v1832 = vshrl.u32 %v1691, 16
  %v1834 = vrot.slane %v1832, 4
  %v1835 = vshll.u32 %v1691, 16
  %v1837 = vrot.slane %v1835, 5
  %v1838 = vor.u32 %v1834, %v1837
  %v1839 = vrot.slane %v1838, 4
  %v1841 = vshll.u32 %v1692, 16
  %v1843 = vrot.slane %v1841, 5
  %v1844 = vsel %vm845, %v1839, %v1843
  %v1846 = vshrl.u32 %v1693, 16
  %v1848 = vrot.slane %v1846, 4
  %v1849 = vshll.u32 %v1693, 16
  %v1851 = vrot.slane %v1849, 5
  %v1852 = vor.u32 %v1848, %v1851
  %v1853 = vrot.slane %v1852, 4
  %v1855 = vshll.u32 %v1694, 16
  %v1857 = vrot.slane %v1855, 5
  %v1858 = vsel %vm845, %v1853, %v1857
  %v1860 = vshrl.u32 %v1695, 16
  %v1862 = vrot.slane %v1860, 4
  %v1863 = vshll.u32 %v1695, 16
  %v1865 = vrot.slane %v1863, 5
  %v1866 = vor.u32 %v1862, %v1865
  %v1867 = vrot.slane %v1866, 4
  %v1869 = vshll.u32 %v1696, 16
  %v1871 = vrot.slane %v1869, 5
  %v1872 = vsel %vm845, %v1867, %v1871
  %v1874 = vshrl.u32 %v1697, 16
  %v1876 = vrot.slane %v1874, 4
  %v1877 = vshll.u32 %v1697, 16
  %v1879 = vrot.slane %v1877, 5
  %v1880 = vor.u32 %v1876, %v1879
  %v1881 = vrot.slane %v1880, 4
  %v1883 = vshll.u32 %v1698, 16
  %v1885 = vrot.slane %v1883, 5
  %v1886 = vsel %vm845, %v1881, %v1885
  %v1888 = vshrl.u32 %v1699, 16
  %v1890 = vrot.slane %v1888, 4
  %v1891 = vshll.u32 %v1699, 16
  %v1893 = vrot.slane %v1891, 5
  %v1894 = vor.u32 %v1890, %v1893
  %v1895 = vrot.slane %v1894, 4
  %v1897 = vshll.u32 %v1700, 16
  %v1899 = vrot.slane %v1897, 5
  %v1900 = vsel %vm845, %v1895, %v1899
  %v1902 = vshrl.u32 %v1701, 16
  %v1904 = vrot.slane %v1902, 4
  %v1905 = vshll.u32 %v1701, 16
  %v1907 = vrot.slane %v1905, 5
  %v1908 = vor.u32 %v1904, %v1907
  %v1909 = vrot.slane %v1908, 4
  %v1911 = vshll.u32 %v1702, 16
  %v1913 = vrot.slane %v1911, 5
  %v1914 = vsel %vm845, %v1909, %v1913
  %v1916 = vshrl.u32 %v1703, 16
  %v1918 = vrot.slane %v1916, 4
  %v1919 = vshll.u32 %v1703, 16
  %v1921 = vrot.slane %v1919, 5
  %v1922 = vor.u32 %v1918, %v1921
  %v1923 = vrot.slane %v1922, 4
  %v1925 = vshll.u32 %v1704, 16
  %v1927 = vrot.slane %v1925, 5
  %v1928 = vsel %vm845, %v1923, %v1927
  %s1929 = scalar_lea.vmem %s1, 8
  %v1930 = vld [vmem:[%s1929] sm:$0x3]
  %v1931 = vunpack.c.l.b16 %v1718
  %v1932 = vunpack.c.l.b16 %v1732
  %v1933 = vunpack.c.l.b16 %v1746
  %v1934 = vunpack.c.l.b16 %v1760
  %v1935 = vunpack.c.l.b16 %v1774
  %v1936 = vunpack.c.l.b16 %v1788
  %v1937 = vunpack.c.l.b16 %v1802
  %v1938 = vunpack.c.l.b16 %v1816
  %v1939 = vunpack.c.l.b16 %v1830
  %v1940 = vunpack.c.l.b16 %v1844
  %v1941 = vunpack.c.l.b16 %v1858
  %v1942 = vunpack.c.l.b16 %v1872
  %v1943 = vunpack.c.l.b16 %v1886
  %v1944 = vunpack.c.l.b16 %v1900
  %v1945 = vunpack.c.l.b16 %v1914
  %v1946 = vunpack.c.l.b16 %v1928
  %v1947 = vpack.c.b16 %v1932, %v1931
  %v1948 = vpack.c.b16 %v1934, %v1933
  %v1949 = vpack.c.b16 %v1936, %v1935
  %v1950 = vpack.c.b16 %v1938, %v1937
  %v1951 = vpack.c.b16 %v1940, %v1939
  %v1952 = vpack.c.b16 %v1942, %v1941
  %v1953 = vpack.c.b16 %v1944, %v1943
  %v1954 = vpack.c.b16 %v1946, %v1945
  %v1956 = vsel %vm1096, %v1947, 0
  %v1959 = vsel %vm1096, %v1948, 0
  %v1962 = vsel %vm1096, %v1949, 0
  %v1965 = vsel %vm1096, %v1950, 0
  %v1968 = vsel %vm1096, %v1951, 0
  %v1971 = vsel %vm1096, %v1952, 0
  %v1974 = vsel %vm1096, %v1953, 0
  %v1977 = vsel %vm1096, %v1954, 0
  %v1980 = vsel %vm1121, %v1930, 0
  %1982 = vmatpush.bf16.msra.mxu0 0
  %1983 = vmatpush.bf16.msra.mxu0 0
  %1984 = vmatpush.bf16.msra.mxu0 0
  %1985 = vmatpush.bf16.msra.mxu0 0
  %1986 = vmatpush.bf16.msra.mxu0 0
  %1987 = vmatpush.bf16.msra.mxu0 0
  %1988 = vmatpush.bf16.msra.mxu0 0
  %1989 = vmatpush.bf16.msra.mxu0 %v1980
  %1990 = vmatmul.bf16.gmra.mxu0 %v1956
  %v1991 = vpop.f32.mrf.mxu0
  %v1992 = vadd.f32 0.0, %v1991
  %v1993 = vpop.f32.mrf.mxu0
  %v1994 = vadd.f32 0.0, %v1993
  %1995 = vmatmul.bf16.gmra.mxu0 %v1959
  %v1996 = vpop.f32.mrf.mxu0
  %v1997 = vadd.f32 0.0, %v1996
  %v1998 = vpop.f32.mrf.mxu0
  %v1999 = vadd.f32 0.0, %v1998
  %2000 = vmatmul.bf16.gmra.mxu0 %v1962
  %v2001 = vpop.f32.mrf.mxu0
  %v2002 = vadd.f32 0.0, %v2001
  %v2003 = vpop.f32.mrf.mxu0
  %v2004 = vadd.f32 0.0, %v2003
  %2005 = vmatmul.bf16.gmra.mxu0 %v1965
  %v2006 = vpop.f32.mrf.mxu0
  %v2007 = vadd.f32 0.0, %v2006
  %v2008 = vpop.f32.mrf.mxu0
  %v2009 = vadd.f32 0.0, %v2008
  %2010 = vmatmul.bf16.gmra.mxu0 %v1968
  %v2011 = vpop.f32.mrf.mxu0
  %v2012 = vadd.f32 0.0, %v2011
  %v2013 = vpop.f32.mrf.mxu0
  %v2014 = vadd.f32 0.0, %v2013
  %2015 = vmatmul.bf16.gmra.mxu0 %v1971
  %v2016 = vpop.f32.mrf.mxu0
  %v2017 = vadd.f32 0.0, %v2016
  %v2018 = vpop.f32.mrf.mxu0
  %v2019 = vadd.f32 0.0, %v2018
  %2020 = vmatmul.bf16.gmra.mxu0 %v1974
  %v2021 = vpop.f32.mrf.mxu0
  %v2022 = vadd.f32 0.0, %v2021
  %v2023 = vpop.f32.mrf.mxu0
  %v2024 = vadd.f32 0.0, %v2023
  %2025 = vmatmul.bf16.gmra.mxu0 %v1977
  %v2026 = vpop.f32.mrf.mxu0
  %v2027 = vadd.f32 0.0, %v2026
  %v2028 = vpop.f32.mrf.mxu0
  %v2029 = vadd.f32 0.0, %v2028
  %2030 = vdwg.mxu0
  %v2031 = vadd.f32 %v1657, %v1992
  %v2032 = vadd.f32 %v1658, %v1994
  %v2033 = vadd.f32 %v1659, %v1997
  %v2034 = vadd.f32 %v1660, %v1999
  %v2035 = vadd.f32 %v1661, %v2002
  %v2036 = vadd.f32 %v1662, %v2004
  %v2037 = vadd.f32 %v1663, %v2007
  %v2038 = vadd.f32 %v1664, %v2009
  %v2039 = vadd.f32 %v1665, %v2012
  %v2040 = vadd.f32 %v1666, %v2014
  %v2041 = vadd.f32 %v1667, %v2017
  %v2042 = vadd.f32 %v1668, %v2019
  %v2043 = vadd.f32 %v1669, %v2022
  %v2044 = vadd.f32 %v1670, %v2024
  %v2045 = vadd.f32 %v1671, %v2027
  %v2046 = vadd.f32 %v1672, %v2029
  %v2047 = vld [vmem:[%s711] sm:$0xe]
  %v2048 = vld [vmem:[%s711 + $0x8] sm:$0xe]
  %v2049 = vld [vmem:[%s711 + $0x10] sm:$0xe]
  %v2050 = vld [vmem:[%s711 + $0x18] sm:$0xe]
  %v2051 = vld [vmem:[%s711 + $0x20] sm:$0xe]
  %v2052 = vld [vmem:[%s711 + $0x28] sm:$0xe]
  %v2053 = vld [vmem:[%s711 + $0x30] sm:$0xe]
  %v2054 = vld [vmem:[%s711 + $0x38] sm:$0xe]
  %v2055 = vld [vmem:[%s711 + $0x50] sm:$0xe]
  %v2056 = vld [vmem:[%s711 + $0x58] sm:$0xe]
  %v2057 = vld [vmem:[%s711 + $0x60] sm:$0xe]
  %v2058 = vld [vmem:[%s711 + $0x68] sm:$0xe]
  %v2059 = vld [vmem:[%s711 + $0x70] sm:$0xe]
  %v2060 = vld [vmem:[%s711 + $0x78] sm:$0xe]
  %v2061 = vld [vmem:[%s711 + $0x80] sm:$0xe]
  %v2062 = vld [vmem:[%s711 + $0x88] sm:$0xe]
  %v2095 = vrot.slane %v2047, 5
  %v2096 = vrot.slane %v2095, 4
  %v2097 = vrot.slane %v1674, 5
  %v2098 = vsel %vm1340, %v2096, %v2097
  %v2099 = vrot.slane %v2048, 5
  %v2100 = vrot.slane %v2099, 4
  %v2101 = vrot.slane %v1676, 5
  %v2102 = vsel %vm1340, %v2100, %v2101
  %v2103 = vrot.slane %v2049, 5
  %v2104 = vrot.slane %v2103, 4
  %v2105 = vrot.slane %v1678, 5
  %v2106 = vsel %vm1340, %v2104, %v2105
  %v2107 = vrot.slane %v2050, 5
  %v2108 = vrot.slane %v2107, 4
  %v2109 = vrot.slane %v1680, 5
  %v2110 = vsel %vm1340, %v2108, %v2109
  %v2111 = vrot.slane %v2051, 5
  %v2112 = vrot.slane %v2111, 4
  %v2113 = vrot.slane %v1682, 5
  %v2114 = vsel %vm1340, %v2112, %v2113
  %v2115 = vrot.slane %v2052, 5
  %v2116 = vrot.slane %v2115, 4
  %v2117 = vrot.slane %v1684, 5
  %v2118 = vsel %vm1340, %v2116, %v2117
  %v2119 = vrot.slane %v2053, 5
  %v2120 = vrot.slane %v2119, 4
  %v2121 = vrot.slane %v1686, 5
  %v2122 = vsel %vm1340, %v2120, %v2121
  %v2123 = vrot.slane %v2054, 5
  %v2124 = vrot.slane %v2123, 4
  %v2125 = vrot.slane %v1688, 5
  %v2126 = vsel %vm1340, %v2124, %v2125
  %v2127 = vrot.slane %v2055, 5
  %v2128 = vrot.slane %v2127, 4
  %v2129 = vrot.slane %v1690, 5
  %v2130 = vsel %vm1340, %v2128, %v2129
  %v2131 = vrot.slane %v2056, 5
  %v2132 = vrot.slane %v2131, 4
  %v2133 = vrot.slane %v1692, 5
  %v2134 = vsel %vm1340, %v2132, %v2133
  %v2135 = vrot.slane %v2057, 5
  %v2136 = vrot.slane %v2135, 4
  %v2137 = vrot.slane %v1694, 5
  %v2138 = vsel %vm1340, %v2136, %v2137
  %v2139 = vrot.slane %v2058, 5
  %v2140 = vrot.slane %v2139, 4
  %v2141 = vrot.slane %v1696, 5
  %v2142 = vsel %vm1340, %v2140, %v2141
  %v2143 = vrot.slane %v2059, 5
  %v2144 = vrot.slane %v2143, 4
  %v2145 = vrot.slane %v1698, 5
  %v2146 = vsel %vm1340, %v2144, %v2145
  %v2147 = vrot.slane %v2060, 5
  %v2148 = vrot.slane %v2147, 4
  %v2149 = vrot.slane %v1700, 5
  %v2150 = vsel %vm1340, %v2148, %v2149
  %v2151 = vrot.slane %v2061, 5
  %v2152 = vrot.slane %v2151, 4
  %v2153 = vrot.slane %v1702, 5
  %v2154 = vsel %vm1340, %v2152, %v2153
  %v2155 = vrot.slane %v2062, 5
  %v2156 = vrot.slane %v2155, 4
  %v2157 = vrot.slane %v1704, 5
  %v2158 = vsel %vm1340, %v2156, %v2157
  %s2159 = scalar_lea.vmem %s1, 10
  %v2160 = vld [vmem:[%s2159] sm:$0x3]
  %v2161 = vunpack.c.l.b16 %v2098
  %v2162 = vunpack.c.l.b16 %v2102
  %v2163 = vunpack.c.l.b16 %v2106
  %v2164 = vunpack.c.l.b16 %v2110
  %v2165 = vunpack.c.l.b16 %v2114
  %v2166 = vunpack.c.l.b16 %v2118
  %v2167 = vunpack.c.l.b16 %v2122
  %v2168 = vunpack.c.l.b16 %v2126
  %v2169 = vunpack.c.l.b16 %v2130
  %v2170 = vunpack.c.l.b16 %v2134
  %v2171 = vunpack.c.l.b16 %v2138
  %v2172 = vunpack.c.l.b16 %v2142
  %v2173 = vunpack.c.l.b16 %v2146
  %v2174 = vunpack.c.l.b16 %v2150
  %v2175 = vunpack.c.l.b16 %v2154
  %v2176 = vunpack.c.l.b16 %v2158
  %v2177 = vpack.c.b16 %v2162, %v2161
  %v2178 = vpack.c.b16 %v2164, %v2163
  %v2179 = vpack.c.b16 %v2166, %v2165
  %v2180 = vpack.c.b16 %v2168, %v2167
  %v2181 = vpack.c.b16 %v2170, %v2169
  %v2182 = vpack.c.b16 %v2172, %v2171
  %v2183 = vpack.c.b16 %v2174, %v2173
  %v2184 = vpack.c.b16 %v2176, %v2175
  %v2186 = vsel %vm1096, %v2177, 0
  %v2189 = vsel %vm1096, %v2178, 0
  %v2192 = vsel %vm1096, %v2179, 0
  %v2195 = vsel %vm1096, %v2180, 0
  %v2198 = vsel %vm1096, %v2181, 0
  %v2201 = vsel %vm1096, %v2182, 0
  %v2204 = vsel %vm1096, %v2183, 0
  %v2207 = vsel %vm1096, %v2184, 0
  %v2210 = vsel %vm1121, %v2160, 0
  %2212 = vmatpush.bf16.msra.mxu0 0
  %2213 = vmatpush.bf16.msra.mxu0 0
  %2214 = vmatpush.bf16.msra.mxu0 0
  %2215 = vmatpush.bf16.msra.mxu0 0
  %2216 = vmatpush.bf16.msra.mxu0 0
  %2217 = vmatpush.bf16.msra.mxu0 0
  %2218 = vmatpush.bf16.msra.mxu0 0
  %2219 = vmatpush.bf16.msra.mxu0 %v2210
  %2220 = vmatmul.bf16.gmra.mxu0 %v2186
  %v2221 = vpop.f32.mrf.mxu0
  %v2222 = vadd.f32 0.0, %v2221
  %v2223 = vpop.f32.mrf.mxu0
  %v2224 = vadd.f32 0.0, %v2223
  %2225 = vmatmul.bf16.gmra.mxu0 %v2189
  %v2226 = vpop.f32.mrf.mxu0
  %v2227 = vadd.f32 0.0, %v2226
  %v2228 = vpop.f32.mrf.mxu0
  %v2229 = vadd.f32 0.0, %v2228
  %2230 = vmatmul.bf16.gmra.mxu0 %v2192
  %v2231 = vpop.f32.mrf.mxu0
  %v2232 = vadd.f32 0.0, %v2231
  %v2233 = vpop.f32.mrf.mxu0
  %v2234 = vadd.f32 0.0, %v2233
  %2235 = vmatmul.bf16.gmra.mxu0 %v2195
  %v2236 = vpop.f32.mrf.mxu0
  %v2237 = vadd.f32 0.0, %v2236
  %v2238 = vpop.f32.mrf.mxu0
  %v2239 = vadd.f32 0.0, %v2238
  %2240 = vmatmul.bf16.gmra.mxu0 %v2198
  %v2241 = vpop.f32.mrf.mxu0
  %v2242 = vadd.f32 0.0, %v2241
  %v2243 = vpop.f32.mrf.mxu0
  %v2244 = vadd.f32 0.0, %v2243
  %2245 = vmatmul.bf16.gmra.mxu0 %v2201
  %v2246 = vpop.f32.mrf.mxu0
  %v2247 = vadd.f32 0.0, %v2246
  %v2248 = vpop.f32.mrf.mxu0
  %v2249 = vadd.f32 0.0, %v2248
  %2250 = vmatmul.bf16.gmra.mxu0 %v2204
  %v2251 = vpop.f32.mrf.mxu0
  %v2252 = vadd.f32 0.0, %v2251
  %v2253 = vpop.f32.mrf.mxu0
  %v2254 = vadd.f32 0.0, %v2253
  %2255 = vmatmul.bf16.gmra.mxu0 %v2207
  %v2256 = vpop.f32.mrf.mxu0
  %v2257 = vadd.f32 0.0, %v2256
  %v2258 = vpop.f32.mrf.mxu0
  %v2259 = vadd.f32 0.0, %v2258
  %2260 = vdwg.mxu0
  %v2261 = vadd.f32 %v2031, %v2222
  %v2262 = vadd.f32 %v2032, %v2224
  %v2263 = vadd.f32 %v2033, %v2227
  %v2264 = vadd.f32 %v2034, %v2229
  %v2265 = vadd.f32 %v2035, %v2232
  %v2266 = vadd.f32 %v2036, %v2234
  %v2267 = vadd.f32 %v2037, %v2237
  %v2268 = vadd.f32 %v2038, %v2239
  %v2269 = vadd.f32 %v2039, %v2242
  %v2270 = vadd.f32 %v2040, %v2244
  %v2271 = vadd.f32 %v2041, %v2247
  %v2272 = vadd.f32 %v2042, %v2249
  %v2273 = vadd.f32 %v2043, %v2252
  %v2274 = vadd.f32 %v2044, %v2254
  %v2275 = vadd.f32 %v2045, %v2257
  %v2276 = vadd.f32 %v2046, %v2259
  %s2277 = scalar_lea.vmem [#allocation2], 16
  %v2278 = vld [vmem:[%s2277] sm:$0xf]
  %v2279 = vld [vmem:[%s2277 + $0x8] sm:$0xf]
  %v2280 = vld [vmem:[%s2277 + $0x10] sm:$0xf]
  %v2281 = vld [vmem:[%s2277 + $0x18] sm:$0xf]
  %v2282 = vld [vmem:[%s2277 + $0x20] sm:$0xf]
  %v2283 = vld [vmem:[%s2277 + $0x28] sm:$0xf]
  %v2284 = vld [vmem:[%s2277 + $0x30] sm:$0xf]
  %v2285 = vld [vmem:[%s2277 + $0x38] sm:$0xf]
  %v2286 = vld [vmem:[%s2277 + $0x50] sm:$0xf]
  %v2287 = vld [vmem:[%s2277 + $0x58] sm:$0xf]
  %v2288 = vld [vmem:[%s2277 + $0x60] sm:$0xf]
  %v2289 = vld [vmem:[%s2277 + $0x68] sm:$0xf]
  %v2290 = vld [vmem:[%s2277 + $0x70] sm:$0xf]
  %v2291 = vld [vmem:[%s2277 + $0x78] sm:$0xf]
  %v2292 = vld [vmem:[%s2277 + $0x80] sm:$0xf]
  %v2293 = vld [vmem:[%s2277 + $0x88] sm:$0xf]
  %s2294 = scalar_lea.vmem %s1, 12
  %v2295 = vld [vmem:[%s2294] sm:$0x3]
  %v2312 = vunpack.c.l.b16 %v2278
  %v2313 = vunpack.c.l.b16 %v2279
  %v2314 = vunpack.c.l.b16 %v2280
  %v2315 = vunpack.c.l.b16 %v2281
  %v2316 = vunpack.c.l.b16 %v2282
  %v2317 = vunpack.c.l.b16 %v2283
  %v2318 = vunpack.c.l.b16 %v2284
  %v2319 = vunpack.c.l.b16 %v2285
  %v2320 = vunpack.c.l.b16 %v2286
  %v2321 = vunpack.c.l.b16 %v2287
  %v2322 = vunpack.c.l.b16 %v2288
  %v2323 = vunpack.c.l.b16 %v2289
  %v2324 = vunpack.c.l.b16 %v2290
  %v2325 = vunpack.c.l.b16 %v2291
  %v2326 = vunpack.c.l.b16 %v2292
  %v2327 = vunpack.c.l.b16 %v2293
  %v2328 = vpack.c.b16 %v2313, %v2312
  %v2329 = vpack.c.b16 %v2315, %v2314
  %v2330 = vpack.c.b16 %v2317, %v2316
  %v2331 = vpack.c.b16 %v2319, %v2318
  %v2332 = vpack.c.b16 %v2321, %v2320
  %v2333 = vpack.c.b16 %v2323, %v2322
  %v2334 = vpack.c.b16 %v2325, %v2324
  %v2335 = vpack.c.b16 %v2327, %v2326
  %v2337 = vsel %vm1096, %v2328, 0
  %v2340 = vsel %vm1096, %v2329, 0
  %v2343 = vsel %vm1096, %v2330, 0
  %v2346 = vsel %vm1096, %v2331, 0
  %v2349 = vsel %vm1096, %v2332, 0
  %v2352 = vsel %vm1096, %v2333, 0
  %v2355 = vsel %vm1096, %v2334, 0
  %v2358 = vsel %vm1096, %v2335, 0
  %v2361 = vsel %vm1121, %v2295, 0
  %2363 = vmatpush.bf16.msra.mxu0 0
  %2364 = vmatpush.bf16.msra.mxu0 0
  %2365 = vmatpush.bf16.msra.mxu0 0
  %2366 = vmatpush.bf16.msra.mxu0 0
  %2367 = vmatpush.bf16.msra.mxu0 0
  %2368 = vmatpush.bf16.msra.mxu0 0
  %2369 = vmatpush.bf16.msra.mxu0 0
  %2370 = vmatpush.bf16.msra.mxu0 %v2361
  %2371 = vmatmul.bf16.gmra.mxu0 %v2337
  %v2372 = vpop.f32.mrf.mxu0
  %v2373 = vadd.f32 0.0, %v2372
  %v2374 = vpop.f32.mrf.mxu0
  %v2375 = vadd.f32 0.0, %v2374
  %2376 = vmatmul.bf16.gmra.mxu0 %v2340
  %v2377 = vpop.f32.mrf.mxu0
  %v2378 = vadd.f32 0.0, %v2377
  %v2379 = vpop.f32.mrf.mxu0
  %v2380 = vadd.f32 0.0, %v2379
  %2381 = vmatmul.bf16.gmra.mxu0 %v2343
  %v2382 = vpop.f32.mrf.mxu0
  %v2383 = vadd.f32 0.0, %v2382
  %v2384 = vpop.f32.mrf.mxu0
  %v2385 = vadd.f32 0.0, %v2384
  %2386 = vmatmul.bf16.gmra.mxu0 %v2346
  %v2387 = vpop.f32.mrf.mxu0
  %v2388 = vadd.f32 0.0, %v2387
  %v2389 = vpop.f32.mrf.mxu0
  %v2390 = vadd.f32 0.0, %v2389
  %2391 = vmatmul.bf16.gmra.mxu0 %v2349
  %v2392 = vpop.f32.mrf.mxu0
  %v2393 = vadd.f32 0.0, %v2392
  %v2394 = vpop.f32.mrf.mxu0
  %v2395 = vadd.f32 0.0, %v2394
  %2396 = vmatmul.bf16.gmra.mxu0 %v2352
  %v2397 = vpop.f32.mrf.mxu0
  %v2398 = vadd.f32 0.0, %v2397
  %v2399 = vpop.f32.mrf.mxu0
  %v2400 = vadd.f32 0.0, %v2399
  %2401 = vmatmul.bf16.gmra.mxu0 %v2355
  %v2402 = vpop.f32.mrf.mxu0
  %v2403 = vadd.f32 0.0, %v2402
  %v2404 = vpop.f32.mrf.mxu0
  %v2405 = vadd.f32 0.0, %v2404
  %2406 = vmatmul.bf16.gmra.mxu0 %v2358
  %v2407 = vpop.f32.mrf.mxu0
  %v2408 = vadd.f32 0.0, %v2407
  %v2409 = vpop.f32.mrf.mxu0
  %v2410 = vadd.f32 0.0, %v2409
  %2411 = vdwg.mxu0
  %v2412 = vadd.f32 %v2261, %v2373
  %v2413 = vadd.f32 %v2262, %v2375
  %v2414 = vadd.f32 %v2263, %v2378
  %v2415 = vadd.f32 %v2264, %v2380
  %v2416 = vadd.f32 %v2265, %v2383
  %v2417 = vadd.f32 %v2266, %v2385
  %v2418 = vadd.f32 %v2267, %v2388
  %v2419 = vadd.f32 %v2268, %v2390
  %v2420 = vadd.f32 %v2269, %v2393
  %v2421 = vadd.f32 %v2270, %v2395
  %v2422 = vadd.f32 %v2271, %v2398
  %v2423 = vadd.f32 %v2272, %v2400
  %v2424 = vadd.f32 %v2273, %v2403
  %v2425 = vadd.f32 %v2274, %v2405
  %v2426 = vadd.f32 %v2275, %v2408
  %v2427 = vadd.f32 %v2276, %v2410
  %v2428 = vld [vmem:[%s2277] sm:$0xf]
  %v2429 = vld [vmem:[%s2277 + $0x4] sm:$0x1]
  %v2430 = vld [vmem:[%s2277 + $0x8] sm:$0xf]
  %v2431 = vld [vmem:[%s2277 + $0xc] sm:$0x1]
  %v2432 = vld [vmem:[%s2277 + $0x10] sm:$0xf]
  %v2433 = vld [vmem:[%s2277 + $0x14] sm:$0x1]
  %v2434 = vld [vmem:[%s2277 + $0x18] sm:$0xf]
  %v2435 = vld [vmem:[%s2277 + $0x1c] sm:$0x1]
  %v2436 = vld [vmem:[%s2277 + $0x20] sm:$0xf]
  %v2437 = vld [vmem:[%s2277 + $0x24] sm:$0x1]
  %v2438 = vld [vmem:[%s2277 + $0x28] sm:$0xf]
  %v2439 = vld [vmem:[%s2277 + $0x2c] sm:$0x1]
  %v2440 = vld [vmem:[%s2277 + $0x30] sm:$0xf]
  %v2441 = vld [vmem:[%s2277 + $0x34] sm:$0x1]
  %v2442 = vld [vmem:[%s2277 + $0x38] sm:$0xf]
  %v2443 = vld [vmem:[%s2277 + $0x3c] sm:$0x1]
  %v2444 = vld [vmem:[%s2277 + $0x50] sm:$0xf]
  %v2445 = vld [vmem:[%s2277 + $0x54] sm:$0x1]
  %v2446 = vld [vmem:[%s2277 + $0x58] sm:$0xf]
  %v2447 = vld [vmem:[%s2277 + $0x5c] sm:$0x1]
  %v2448 = vld [vmem:[%s2277 + $0x60] sm:$0xf]
  %v2449 = vld [vmem:[%s2277 + $0x64] sm:$0x1]
  %v2450 = vld [vmem:[%s2277 + $0x68] sm:$0xf]
  %v2451 = vld [vmem:[%s2277 + $0x6c] sm:$0x1]
  %v2452 = vld [vmem:[%s2277 + $0x70] sm:$0xf]
  %v2453 = vld [vmem:[%s2277 + $0x74] sm:$0x1]
  %v2454 = vld [vmem:[%s2277 + $0x78] sm:$0xf]
  %v2455 = vld [vmem:[%s2277 + $0x7c] sm:$0x1]
  %v2456 = vld [vmem:[%s2277 + $0x80] sm:$0xf]
  %v2457 = vld [vmem:[%s2277 + $0x84] sm:$0x1]
  %v2458 = vld [vmem:[%s2277 + $0x88] sm:$0xf]
  %v2459 = vld [vmem:[%s2277 + $0x8c] sm:$0x1]
  %v2461 = vshrl.u32 %v2428, 16
  %v2463 = vrot.slane %v2461, 4
  %v2464 = vshll.u32 %v2428, 16
  %v2466 = vrot.slane %v2464, 5
  %v2467 = vor.u32 %v2463, %v2466
  %v2468 = vrot.slane %v2467, 4
  %v2470 = vshll.u32 %v2429, 16
  %v2472 = vrot.slane %v2470, 5
  %v2473 = vsel %vm845, %v2468, %v2472
  %v2475 = vshrl.u32 %v2430, 16
  %v2477 = vrot.slane %v2475, 4
  %v2478 = vshll.u32 %v2430, 16
  %v2480 = vrot.slane %v2478, 5
  %v2481 = vor.u32 %v2477, %v2480
  %v2482 = vrot.slane %v2481, 4
  %v2484 = vshll.u32 %v2431, 16
  %v2486 = vrot.slane %v2484, 5
  %v2487 = vsel %vm845, %v2482, %v2486
  %v2489 = vshrl.u32 %v2432, 16
  %v2491 = vrot.slane %v2489, 4
  %v2492 = vshll.u32 %v2432, 16
  %v2494 = vrot.slane %v2492, 5
  %v2495 = vor.u32 %v2491, %v2494
  %v2496 = vrot.slane %v2495, 4
  %v2498 = vshll.u32 %v2433, 16
  %v2500 = vrot.slane %v2498, 5
  %v2501 = vsel %vm845, %v2496, %v2500
  %v2503 = vshrl.u32 %v2434, 16
  %v2505 = vrot.slane %v2503, 4
  %v2506 = vshll.u32 %v2434, 16
  %v2508 = vrot.slane %v2506, 5
  %v2509 = vor.u32 %v2505, %v2508
  %v2510 = vrot.slane %v2509, 4
  %v2512 = vshll.u32 %v2435, 16
  %v2514 = vrot.slane %v2512, 5
  %v2515 = vsel %vm845, %v2510, %v2514
  %v2517 = vshrl.u32 %v2436, 16
  %v2519 = vrot.slane %v2517, 4
  %v2520 = vshll.u32 %v2436, 16
  %v2522 = vrot.slane %v2520, 5
  %v2523 = vor.u32 %v2519, %v2522
  %v2524 = vrot.slane %v2523, 4
  %v2526 = vshll.u32 %v2437, 16
  %v2528 = vrot.slane %v2526, 5
  %v2529 = vsel %vm845, %v2524, %v2528
  %v2531 = vshrl.u32 %v2438, 16
  %v2533 = vrot.slane %v2531, 4
  %v2534 = vshll.u32 %v2438, 16
  %v2536 = vrot.slane %v2534, 5
  %v2537 = vor.u32 %v2533, %v2536
  %v2538 = vrot.slane %v2537, 4
  %v2540 = vshll.u32 %v2439, 16
  %v2542 = vrot.slane %v2540, 5
  %v2543 = vsel %vm845, %v2538, %v2542
  %v2545 = vshrl.u32 %v2440, 16
  %v2547 = vrot.slane %v2545, 4
  %v2548 = vshll.u32 %v2440, 16
  %v2550 = vrot.slane %v2548, 5
  %v2551 = vor.u32 %v2547, %v2550
  %v2552 = vrot.slane %v2551, 4
  %v2554 = vshll.u32 %v2441, 16
  %v2556 = vrot.slane %v2554, 5
  %v2557 = vsel %vm845, %v2552, %v2556
  %v2559 = vshrl.u32 %v2442, 16
  %v2561 = vrot.slane %v2559, 4
  %v2562 = vshll.u32 %v2442, 16
  %v2564 = vrot.slane %v2562, 5
  %v2565 = vor.u32 %v2561, %v2564
  %v2566 = vrot.slane %v2565, 4
  %v2568 = vshll.u32 %v2443, 16
  %v2570 = vrot.slane %v2568, 5
  %v2571 = vsel %vm845, %v2566, %v2570
  %v2573 = vshrl.u32 %v2444, 16
  %v2575 = vrot.slane %v2573, 4
  %v2576 = vshll.u32 %v2444, 16
  %v2578 = vrot.slane %v2576, 5
  %v2579 = vor.u32 %v2575, %v2578
  %v2580 = vrot.slane %v2579, 4
  %v2582 = vshll.u32 %v2445, 16
  %v2584 = vrot.slane %v2582, 5
  %v2585 = vsel %vm845, %v2580, %v2584
  %v2587 = vshrl.u32 %v2446, 16
  %v2589 = vrot.slane %v2587, 4
  %v2590 = vshll.u32 %v2446, 16
  %v2592 = vrot.slane %v2590, 5
  %v2593 = vor.u32 %v2589, %v2592
  %v2594 = vrot.slane %v2593, 4
  %v2596 = vshll.u32 %v2447, 16
  %v2598 = vrot.slane %v2596, 5
  %v2599 = vsel %vm845, %v2594, %v2598
  %v2601 = vshrl.u32 %v2448, 16
  %v2603 = vrot.slane %v2601, 4
  %v2604 = vshll.u32 %v2448, 16
  %v2606 = vrot.slane %v2604, 5
  %v2607 = vor.u32 %v2603, %v2606
  %v2608 = vrot.slane %v2607, 4
  %v2610 = vshll.u32 %v2449, 16
  %v2612 = vrot.slane %v2610, 5
  %v2613 = vsel %vm845, %v2608, %v2612
  %v2615 = vshrl.u32 %v2450, 16
  %v2617 = vrot.slane %v2615, 4
  %v2618 = vshll.u32 %v2450, 16
  %v2620 = vrot.slane %v2618, 5
  %v2621 = vor.u32 %v2617, %v2620
  %v2622 = vrot.slane %v2621, 4
  %v2624 = vshll.u32 %v2451, 16
  %v2626 = vrot.slane %v2624, 5
  %v2627 = vsel %vm845, %v2622, %v2626
  %v2629 = vshrl.u32 %v2452, 16
  %v2631 = vrot.slane %v2629, 4
  %v2632 = vshll.u32 %v2452, 16
  %v2634 = vrot.slane %v2632, 5
  %v2635 = vor.u32 %v2631, %v2634
  %v2636 = vrot.slane %v2635, 4
  %v2638 = vshll.u32 %v2453, 16
  %v2640 = vrot.slane %v2638, 5
  %v2641 = vsel %vm845, %v2636, %v2640
  %v2643 = vshrl.u32 %v2454, 16
  %v2645 = vrot.slane %v2643, 4
  %v2646 = vshll.u32 %v2454, 16
  %v2648 = vrot.slane %v2646, 5
  %v2649 = vor.u32 %v2645, %v2648
  %v2650 = vrot.slane %v2649, 4
  %v2652 = vshll.u32 %v2455, 16
  %v2654 = vrot.slane %v2652, 5
  %v2655 = vsel %vm845, %v2650, %v2654
  %v2657 = vshrl.u32 %v2456, 16
  %v2659 = vrot.slane %v2657, 4
  %v2660 = vshll.u32 %v2456, 16
  %v2662 = vrot.slane %v2660, 5
  %v2663 = vor.u32 %v2659, %v2662
  %v2664 = vrot.slane %v2663, 4
  %v2666 = vshll.u32 %v2457, 16
  %v2668 = vrot.slane %v2666, 5
  %v2669 = vsel %vm845, %v2664, %v2668
  %v2671 = vshrl.u32 %v2458, 16
  %v2673 = vrot.slane %v2671, 4
  %v2674 = vshll.u32 %v2458, 16
  %v2676 = vrot.slane %v2674, 5
  %v2677 = vor.u32 %v2673, %v2676
  %v2678 = vrot.slane %v2677, 4
  %v2680 = vshll.u32 %v2459, 16
  %v2682 = vrot.slane %v2680, 5
  %v2683 = vsel %vm845, %v2678, %v2682
  %s2684 = scalar_lea.vmem %s1, 14
  %v2685 = vld [vmem:[%s2684] sm:$0x3]
  %v2686 = vunpack.c.l.b16 %v2473
  %v2687 = vunpack.c.l.b16 %v2487
  %v2688 = vunpack.c.l.b16 %v2501
  %v2689 = vunpack.c.l.b16 %v2515
  %v2690 = vunpack.c.l.b16 %v2529
  %v2691 = vunpack.c.l.b16 %v2543
  %v2692 = vunpack.c.l.b16 %v2557
  %v2693 = vunpack.c.l.b16 %v2571
  %v2694 = vunpack.c.l.b16 %v2585
  %v2695 = vunpack.c.l.b16 %v2599
  %v2696 = vunpack.c.l.b16 %v2613
  %v2697 = vunpack.c.l.b16 %v2627
  %v2698 = vunpack.c.l.b16 %v2641
  %v2699 = vunpack.c.l.b16 %v2655
  %v2700 = vunpack.c.l.b16 %v2669
  %v2701 = vunpack.c.l.b16 %v2683
  %v2702 = vpack.c.b16 %v2687, %v2686
  %v2703 = vpack.c.b16 %v2689, %v2688
  %v2704 = vpack.c.b16 %v2691, %v2690
  %v2705 = vpack.c.b16 %v2693, %v2692
  %v2706 = vpack.c.b16 %v2695, %v2694
  %v2707 = vpack.c.b16 %v2697, %v2696
  %v2708 = vpack.c.b16 %v2699, %v2698
  %v2709 = vpack.c.b16 %v2701, %v2700
  %v2711 = vsel %vm1096, %v2702, 0
  %v2714 = vsel %vm1096, %v2703, 0
  %v2717 = vsel %vm1096, %v2704, 0
  %v2720 = vsel %vm1096, %v2705, 0
  %v2723 = vsel %vm1096, %v2706, 0
  %v2726 = vsel %vm1096, %v2707, 0
  %v2729 = vsel %vm1096, %v2708, 0
  %v2732 = vsel %vm1096, %v2709, 0
  %v2735 = vsel %vm1121, %v2685, 0
  %2737 = vmatpush.bf16.msra.mxu0 0
  %2738 = vmatpush.bf16.msra.mxu0 0
  %2739 = vmatpush.bf16.msra.mxu0 0
  %2740 = vmatpush.bf16.msra.mxu0 0
  %2741 = vmatpush.bf16.msra.mxu0 0
  %2742 = vmatpush.bf16.msra.mxu0 0
  %2743 = vmatpush.bf16.msra.mxu0 0
  %2744 = vmatpush.bf16.msra.mxu0 %v2735
  %2745 = vmatmul.bf16.gmra.mxu0 %v2711
  %v2746 = vpop.f32.mrf.mxu0
  %v2747 = vadd.f32 0.0, %v2746
  %v2748 = vpop.f32.mrf.mxu0
  %v2749 = vadd.f32 0.0, %v2748
  %2750 = vmatmul.bf16.gmra.mxu0 %v2714
  %v2751 = vpop.f32.mrf.mxu0
  %v2752 = vadd.f32 0.0, %v2751
  %v2753 = vpop.f32.mrf.mxu0
  %v2754 = vadd.f32 0.0, %v2753
  %2755 = vmatmul.bf16.gmra.mxu0 %v2717
  %v2756 = vpop.f32.mrf.mxu0
  %v2757 = vadd.f32 0.0, %v2756
  %v2758 = vpop.f32.mrf.mxu0
  %v2759 = vadd.f32 0.0, %v2758
  %2760 = vmatmul.bf16.gmra.mxu0 %v2720
  %v2761 = vpop.f32.mrf.mxu0
  %v2762 = vadd.f32 0.0, %v2761
  %v2763 = vpop.f32.mrf.mxu0
  %v2764 = vadd.f32 0.0, %v2763
  %2765 = vmatmul.bf16.gmra.mxu0 %v2723
  %v2766 = vpop.f32.mrf.mxu0
  %v2767 = vadd.f32 0.0, %v2766
  %v2768 = vpop.f32.mrf.mxu0
  %v2769 = vadd.f32 0.0, %v2768
  %2770 = vmatmul.bf16.gmra.mxu0 %v2726
  %v2771 = vpop.f32.mrf.mxu0
  %v2772 = vadd.f32 0.0, %v2771
  %v2773 = vpop.f32.mrf.mxu0
  %v2774 = vadd.f32 0.0, %v2773
  %2775 = vmatmul.bf16.gmra.mxu0 %v2729
  %v2776 = vpop.f32.mrf.mxu0
  %v2777 = vadd.f32 0.0, %v2776
  %v2778 = vpop.f32.mrf.mxu0
  %v2779 = vadd.f32 0.0, %v2778
  %2780 = vmatmul.bf16.gmra.mxu0 %v2732
  %v2781 = vpop.f32.mrf.mxu0
  %v2782 = vadd.f32 0.0, %v2781
  %v2783 = vpop.f32.mrf.mxu0
  %v2784 = vadd.f32 0.0, %v2783
  %2785 = vdwg.mxu0
  %v2786 = vadd.f32 %v2412, %v2747
  %v2787 = vadd.f32 %v2413, %v2749
  %v2788 = vadd.f32 %v2414, %v2752
  %v2789 = vadd.f32 %v2415, %v2754
  %v2790 = vadd.f32 %v2416, %v2757
  %v2791 = vadd.f32 %v2417, %v2759
  %v2792 = vadd.f32 %v2418, %v2762
  %v2793 = vadd.f32 %v2419, %v2764
  %v2794 = vadd.f32 %v2420, %v2767
  %v2795 = vadd.f32 %v2421, %v2769
  %v2796 = vadd.f32 %v2422, %v2772
  %v2797 = vadd.f32 %v2423, %v2774
  %v2798 = vadd.f32 %v2424, %v2777
  %v2799 = vadd.f32 %v2425, %v2779
  %v2800 = vadd.f32 %v2426, %v2782
  %v2801 = vadd.f32 %v2427, %v2784
  %v2802 = vld [vmem:[%s2277] sm:$0xe]
  %v2803 = vld [vmem:[%s2277 + $0x8] sm:$0xe]
  %v2804 = vld [vmem:[%s2277 + $0x10] sm:$0xe]
  %v2805 = vld [vmem:[%s2277 + $0x18] sm:$0xe]
  %v2806 = vld [vmem:[%s2277 + $0x20] sm:$0xe]
  %v2807 = vld [vmem:[%s2277 + $0x28] sm:$0xe]
  %v2808 = vld [vmem:[%s2277 + $0x30] sm:$0xe]
  %v2809 = vld [vmem:[%s2277 + $0x38] sm:$0xe]
  %v2810 = vld [vmem:[%s2277 + $0x50] sm:$0xe]
  %v2811 = vld [vmem:[%s2277 + $0x58] sm:$0xe]
  %v2812 = vld [vmem:[%s2277 + $0x60] sm:$0xe]
  %v2813 = vld [vmem:[%s2277 + $0x68] sm:$0xe]
  %v2814 = vld [vmem:[%s2277 + $0x70] sm:$0xe]
  %v2815 = vld [vmem:[%s2277 + $0x78] sm:$0xe]
  %v2816 = vld [vmem:[%s2277 + $0x80] sm:$0xe]
  %v2817 = vld [vmem:[%s2277 + $0x88] sm:$0xe]
  %v2850 = vrot.slane %v2802, 5
  %v2851 = vrot.slane %v2850, 4
  %v2852 = vrot.slane %v2429, 5
  %v2853 = vsel %vm1340, %v2851, %v2852
  %v2854 = vrot.slane %v2803, 5
  %v2855 = vrot.slane %v2854, 4
  %v2856 = vrot.slane %v2431, 5
  %v2857 = vsel %vm1340, %v2855, %v2856
  %v2858 = vrot.slane %v2804, 5
  %v2859 = vrot.slane %v2858, 4
  %v2860 = vrot.slane %v2433, 5
  %v2861 = vsel %vm1340, %v2859, %v2860
  %v2862 = vrot.slane %v2805, 5
  %v2863 = vrot.slane %v2862, 4
  %v2864 = vrot.slane %v2435, 5
  %v2865 = vsel %vm1340, %v2863, %v2864
  %v2866 = vrot.slane %v2806, 5
  %v2867 = vrot.slane %v2866, 4
  %v2868 = vrot.slane %v2437, 5
  %v2869 = vsel %vm1340, %v2867, %v2868
  %v2870 = vrot.slane %v2807, 5
  %v2871 = vrot.slane %v2870, 4
  %v2872 = vrot.slane %v2439, 5
  %v2873 = vsel %vm1340, %v2871, %v2872
  %v2874 = vrot.slane %v2808, 5
  %v2875 = vrot.slane %v2874, 4
  %v2876 = vrot.slane %v2441, 5
  %v2877 = vsel %vm1340, %v2875, %v2876
  %v2878 = vrot.slane %v2809, 5
  %v2879 = vrot.slane %v2878, 4
  %v2880 = vrot.slane %v2443, 5
  %v2881 = vsel %vm1340, %v2879, %v2880
  %v2882 = vrot.slane %v2810, 5
  %v2883 = vrot.slane %v2882, 4
  %v2884 = vrot.slane %v2445, 5
  %v2885 = vsel %vm1340, %v2883, %v2884
  %v2886 = vrot.slane %v2811, 5
  %v2887 = vrot.slane %v2886, 4
  %v2888 = vrot.slane %v2447, 5
  %v2889 = vsel %vm1340, %v2887, %v2888
  %v2890 = vrot.slane %v2812, 5
  %v2891 = vrot.slane %v2890, 4
  %v2892 = vrot.slane %v2449, 5
  %v2893 = vsel %vm1340, %v2891, %v2892
  %v2894 = vrot.slane %v2813, 5
  %v2895 = vrot.slane %v2894, 4
  %v2896 = vrot.slane %v2451, 5
  %v2897 = vsel %vm1340, %v2895, %v2896
  %v2898 = vrot.slane %v2814, 5
  %v2899 = vrot.slane %v2898, 4
  %v2900 = vrot.slane %v2453, 5
  %v2901 = vsel %vm1340, %v2899, %v2900
  %v2902 = vrot.slane %v2815, 5
  %v2903 = vrot.slane %v2902, 4
  %v2904 = vrot.slane %v2455, 5
  %v2905 = vsel %vm1340, %v2903, %v2904
  %v2906 = vrot.slane %v2816, 5
  %v2907 = vrot.slane %v2906, 4
  %v2908 = vrot.slane %v2457, 5
  %v2909 = vsel %vm1340, %v2907, %v2908
  %v2910 = vrot.slane %v2817, 5
  %v2911 = vrot.slane %v2910, 4
  %v2912 = vrot.slane %v2459, 5
  %v2913 = vsel %vm1340, %v2911, %v2912
  %s2914 = scalar_lea.vmem %s1, 16
  %v2915 = vld [vmem:[%s2914] sm:$0x3]
  %v2916 = vunpack.c.l.b16 %v2853
  %v2917 = vunpack.c.l.b16 %v2857
  %v2918 = vunpack.c.l.b16 %v2861
  %v2919 = vunpack.c.l.b16 %v2865
  %v2920 = vunpack.c.l.b16 %v2869
  %v2921 = vunpack.c.l.b16 %v2873
  %v2922 = vunpack.c.l.b16 %v2877
  %v2923 = vunpack.c.l.b16 %v2881
  %v2924 = vunpack.c.l.b16 %v2885
  %v2925 = vunpack.c.l.b16 %v2889
  %v2926 = vunpack.c.l.b16 %v2893
  %v2927 = vunpack.c.l.b16 %v2897
  %v2928 = vunpack.c.l.b16 %v2901
  %v2929 = vunpack.c.l.b16 %v2905
  %v2930 = vunpack.c.l.b16 %v2909
  %v2931 = vunpack.c.l.b16 %v2913
  %v2932 = vpack.c.b16 %v2917, %v2916
  %v2933 = vpack.c.b16 %v2919, %v2918
  %v2934 = vpack.c.b16 %v2921, %v2920
  %v2935 = vpack.c.b16 %v2923, %v2922
  %v2936 = vpack.c.b16 %v2925, %v2924
  %v2937 = vpack.c.b16 %v2927, %v2926
  %v2938 = vpack.c.b16 %v2929, %v2928
  %v2939 = vpack.c.b16 %v2931, %v2930
  %v2941 = vsel %vm1096, %v2932, 0
  %v2944 = vsel %vm1096, %v2933, 0
  %v2947 = vsel %vm1096, %v2934, 0
  %v2950 = vsel %vm1096, %v2935, 0
  %v2953 = vsel %vm1096, %v2936, 0
  %v2956 = vsel %vm1096, %v2937, 0
  %v2959 = vsel %vm1096, %v2938, 0
  %v2962 = vsel %vm1096, %v2939, 0
  %v2965 = vsel %vm1121, %v2915, 0
  %2967 = vmatpush.bf16.msra.mxu0 0
  %2968 = vmatpush.bf16.msra.mxu0 0
  %2969 = vmatpush.bf16.msra.mxu0 0
  %2970 = vmatpush.bf16.msra.mxu0 0
  %2971 = vmatpush.bf16.msra.mxu0 0
  %2972 = vmatpush.bf16.msra.mxu0 0
  %2973 = vmatpush.bf16.msra.mxu0 0
  %2974 = vmatpush.bf16.msra.mxu0 %v2965
  %2975 = vmatmul.bf16.gmra.mxu0 %v2941
  %v2976 = vpop.f32.mrf.mxu0
  %v2977 = vadd.f32 0.0, %v2976
  %v2978 = vpop.f32.mrf.mxu0
  %v2979 = vadd.f32 0.0, %v2978
  %2980 = vmatmul.bf16.gmra.mxu0 %v2944
  %v2981 = vpop.f32.mrf.mxu0
  %v2982 = vadd.f32 0.0, %v2981
  %v2983 = vpop.f32.mrf.mxu0
  %v2984 = vadd.f32 0.0, %v2983
  %2985 = vmatmul.bf16.gmra.mxu0 %v2947
  %v2986 = vpop.f32.mrf.mxu0
  %v2987 = vadd.f32 0.0, %v2986
  %v2988 = vpop.f32.mrf.mxu0
  %v2989 = vadd.f32 0.0, %v2988
  %2990 = vmatmul.bf16.gmra.mxu0 %v2950
  %v2991 = vpop.f32.mrf.mxu0
  %v2992 = vadd.f32 0.0, %v2991
  %v2993 = vpop.f32.mrf.mxu0
  %v2994 = vadd.f32 0.0, %v2993
  %2995 = vmatmul.bf16.gmra.mxu0 %v2953
  %v2996 = vpop.f32.mrf.mxu0
  %v2997 = vadd.f32 0.0, %v2996
  %v2998 = vpop.f32.mrf.mxu0
  %v2999 = vadd.f32 0.0, %v2998
  %3000 = vmatmul.bf16.gmra.mxu0 %v2956
  %v3001 = vpop.f32.mrf.mxu0
  %v3002 = vadd.f32 0.0, %v3001
  %v3003 = vpop.f32.mrf.mxu0
  %v3004 = vadd.f32 0.0, %v3003
  %3005 = vmatmul.bf16.gmra.mxu0 %v2959
  %v3006 = vpop.f32.mrf.mxu0
  %v3007 = vadd.f32 0.0, %v3006
  %v3008 = vpop.f32.mrf.mxu0
  %v3009 = vadd.f32 0.0, %v3008
  %3010 = vmatmul.bf16.gmra.mxu0 %v2962
  %v3011 = vpop.f32.mrf.mxu0
  %v3012 = vadd.f32 0.0, %v3011
  %v3013 = vpop.f32.mrf.mxu0
  %v3014 = vadd.f32 0.0, %v3013
  %3015 = vdwg.mxu0
  %v3016 = vadd.f32 %v2786, %v2977
  %v3017 = vadd.f32 %v2787, %v2979
  %v3018 = vadd.f32 %v2788, %v2982
  %v3019 = vadd.f32 %v2789, %v2984
  %v3020 = vadd.f32 %v2790, %v2987
  %v3021 = vadd.f32 %v2791, %v2989
  %v3022 = vadd.f32 %v2792, %v2992
  %v3023 = vadd.f32 %v2793, %v2994
  %v3024 = vadd.f32 %v2794, %v2997
  %v3025 = vadd.f32 %v2795, %v2999
  %v3026 = vadd.f32 %v2796, %v3002
  %v3027 = vadd.f32 %v2797, %v3004
  %v3028 = vadd.f32 %v2798, %v3007
  %v3029 = vadd.f32 %v2799, %v3009
  %v3030 = vadd.f32 %v2800, %v3012
  %v3031 = vadd.f32 %v2801, %v3014
  %v3032 = vld [vmem:[%s2] sm:$0x1]
  %v3034 = vperm.slane %v3032, 0
  %v3036 = vmul.f32 %v3016, %v3034
  %v3037 = vmul.f32 %v3017, %v3034
  %v3038 = vmul.f32 %v3018, %v3034
  %v3039 = vmul.f32 %v3019, %v3034
  %v3040 = vmul.f32 %v3020, %v3034
  %v3041 = vmul.f32 %v3021, %v3034
  %v3042 = vmul.f32 %v3022, %v3034
  %v3043 = vmul.f32 %v3023, %v3034
  %v3044 = vmul.f32 %v3024, %v3034
  %v3045 = vmul.f32 %v3025, %v3034
  %v3046 = vmul.f32 %v3026, %v3034
  %v3047 = vmul.f32 %v3027, %v3034
  %v3048 = vmul.f32 %v3028, %v3034
  %v3049 = vmul.f32 %v3029, %v3034
  %v3050 = vmul.f32 %v3030, %v3034
  %v3051 = vmul.f32 %v3031, %v3034
  %v3052 = vld [vmem:[%s3] sm:$0x1]
  %v3054 = vperm.slane %v3052, 0
  %v3056 = vadd.f32 %v3036, %v3054
  %v3057 = vadd.f32 %v3037, %v3054
  %v3058 = vadd.f32 %v3038, %v3054
  %v3059 = vadd.f32 %v3039, %v3054
  %v3060 = vadd.f32 %v3040, %v3054
  %v3061 = vadd.f32 %v3041, %v3054
  %v3062 = vadd.f32 %v3042, %v3054
  %v3063 = vadd.f32 %v3043, %v3054
  %v3064 = vadd.f32 %v3044, %v3054
  %v3065 = vadd.f32 %v3045, %v3054
  %v3066 = vadd.f32 %v3046, %v3054
  %v3067 = vadd.f32 %v3047, %v3054
  %v3068 = vadd.f32 %v3048, %v3054
  %v3069 = vadd.f32 %v3049, %v3054
  %v3070 = vadd.f32 %v3050, %v3054
  %v3071 = vadd.f32 %v3051, %v3054
  %v3072 = vmax.f32 %v3056, 0.0
  %v3073 = vmax.f32 %v3057, 0.0
  %v3074 = vmax.f32 %v3058, 0.0
  %v3075 = vmax.f32 %v3059, 0.0
  %v3076 = vmax.f32 %v3060, 0.0
  %v3077 = vmax.f32 %v3061, 0.0
  %v3078 = vmax.f32 %v3062, 0.0
  %v3079 = vmax.f32 %v3063, 0.0
  %v3080 = vmax.f32 %v3064, 0.0
  %v3081 = vmax.f32 %v3065, 0.0
  %v3082 = vmax.f32 %v3066, 0.0
  %v3083 = vmax.f32 %v3067, 0.0
  %v3084 = vmax.f32 %v3068, 0.0
  %v3085 = vmax.f32 %v3069, 0.0
  %v3086 = vmax.f32 %v3070, 0.0
  %v3087 = vmax.f32 %v3071, 0.0
  %v3088 = vpack.c.bf16 %v3072, %v3072
  %v3089 = vpack.c.bf16 %v3073, %v3073
  %v3090 = vpack.c.bf16 %v3074, %v3074
  %v3091 = vpack.c.bf16 %v3075, %v3075
  %v3092 = vpack.c.bf16 %v3076, %v3076
  %v3093 = vpack.c.bf16 %v3077, %v3077
  %v3094 = vpack.c.bf16 %v3078, %v3078
  %v3095 = vpack.c.bf16 %v3079, %v3079
  %v3096 = vpack.c.bf16 %v3080, %v3080
  %v3097 = vpack.c.bf16 %v3081, %v3081
  %v3098 = vpack.c.bf16 %v3082, %v3082
  %v3099 = vpack.c.bf16 %v3083, %v3083
  %v3100 = vpack.c.bf16 %v3084, %v3084
  %v3101 = vpack.c.bf16 %v3085, %v3085
  %v3102 = vpack.c.bf16 %v3086, %v3086
  %v3103 = vpack.c.bf16 %v3087, %v3087
  %v3105 = vshrl.u32 %v3088, 16
  %v3107 = vrot.slane %v3105, 7
  %v3108 = vshll.u32 %v3088, 16
  %v3110 = vor.u32 %v3107, %v3108
  %v3111 = vrot.slane %v3107, 4
  %v3113 = vshrl.u32 %v3089, 16
  %v3115 = vrot.slane %v3113, 7
  %v3116 = vshll.u32 %v3089, 16
  %v3118 = vor.u32 %v3115, %v3116
  %v3119 = vrot.slane %v3115, 4
  %v3121 = vshrl.u32 %v3090, 16
  %v3123 = vrot.slane %v3121, 7
  %v3124 = vshll.u32 %v3090, 16
  %v3126 = vor.u32 %v3123, %v3124
  %v3127 = vrot.slane %v3123, 4
  %v3129 = vshrl.u32 %v3091, 16
  %v3131 = vrot.slane %v3129, 7
  %v3132 = vshll.u32 %v3091, 16
  %v3134 = vor.u32 %v3131, %v3132
  %v3135 = vrot.slane %v3131, 4
  %v3137 = vshrl.u32 %v3092, 16
  %v3139 = vrot.slane %v3137, 7
  %v3140 = vshll.u32 %v3092, 16
  %v3142 = vor.u32 %v3139, %v3140
  %v3143 = vrot.slane %v3139, 4
  %v3145 = vshrl.u32 %v3093, 16
  %v3147 = vrot.slane %v3145, 7
  %v3148 = vshll.u32 %v3093, 16
  %v3150 = vor.u32 %v3147, %v3148
  %v3151 = vrot.slane %v3147, 4
  %v3153 = vshrl.u32 %v3094, 16
  %v3155 = vrot.slane %v3153, 7
  %v3156 = vshll.u32 %v3094, 16
  %v3158 = vor.u32 %v3155, %v3156
  %v3159 = vrot.slane %v3155, 4
  %v3161 = vshrl.u32 %v3095, 16
  %v3163 = vrot.slane %v3161, 7
  %v3164 = vshll.u32 %v3095, 16
  %v3166 = vor.u32 %v3163, %v3164
  %v3167 = vrot.slane %v3163, 4
  %v3169 = vshrl.u32 %v3096, 16
  %v3171 = vrot.slane %v3169, 7
  %v3172 = vshll.u32 %v3096, 16
  %v3174 = vor.u32 %v3171, %v3172
  %v3175 = vrot.slane %v3171, 4
  %v3177 = vshrl.u32 %v3097, 16
  %v3179 = vrot.slane %v3177, 7
  %v3180 = vshll.u32 %v3097, 16
  %v3182 = vor.u32 %v3179, %v3180
  %v3183 = vrot.slane %v3179, 4
  %v3185 = vshrl.u32 %v3098, 16
  %v3187 = vrot.slane %v3185, 7
  %v3188 = vshll.u32 %v3098, 16
  %v3190 = vor.u32 %v3187, %v3188
  %v3191 = vrot.slane %v3187, 4
  %v3193 = vshrl.u32 %v3099, 16
  %v3195 = vrot.slane %v3193, 7
  %v3196 = vshll.u32 %v3099, 16
  %v3198 = vor.u32 %v3195, %v3196
  %v3199 = vrot.slane %v3195, 4
  %v3201 = vshrl.u32 %v3100, 16
  %v3203 = vrot.slane %v3201, 7
  %v3204 = vshll.u32 %v3100, 16
  %v3206 = vor.u32 %v3203, %v3204
  %v3207 = vrot.slane %v3203, 4
  %v3209 = vshrl.u32 %v3101, 16
  %v3211 = vrot.slane %v3209, 7
  %v3212 = vshll.u32 %v3101, 16
  %v3214 = vor.u32 %v3211, %v3212
  %v3215 = vrot.slane %v3211, 4
  %v3217 = vshrl.u32 %v3102, 16
  %v3219 = vrot.slane %v3217, 7
  %v3220 = vshll.u32 %v3102, 16
  %v3222 = vor.u32 %v3219, %v3220
  %v3223 = vrot.slane %v3219, 4
  %v3225 = vshrl.u32 %v3103, 16
  %v3227 = vrot.slane %v3225, 7
  %v3228 = vshll.u32 %v3103, 16
  %v3230 = vor.u32 %v3227, %v3228
  %v3231 = vrot.slane %v3227, 4
  %s3264 = scalar_lea.vmem [#allocation3], 8
  %v3265 = vld [vmem:[%s3264] sm:$0xf]
  %v3266 = vsel %vm713, %v3110, %v3265
  %3267 = vst [vmem:[%s3264] sm:$0xf] %v3266
  %v3268 = vld [vmem:[%s3264 + $0x4] sm:$0x1]
  %v3269 = vsel %vm40, %v3111, %v3268
  %3270 = vst [vmem:[%s3264 + $0x4] sm:$0x1] %v3269
  %v3271 = vld [vmem:[%s3264 + $0x8] sm:$0xf]
  %v3272 = vsel %vm713, %v3118, %v3271
  %3273 = vst [vmem:[%s3264 + $0x8] sm:$0xf] %v3272
  %v3274 = vld [vmem:[%s3264 + $0xc] sm:$0x1]
  %v3275 = vsel %vm40, %v3119, %v3274
  %3276 = vst [vmem:[%s3264 + $0xc] sm:$0x1] %v3275
  %v3277 = vld [vmem:[%s3264 + $0x10] sm:$0xf]
  %v3278 = vsel %vm713, %v3126, %v3277
  %3279 = vst [vmem:[%s3264 + $0x10] sm:$0xf] %v3278
  %v3280 = vld [vmem:[%s3264 + $0x14] sm:$0x1]
  %v3281 = vsel %vm40, %v3127, %v3280
  %3282 = vst [vmem:[%s3264 + $0x14] sm:$0x1] %v3281
  %v3283 = vld [vmem:[%s3264 + $0x18] sm:$0xf]
  %v3284 = vsel %vm713, %v3134, %v3283
  %3285 = vst [vmem:[%s3264 + $0x18] sm:$0xf] %v3284
  %v3286 = vld [vmem:[%s3264 + $0x1c] sm:$0x1]
  %v3287 = vsel %vm40, %v3135, %v3286
  %3288 = vst [vmem:[%s3264 + $0x1c] sm:$0x1] %v3287
  %v3289 = vld [vmem:[%s3264 + $0x20] sm:$0xf]
  %v3290 = vsel %vm713, %v3142, %v3289
  %3291 = vst [vmem:[%s3264 + $0x20] sm:$0xf] %v3290
  %v3292 = vld [vmem:[%s3264 + $0x24] sm:$0x1]
  %v3293 = vsel %vm40, %v3143, %v3292
  %3294 = vst [vmem:[%s3264 + $0x24] sm:$0x1] %v3293
  %v3295 = vld [vmem:[%s3264 + $0x28] sm:$0xf]
  %v3296 = vsel %vm713, %v3150, %v3295
  %3297 = vst [vmem:[%s3264 + $0x28] sm:$0xf] %v3296
  %v3298 = vld [vmem:[%s3264 + $0x2c] sm:$0x1]
  %v3299 = vsel %vm40, %v3151, %v3298
  %3300 = vst [vmem:[%s3264 + $0x2c] sm:$0x1] %v3299
  %v3301 = vld [vmem:[%s3264 + $0x30] sm:$0xf]
  %v3302 = vsel %vm713, %v3158, %v3301
  %3303 = vst [vmem:[%s3264 + $0x30] sm:$0xf] %v3302
  %v3304 = vld [vmem:[%s3264 + $0x34] sm:$0x1]
  %v3305 = vsel %vm40, %v3159, %v3304
  %3306 = vst [vmem:[%s3264 + $0x34] sm:$0x1] %v3305
  %v3307 = vld [vmem:[%s3264 + $0x38] sm:$0xf]
  %v3308 = vsel %vm713, %v3166, %v3307
  %3309 = vst [vmem:[%s3264 + $0x38] sm:$0xf] %v3308
  %v3310 = vld [vmem:[%s3264 + $0x3c] sm:$0x1]
  %v3311 = vsel %vm40, %v3167, %v3310
  %3312 = vst [vmem:[%s3264 + $0x3c] sm:$0x1] %v3311
  %v3313 = vld [vmem:[%s3264 + $0x50] sm:$0xf]
  %v3314 = vsel %vm713, %v3174, %v3313
  %3315 = vst [vmem:[%s3264 + $0x50] sm:$0xf] %v3314
  %v3316 = vld [vmem:[%s3264 + $0x54] sm:$0x1]
  %v3317 = vsel %vm40, %v3175, %v3316
  %3318 = vst [vmem:[%s3264 + $0x54] sm:$0x1] %v3317
  %v3319 = vld [vmem:[%s3264 + $0x58] sm:$0xf]
  %v3320 = vsel %vm713, %v3182, %v3319
  %3321 = vst [vmem:[%s3264 + $0x58] sm:$0xf] %v3320
  %v3322 = vld [vmem:[%s3264 + $0x5c] sm:$0x1]
  %v3323 = vsel %vm40, %v3183, %v3322
  %3324 = vst [vmem:[%s3264 + $0x5c] sm:$0x1] %v3323
  %v3325 = vld [vmem:[%s3264 + $0x60] sm:$0xf]
  %v3326 = vsel %vm713, %v3190, %v3325
  %3327 = vst [vmem:[%s3264 + $0x60] sm:$0xf] %v3326
  %v3328 = vld [vmem:[%s3264 + $0x64] sm:$0x1]
  %v3329 = vsel %vm40, %v3191, %v3328
  %3330 = vst [vmem:[%s3264 + $0x64] sm:$0x1] %v3329
  %v3331 = vld [vmem:[%s3264 + $0x68] sm:$0xf]
  %v3332 = vsel %vm713, %v3198, %v3331
  %3333 = vst [vmem:[%s3264 + $0x68] sm:$0xf] %v3332
  %v3334 = vld [vmem:[%s3264 + $0x6c] sm:$0x1]
  %v3335 = vsel %vm40, %v3199, %v3334
  %3336 = vst [vmem:[%s3264 + $0x6c] sm:$0x1] %v3335
  %v3337 = vld [vmem:[%s3264 + $0x70] sm:$0xf]
  %v3338 = vsel %vm713, %v3206, %v3337
  %3339 = vst [vmem:[%s3264 + $0x70] sm:$0xf] %v3338
  %v3340 = vld [vmem:[%s3264 + $0x74] sm:$0x1]
  %v3341 = vsel %vm40, %v3207, %v3340
  %3342 = vst [vmem:[%s3264 + $0x74] sm:$0x1] %v3341
  %v3343 = vld [vmem:[%s3264 + $0x78] sm:$0xf]
  %v3344 = vsel %vm713, %v3214, %v3343
  %3345 = vst [vmem:[%s3264 + $0x78] sm:$0xf] %v3344
  %v3346 = vld [vmem:[%s3264 + $0x7c] sm:$0x1]
  %v3347 = vsel %vm40, %v3215, %v3346
  %3348 = vst [vmem:[%s3264 + $0x7c] sm:$0x1] %v3347
  %v3349 = vld [vmem:[%s3264 + $0x80] sm:$0xf]
  %v3350 = vsel %vm713, %v3222, %v3349
  %3351 = vst [vmem:[%s3264 + $0x80] sm:$0xf] %v3350
  %v3352 = vld [vmem:[%s3264 + $0x84] sm:$0x1]
  %v3353 = vsel %vm40, %v3223, %v3352
  %3354 = vst [vmem:[%s3264 + $0x84] sm:$0x1] %v3353
  %v3355 = vld [vmem:[%s3264 + $0x88] sm:$0xf]
  %v3356 = vsel %vm713, %v3230, %v3355
  %3357 = vst [vmem:[%s3264 + $0x88] sm:$0xf] %v3356
  %v3358 = vld [vmem:[%s3264 + $0x8c] sm:$0x1]
  %v3359 = vsel %vm40, %v3231, %v3358
  %3360 = vst [vmem:[%s3264 + $0x8c] sm:$0x1] %v3359
  %v3361 = vld [vmem:[#allocation3] sm:$0xf]
  %v3362 = vld [vmem:[#allocation3 + $0x8] sm:$0xf]
  %v3363 = vld [vmem:[#allocation3 + $0x10] sm:$0xf]
  %v3364 = vld [vmem:[#allocation3 + $0x18] sm:$0xf]
  %v3365 = vld [vmem:[#allocation3 + $0x20] sm:$0xf]
  %v3366 = vld [vmem:[#allocation3 + $0x28] sm:$0xf]
  %v3367 = vld [vmem:[#allocation3 + $0x30] sm:$0xf]
  %v3368 = vld [vmem:[#allocation3 + $0x38] sm:$0xf]
  %v3369 = vld [vmem:[#allocation3 + $0x50] sm:$0xf]
  %v3370 = vld [vmem:[#allocation3 + $0x58] sm:$0xf]
  %v3371 = vld [vmem:[#allocation3 + $0x60] sm:$0xf]
  %v3372 = vld [vmem:[#allocation3 + $0x68] sm:$0xf]
  %v3373 = vld [vmem:[#allocation3 + $0x70] sm:$0xf]
  %v3374 = vld [vmem:[#allocation3 + $0x78] sm:$0xf]
  %v3375 = vld [vmem:[#allocation3 + $0x80] sm:$0xf]
  %v3376 = vld [vmem:[#allocation3 + $0x88] sm:$0xf]
  %v3377 = vld [vmem:[%s4] sm:$0x3]
  %v3378 = vld [vmem:[#allocation3 + $0x4] sm:$0x1]
  %v3379 = vld [vmem:[#allocation3 + $0xc] sm:$0x1]
  %v3380 = vld [vmem:[#allocation3 + $0x14] sm:$0x1]
  %v3381 = vld [vmem:[#allocation3 + $0x1c] sm:$0x1]
  %v3382 = vld [vmem:[#allocation3 + $0x24] sm:$0x1]
  %v3383 = vld [vmem:[#allocation3 + $0x2c] sm:$0x1]
  %v3384 = vld [vmem:[#allocation3 + $0x34] sm:$0x1]
  %v3385 = vld [vmem:[#allocation3 + $0x3c] sm:$0x1]
  %v3386 = vld [vmem:[#allocation3 + $0x54] sm:$0x1]
  %v3387 = vld [vmem:[#allocation3 + $0x5c] sm:$0x1]
  %v3388 = vld [vmem:[#allocation3 + $0x64] sm:$0x1]
  %v3389 = vld [vmem:[#allocation3 + $0x6c] sm:$0x1]
  %v3390 = vld [vmem:[#allocation3 + $0x74] sm:$0x1]
  %v3391 = vld [vmem:[#allocation3 + $0x7c] sm:$0x1]
  %v3392 = vld [vmem:[#allocation3 + $0x84] sm:$0x1]
  %v3393 = vld [vmem:[#allocation3 + $0x8c] sm:$0x1]
  %v3395 = vshrl.u32 %v3361, 16
  %v3397 = vrot.slane %v3395, 4
  %v3398 = vshll.u32 %v3361, 16
  %v3400 = vrot.slane %v3398, 5
  %v3401 = vor.u32 %v3397, %v3400
  %v3402 = vrot.slane %v3401, 4
  %v3404 = vshll.u32 %v3378, 16
  %v3406 = vrot.slane %v3404, 5
  %v3407 = vsel %vm845, %v3402, %v3406
  %v3409 = vshrl.u32 %v3362, 16
  %v3411 = vrot.slane %v3409, 4
  %v3412 = vshll.u32 %v3362, 16
  %v3414 = vrot.slane %v3412, 5
  %v3415 = vor.u32 %v3411, %v3414
  %v3416 = vrot.slane %v3415, 4
  %v3418 = vshll.u32 %v3379, 16
  %v3420 = vrot.slane %v3418, 5
  %v3421 = vsel %vm845, %v3416, %v3420
  %v3423 = vshrl.u32 %v3363, 16
  %v3425 = vrot.slane %v3423, 4
  %v3426 = vshll.u32 %v3363, 16
  %v3428 = vrot.slane %v3426, 5
  %v3429 = vor.u32 %v3425, %v3428
  %v3430 = vrot.slane %v3429, 4
  %v3432 = vshll.u32 %v3380, 16
  %v3434 = vrot.slane %v3432, 5
  %v3435 = vsel %vm845, %v3430, %v3434
  %v3437 = vshrl.u32 %v3364, 16
  %v3439 = vrot.slane %v3437, 4
  %v3440 = vshll.u32 %v3364, 16
  %v3442 = vrot.slane %v3440, 5
  %v3443 = vor.u32 %v3439, %v3442
  %v3444 = vrot.slane %v3443, 4
  %v3446 = vshll.u32 %v3381, 16
  %v3448 = vrot.slane %v3446, 5
  %v3449 = vsel %vm845, %v3444, %v3448
  %v3451 = vshrl.u32 %v3365, 16
  %v3453 = vrot.slane %v3451, 4
  %v3454 = vshll.u32 %v3365, 16
  %v3456 = vrot.slane %v3454, 5
  %v3457 = vor.u32 %v3453, %v3456
  %v3458 = vrot.slane %v3457, 4
  %v3460 = vshll.u32 %v3382, 16
  %v3462 = vrot.slane %v3460, 5
  %v3463 = vsel %vm845, %v3458, %v3462
  %v3465 = vshrl.u32 %v3366, 16
  %v3467 = vrot.slane %v3465, 4
  %v3468 = vshll.u32 %v3366, 16
  %v3470 = vrot.slane %v3468, 5
  %v3471 = vor.u32 %v3467, %v3470
  %v3472 = vrot.slane %v3471, 4
  %v3474 = vshll.u32 %v3383, 16
  %v3476 = vrot.slane %v3474, 5
  %v3477 = vsel %vm845, %v3472, %v3476
  %v3479 = vshrl.u32 %v3367, 16
  %v3481 = vrot.slane %v3479, 4
  %v3482 = vshll.u32 %v3367, 16
  %v3484 = vrot.slane %v3482, 5
  %v3485 = vor.u32 %v3481, %v3484
  %v3486 = vrot.slane %v3485, 4
  %v3488 = vshll.u32 %v3384, 16
  %v3490 = vrot.slane %v3488, 5
  %v3491 = vsel %vm845, %v3486, %v3490
  %v3493 = vshrl.u32 %v3368, 16
  %v3495 = vrot.slane %v3493, 4
  %v3496 = vshll.u32 %v3368, 16
  %v3498 = vrot.slane %v3496, 5
  %v3499 = vor.u32 %v3495, %v3498
  %v3500 = vrot.slane %v3499, 4
  %v3502 = vshll.u32 %v3385, 16
  %v3504 = vrot.slane %v3502, 5
  %v3505 = vsel %vm845, %v3500, %v3504
  %v3507 = vshrl.u32 %v3369, 16
  %v3509 = vrot.slane %v3507, 4
  %v3510 = vshll.u32 %v3369, 16
  %v3512 = vrot.slane %v3510, 5
  %v3513 = vor.u32 %v3509, %v3512
  %v3514 = vrot.slane %v3513, 4
  %v3516 = vshll.u32 %v3386, 16
  %v3518 = vrot.slane %v3516, 5
  %v3519 = vsel %vm845, %v3514, %v3518
  %v3521 = vshrl.u32 %v3370, 16
  %v3523 = vrot.slane %v3521, 4
  %v3524 = vshll.u32 %v3370, 16
  %v3526 = vrot.slane %v3524, 5
  %v3527 = vor.u32 %v3523, %v3526
  %v3528 = vrot.slane %v3527, 4
  %v3530 = vshll.u32 %v3387, 16
  %v3532 = vrot.slane %v3530, 5
  %v3533 = vsel %vm845, %v3528, %v3532
  %v3535 = vshrl.u32 %v3371, 16
  %v3537 = vrot.slane %v3535, 4
  %v3538 = vshll.u32 %v3371, 16
  %v3540 = vrot.slane %v3538, 5
  %v3541 = vor.u32 %v3537, %v3540
  %v3542 = vrot.slane %v3541, 4
  %v3544 = vshll.u32 %v3388, 16
  %v3546 = vrot.slane %v3544, 5
  %v3547 = vsel %vm845, %v3542, %v3546
  %v3549 = vshrl.u32 %v3372, 16
  %v3551 = vrot.slane %v3549, 4
  %v3552 = vshll.u32 %v3372, 16
  %v3554 = vrot.slane %v3552, 5
  %v3555 = vor.u32 %v3551, %v3554
  %v3556 = vrot.slane %v3555, 4
  %v3558 = vshll.u32 %v3389, 16
  %v3560 = vrot.slane %v3558, 5
  %v3561 = vsel %vm845, %v3556, %v3560
  %v3563 = vshrl.u32 %v3373, 16
  %v3565 = vrot.slane %v3563, 4
  %v3566 = vshll.u32 %v3373, 16
  %v3568 = vrot.slane %v3566, 5
  %v3569 = vor.u32 %v3565, %v3568
  %v3570 = vrot.slane %v3569, 4
  %v3572 = vshll.u32 %v3390, 16
  %v3574 = vrot.slane %v3572, 5
  %v3575 = vsel %vm845, %v3570, %v3574
  %v3577 = vshrl.u32 %v3374, 16
  %v3579 = vrot.slane %v3577, 4
  %v3580 = vshll.u32 %v3374, 16
  %v3582 = vrot.slane %v3580, 5
  %v3583 = vor.u32 %v3579, %v3582
  %v3584 = vrot.slane %v3583, 4
  %v3586 = vshll.u32 %v3391, 16
  %v3588 = vrot.slane %v3586, 5
  %v3589 = vsel %vm845, %v3584, %v3588
  %v3591 = vshrl.u32 %v3375, 16
  %v3593 = vrot.slane %v3591, 4
  %v3594 = vshll.u32 %v3375, 16
  %v3596 = vrot.slane %v3594, 5
  %v3597 = vor.u32 %v3593, %v3596
  %v3598 = vrot.slane %v3597, 4
  %v3600 = vshll.u32 %v3392, 16
  %v3602 = vrot.slane %v3600, 5
  %v3603 = vsel %vm845, %v3598, %v3602
  %v3605 = vshrl.u32 %v3376, 16
  %v3607 = vrot.slane %v3605, 4
  %v3608 = vshll.u32 %v3376, 16
  %v3610 = vrot.slane %v3608, 5
  %v3611 = vor.u32 %v3607, %v3610
  %v3612 = vrot.slane %v3611, 4
  %v3614 = vshll.u32 %v3393, 16
  %v3616 = vrot.slane %v3614, 5
  %v3617 = vsel %vm845, %v3612, %v3616
  %s3618 = scalar_lea.vmem %s4, 2
  %v3619 = vld [vmem:[%s3618] sm:$0x3]
  %v3620 = vunpack.c.l.b16 %v3407
  %v3621 = vunpack.c.l.b16 %v3421
  %v3622 = vunpack.c.l.b16 %v3435
  %v3623 = vunpack.c.l.b16 %v3449
  %v3624 = vunpack.c.l.b16 %v3463
  %v3625 = vunpack.c.l.b16 %v3477
  %v3626 = vunpack.c.l.b16 %v3491
  %v3627 = vunpack.c.l.b16 %v3505
  %v3628 = vunpack.c.l.b16 %v3519
  %v3629 = vunpack.c.l.b16 %v3533
  %v3630 = vunpack.c.l.b16 %v3547
  %v3631 = vunpack.c.l.b16 %v3561
  %v3632 = vunpack.c.l.b16 %v3575
  %v3633 = vunpack.c.l.b16 %v3589
  %v3634 = vunpack.c.l.b16 %v3603
  %v3635 = vunpack.c.l.b16 %v3617
  %v3636 = vpack.c.b16 %v3621, %v3620
  %v3637 = vpack.c.b16 %v3623, %v3622
  %v3638 = vpack.c.b16 %v3625, %v3624
  %v3639 = vpack.c.b16 %v3627, %v3626
  %v3640 = vpack.c.b16 %v3629, %v3628
  %v3641 = vpack.c.b16 %v3631, %v3630
  %v3642 = vpack.c.b16 %v3633, %v3632
  %v3643 = vpack.c.b16 %v3635, %v3634
  %v3645 = vsel %vm1096, %v3636, 0
  %v3648 = vsel %vm1096, %v3637, 0
  %v3651 = vsel %vm1096, %v3638, 0
  %v3654 = vsel %vm1096, %v3639, 0
  %v3657 = vsel %vm1096, %v3640, 0
  %v3660 = vsel %vm1096, %v3641, 0
  %v3663 = vsel %vm1096, %v3642, 0
  %v3666 = vsel %vm1096, %v3643, 0
  %v3669 = vsel %vm1121, %v3619, 0
  %3671 = vmatpush.bf16.msra.mxu0 0
  %3672 = vmatpush.bf16.msra.mxu0 0
  %3673 = vmatpush.bf16.msra.mxu0 0
  %3674 = vmatpush.bf16.msra.mxu0 0
  %3675 = vmatpush.bf16.msra.mxu0 0
  %3676 = vmatpush.bf16.msra.mxu0 0
  %3677 = vmatpush.bf16.msra.mxu0 0
  %3678 = vmatpush.bf16.msra.mxu0 %v3669
  %3679 = vmatmul.bf16.gmra.mxu0 %v3645
  %v3680 = vpop.f32.mrf.mxu0
  %v3681 = vadd.f32 0.0, %v3680
  %v3682 = vpop.f32.mrf.mxu0
  %v3683 = vadd.f32 0.0, %v3682
  %3684 = vmatmul.bf16.gmra.mxu0 %v3648
  %v3685 = vpop.f32.mrf.mxu0
  %v3686 = vadd.f32 0.0, %v3685
  %v3687 = vpop.f32.mrf.mxu0
  %v3688 = vadd.f32 0.0, %v3687
  %3689 = vmatmul.bf16.gmra.mxu0 %v3651
  %v3690 = vpop.f32.mrf.mxu0
  %v3691 = vadd.f32 0.0, %v3690
  %v3692 = vpop.f32.mrf.mxu0
  %v3693 = vadd.f32 0.0, %v3692
  %3694 = vmatmul.bf16.gmra.mxu0 %v3654
  %v3695 = vpop.f32.mrf.mxu0
  %v3696 = vadd.f32 0.0, %v3695
  %v3697 = vpop.f32.mrf.mxu0
  %v3698 = vadd.f32 0.0, %v3697
  %3699 = vmatmul.bf16.gmra.mxu0 %v3657
  %v3700 = vpop.f32.mrf.mxu0
  %v3701 = vadd.f32 0.0, %v3700
  %v3702 = vpop.f32.mrf.mxu0
  %v3703 = vadd.f32 0.0, %v3702
  %3704 = vmatmul.bf16.gmra.mxu0 %v3660
  %v3705 = vpop.f32.mrf.mxu0
  %v3706 = vadd.f32 0.0, %v3705
  %v3707 = vpop.f32.mrf.mxu0
  %v3708 = vadd.f32 0.0, %v3707
  %3709 = vmatmul.bf16.gmra.mxu0 %v3663
  %v3710 = vpop.f32.mrf.mxu0
  %v3711 = vadd.f32 0.0, %v3710
  %v3712 = vpop.f32.mrf.mxu0
  %v3713 = vadd.f32 0.0, %v3712
  %3714 = vmatmul.bf16.gmra.mxu0 %v3666
  %v3715 = vpop.f32.mrf.mxu0
  %v3716 = vadd.f32 0.0, %v3715
  %v3717 = vpop.f32.mrf.mxu0
  %v3718 = vadd.f32 0.0, %v3717
  %3719 = vdwg.mxu0
  %v3736 = vunpack.c.l.b16 %v3361
  %v3737 = vunpack.c.l.b16 %v3362
  %v3738 = vunpack.c.l.b16 %v3363
  %v3739 = vunpack.c.l.b16 %v3364
  %v3740 = vunpack.c.l.b16 %v3365
  %v3741 = vunpack.c.l.b16 %v3366
  %v3742 = vunpack.c.l.b16 %v3367
  %v3743 = vunpack.c.l.b16 %v3368
  %v3744 = vunpack.c.l.b16 %v3369
  %v3745 = vunpack.c.l.b16 %v3370
  %v3746 = vunpack.c.l.b16 %v3371
  %v3747 = vunpack.c.l.b16 %v3372
  %v3748 = vunpack.c.l.b16 %v3373
  %v3749 = vunpack.c.l.b16 %v3374
  %v3750 = vunpack.c.l.b16 %v3375
  %v3751 = vunpack.c.l.b16 %v3376
  %v3752 = vpack.c.b16 %v3737, %v3736
  %v3753 = vpack.c.b16 %v3739, %v3738
  %v3754 = vpack.c.b16 %v3741, %v3740
  %v3755 = vpack.c.b16 %v3743, %v3742
  %v3756 = vpack.c.b16 %v3745, %v3744
  %v3757 = vpack.c.b16 %v3747, %v3746
  %v3758 = vpack.c.b16 %v3749, %v3748
  %v3759 = vpack.c.b16 %v3751, %v3750
  %v3761 = vsel %vm1096, %v3752, 0
  %v3764 = vsel %vm1096, %v3753, 0
  %v3767 = vsel %vm1096, %v3754, 0
  %v3770 = vsel %vm1096, %v3755, 0
  %v3773 = vsel %vm1096, %v3756, 0
  %v3776 = vsel %vm1096, %v3757, 0
  %v3779 = vsel %vm1096, %v3758, 0
  %v3782 = vsel %vm1096, %v3759, 0
  %v3785 = vsel %vm1121, %v3377, 0
  %3787 = vmatpush.bf16.msra.mxu0 0
  %3788 = vmatpush.bf16.msra.mxu0 0
  %3789 = vmatpush.bf16.msra.mxu0 0
  %3790 = vmatpush.bf16.msra.mxu0 0
  %3791 = vmatpush.bf16.msra.mxu0 0
  %3792 = vmatpush.bf16.msra.mxu0 0
  %3793 = vmatpush.bf16.msra.mxu0 0
  %3794 = vmatpush.bf16.msra.mxu0 %v3785
  %3795 = vmatmul.bf16.gmra.mxu0 %v3761
  %v3796 = vpop.f32.mrf.mxu0
  %v3797 = vadd.f32 %v3681, %v3796
  %v3798 = vpop.f32.mrf.mxu0
  %v3799 = vadd.f32 %v3683, %v3798
  %3800 = vmatmul.bf16.gmra.mxu0 %v3764
  %v3801 = vpop.f32.mrf.mxu0
  %v3802 = vadd.f32 %v3686, %v3801
  %v3803 = vpop.f32.mrf.mxu0
  %v3804 = vadd.f32 %v3688, %v3803
  %3805 = vmatmul.bf16.gmra.mxu0 %v3767
  %v3806 = vpop.f32.mrf.mxu0
  %v3807 = vadd.f32 %v3691, %v3806
  %v3808 = vpop.f32.mrf.mxu0
  %v3809 = vadd.f32 %v3693, %v3808
  %3810 = vmatmul.bf16.gmra.mxu0 %v3770
  %v3811 = vpop.f32.mrf.mxu0
  %v3812 = vadd.f32 %v3696, %v3811
  %v3813 = vpop.f32.mrf.mxu0
  %v3814 = vadd.f32 %v3698, %v3813
  %3815 = vmatmul.bf16.gmra.mxu0 %v3773
  %v3816 = vpop.f32.mrf.mxu0
  %v3817 = vadd.f32 %v3701, %v3816
  %v3818 = vpop.f32.mrf.mxu0
  %v3819 = vadd.f32 %v3703, %v3818
  %3820 = vmatmul.bf16.gmra.mxu0 %v3776
  %v3821 = vpop.f32.mrf.mxu0
  %v3822 = vadd.f32 %v3706, %v3821
  %v3823 = vpop.f32.mrf.mxu0
  %v3824 = vadd.f32 %v3708, %v3823
  %3825 = vmatmul.bf16.gmra.mxu0 %v3779
  %v3826 = vpop.f32.mrf.mxu0
  %v3827 = vadd.f32 %v3711, %v3826
  %v3828 = vpop.f32.mrf.mxu0
  %v3829 = vadd.f32 %v3713, %v3828
  %3830 = vmatmul.bf16.gmra.mxu0 %v3782
  %v3831 = vpop.f32.mrf.mxu0
  %v3832 = vadd.f32 %v3716, %v3831
  %v3833 = vpop.f32.mrf.mxu0
  %v3834 = vadd.f32 %v3718, %v3833
  %3835 = vdwg.mxu0
  %v3836 = vld [vmem:[#allocation3] sm:$0xe]
  %v3837 = vld [vmem:[#allocation3 + $0x8] sm:$0xe]
  %v3838 = vld [vmem:[#allocation3 + $0x10] sm:$0xe]
  %v3839 = vld [vmem:[#allocation3 + $0x18] sm:$0xe]
  %v3840 = vld [vmem:[#allocation3 + $0x20] sm:$0xe]
  %v3841 = vld [vmem:[#allocation3 + $0x28] sm:$0xe]
  %v3842 = vld [vmem:[#allocation3 + $0x30] sm:$0xe]
  %v3843 = vld [vmem:[#allocation3 + $0x38] sm:$0xe]
  %v3844 = vld [vmem:[#allocation3 + $0x50] sm:$0xe]
  %v3845 = vld [vmem:[#allocation3 + $0x58] sm:$0xe]
  %v3846 = vld [vmem:[#allocation3 + $0x60] sm:$0xe]
  %v3847 = vld [vmem:[#allocation3 + $0x68] sm:$0xe]
  %v3848 = vld [vmem:[#allocation3 + $0x70] sm:$0xe]
  %v3849 = vld [vmem:[#allocation3 + $0x78] sm:$0xe]
  %v3850 = vld [vmem:[#allocation3 + $0x80] sm:$0xe]
  %v3851 = vld [vmem:[#allocation3 + $0x88] sm:$0xe]
  %v3884 = vrot.slane %v3836, 5
  %v3885 = vrot.slane %v3884, 4
  %v3886 = vrot.slane %v3378, 5
  %v3887 = vsel %vm1340, %v3885, %v3886
  %v3888 = vrot.slane %v3837, 5
  %v3889 = vrot.slane %v3888, 4
  %v3890 = vrot.slane %v3379, 5
  %v3891 = vsel %vm1340, %v3889, %v3890
  %v3892 = vrot.slane %v3838, 5
  %v3893 = vrot.slane %v3892, 4
  %v3894 = vrot.slane %v3380, 5
  %v3895 = vsel %vm1340, %v3893, %v3894
  %v3896 = vrot.slane %v3839, 5
  %v3897 = vrot.slane %v3896, 4
  %v3898 = vrot.slane %v3381, 5
  %v3899 = vsel %vm1340, %v3897, %v3898
  %v3900 = vrot.slane %v3840, 5
  %v3901 = vrot.slane %v3900, 4
  %v3902 = vrot.slane %v3382, 5
  %v3903 = vsel %vm1340, %v3901, %v3902
  %v3904 = vrot.slane %v3841, 5
  %v3905 = vrot.slane %v3904, 4
  %v3906 = vrot.slane %v3383, 5
  %v3907 = vsel %vm1340, %v3905, %v3906
  %v3908 = vrot.slane %v3842, 5
  %v3909 = vrot.slane %v3908, 4
  %v3910 = vrot.slane %v3384, 5
  %v3911 = vsel %vm1340, %v3909, %v3910
  %v3912 = vrot.slane %v3843, 5
  %v3913 = vrot.slane %v3912, 4
  %v3914 = vrot.slane %v3385, 5
  %v3915 = vsel %vm1340, %v3913, %v3914
  %v3916 = vrot.slane %v3844, 5
  %v3917 = vrot.slane %v3916, 4
  %v3918 = vrot.slane %v3386, 5
  %v3919 = vsel %vm1340, %v3917, %v3918
  %v3920 = vrot.slane %v3845, 5
  %v3921 = vrot.slane %v3920, 4
  %v3922 = vrot.slane %v3387, 5
  %v3923 = vsel %vm1340, %v3921, %v3922
  %v3924 = vrot.slane %v3846, 5
  %v3925 = vrot.slane %v3924, 4
  %v3926 = vrot.slane %v3388, 5
  %v3927 = vsel %vm1340, %v3925, %v3926
  %v3928 = vrot.slane %v3847, 5
  %v3929 = vrot.slane %v3928, 4
  %v3930 = vrot.slane %v3389, 5
  %v3931 = vsel %vm1340, %v3929, %v3930
  %v3932 = vrot.slane %v3848, 5
  %v3933 = vrot.slane %v3932, 4
  %v3934 = vrot.slane %v3390, 5
  %v3935 = vsel %vm1340, %v3933, %v3934
  %v3936 = vrot.slane %v3849, 5
  %v3937 = vrot.slane %v3936, 4
  %v3938 = vrot.slane %v3391, 5
  %v3939 = vsel %vm1340, %v3937, %v3938
  %v3940 = vrot.slane %v3850, 5
  %v3941 = vrot.slane %v3940, 4
  %v3942 = vrot.slane %v3392, 5
  %v3943 = vsel %vm1340, %v3941, %v3942
  %v3944 = vrot.slane %v3851, 5
  %v3945 = vrot.slane %v3944, 4
  %v3946 = vrot.slane %v3393, 5
  %v3947 = vsel %vm1340, %v3945, %v3946
  %s3948 = scalar_lea.vmem %s4, 4
  %v3949 = vld [vmem:[%s3948] sm:$0x3]
  %v3950 = vunpack.c.l.b16 %v3887
  %v3951 = vunpack.c.l.b16 %v3891
  %v3952 = vunpack.c.l.b16 %v3895
  %v3953 = vunpack.c.l.b16 %v3899
  %v3954 = vunpack.c.l.b16 %v3903
  %v3955 = vunpack.c.l.b16 %v3907
  %v3956 = vunpack.c.l.b16 %v3911
  %v3957 = vunpack.c.l.b16 %v3915
  %v3958 = vunpack.c.l.b16 %v3919
  %v3959 = vunpack.c.l.b16 %v3923
  %v3960 = vunpack.c.l.b16 %v3927
  %v3961 = vunpack.c.l.b16 %v3931
  %v3962 = vunpack.c.l.b16 %v3935
  %v3963 = vunpack.c.l.b16 %v3939
  %v3964 = vunpack.c.l.b16 %v3943
  %v3965 = vunpack.c.l.b16 %v3947
  %v3966 = vpack.c.b16 %v3951, %v3950
  %v3967 = vpack.c.b16 %v3953, %v3952
  %v3968 = vpack.c.b16 %v3955, %v3954
  %v3969 = vpack.c.b16 %v3957, %v3956
  %v3970 = vpack.c.b16 %v3959, %v3958
  %v3971 = vpack.c.b16 %v3961, %v3960
  %v3972 = vpack.c.b16 %v3963, %v3962
  %v3973 = vpack.c.b16 %v3965, %v3964
  %v3975 = vsel %vm1096, %v3966, 0
  %v3978 = vsel %vm1096, %v3967, 0
  %v3981 = vsel %vm1096, %v3968, 0
  %v3984 = vsel %vm1096, %v3969, 0
  %v3987 = vsel %vm1096, %v3970, 0
  %v3990 = vsel %vm1096, %v3971, 0
  %v3993 = vsel %vm1096, %v3972, 0
  %v3996 = vsel %vm1096, %v3973, 0
  %v3999 = vsel %vm1121, %v3949, 0
  %4001 = vmatpush.bf16.msra.mxu0 0
  %4002 = vmatpush.bf16.msra.mxu0 0
  %4003 = vmatpush.bf16.msra.mxu0 0
  %4004 = vmatpush.bf16.msra.mxu0 0
  %4005 = vmatpush.bf16.msra.mxu0 0
  %4006 = vmatpush.bf16.msra.mxu0 0
  %4007 = vmatpush.bf16.msra.mxu0 0
  %4008 = vmatpush.bf16.msra.mxu0 %v3999
  %4009 = vmatmul.bf16.gmra.mxu0 %v3975
  %v4010 = vpop.f32.mrf.mxu0
  %v4011 = vadd.f32 0.0, %v4010
  %v4012 = vpop.f32.mrf.mxu0
  %v4013 = vadd.f32 0.0, %v4012
  %4014 = vmatmul.bf16.gmra.mxu0 %v3978
  %v4015 = vpop.f32.mrf.mxu0
  %v4016 = vadd.f32 0.0, %v4015
  %v4017 = vpop.f32.mrf.mxu0
  %v4018 = vadd.f32 0.0, %v4017
  %4019 = vmatmul.bf16.gmra.mxu0 %v3981
  %v4020 = vpop.f32.mrf.mxu0
  %v4021 = vadd.f32 0.0, %v4020
  %v4022 = vpop.f32.mrf.mxu0
  %v4023 = vadd.f32 0.0, %v4022
  %4024 = vmatmul.bf16.gmra.mxu0 %v3984
  %v4025 = vpop.f32.mrf.mxu0
  %v4026 = vadd.f32 0.0, %v4025
  %v4027 = vpop.f32.mrf.mxu0
  %v4028 = vadd.f32 0.0, %v4027
  %4029 = vmatmul.bf16.gmra.mxu0 %v3987
  %v4030 = vpop.f32.mrf.mxu0
  %v4031 = vadd.f32 0.0, %v4030
  %v4032 = vpop.f32.mrf.mxu0
  %v4033 = vadd.f32 0.0, %v4032
  %4034 = vmatmul.bf16.gmra.mxu0 %v3990
  %v4035 = vpop.f32.mrf.mxu0
  %v4036 = vadd.f32 0.0, %v4035
  %v4037 = vpop.f32.mrf.mxu0
  %v4038 = vadd.f32 0.0, %v4037
  %4039 = vmatmul.bf16.gmra.mxu0 %v3993
  %v4040 = vpop.f32.mrf.mxu0
  %v4041 = vadd.f32 0.0, %v4040
  %v4042 = vpop.f32.mrf.mxu0
  %v4043 = vadd.f32 0.0, %v4042
  %4044 = vmatmul.bf16.gmra.mxu0 %v3996
  %v4045 = vpop.f32.mrf.mxu0
  %v4046 = vadd.f32 0.0, %v4045
  %v4047 = vpop.f32.mrf.mxu0
  %v4048 = vadd.f32 0.0, %v4047
  %4049 = vdwg.mxu0
  %v4050 = vadd.f32 %v3797, %v4011
  %v4051 = vadd.f32 %v3799, %v4013
  %v4052 = vadd.f32 %v3802, %v4016
  %v4053 = vadd.f32 %v3804, %v4018
  %v4054 = vadd.f32 %v3807, %v4021
  %v4055 = vadd.f32 %v3809, %v4023
  %v4056 = vadd.f32 %v3812, %v4026
  %v4057 = vadd.f32 %v3814, %v4028
  %v4058 = vadd.f32 %v3817, %v4031
  %v4059 = vadd.f32 %v3819, %v4033
  %v4060 = vadd.f32 %v3822, %v4036
  %v4061 = vadd.f32 %v3824, %v4038
  %v4062 = vadd.f32 %v3827, %v4041
  %v4063 = vadd.f32 %v3829, %v4043
  %v4064 = vadd.f32 %v3832, %v4046
  %v4065 = vadd.f32 %v3834, %v4048
  %v4066 = vld [vmem:[%s3264] sm:$0xf]
  %v4067 = vld [vmem:[%s3264 + $0x8] sm:$0xf]
  %v4068 = vld [vmem:[%s3264 + $0x10] sm:$0xf]
  %v4069 = vld [vmem:[%s3264 + $0x18] sm:$0xf]
  %v4070 = vld [vmem:[%s3264 + $0x20] sm:$0xf]
  %v4071 = vld [vmem:[%s3264 + $0x28] sm:$0xf]
  %v4072 = vld [vmem:[%s3264 + $0x30] sm:$0xf]
  %v4073 = vld [vmem:[%s3264 + $0x38] sm:$0xf]
  %v4074 = vld [vmem:[%s3264 + $0x50] sm:$0xf]
  %v4075 = vld [vmem:[%s3264 + $0x58] sm:$0xf]
  %v4076 = vld [vmem:[%s3264 + $0x60] sm:$0xf]
  %v4077 = vld [vmem:[%s3264 + $0x68] sm:$0xf]
  %v4078 = vld [vmem:[%s3264 + $0x70] sm:$0xf]
  %v4079 = vld [vmem:[%s3264 + $0x78] sm:$0xf]
  %v4080 = vld [vmem:[%s3264 + $0x80] sm:$0xf]
  %v4081 = vld [vmem:[%s3264 + $0x88] sm:$0xf]
  %s4082 = scalar_lea.vmem %s4, 6
  %v4083 = vld [vmem:[%s4082] sm:$0x3]
  %v4100 = vunpack.c.l.b16 %v4066
  %v4101 = vunpack.c.l.b16 %v4067
  %v4102 = vunpack.c.l.b16 %v4068
  %v4103 = vunpack.c.l.b16 %v4069
  %v4104 = vunpack.c.l.b16 %v4070
  %v4105 = vunpack.c.l.b16 %v4071
  %v4106 = vunpack.c.l.b16 %v4072
  %v4107 = vunpack.c.l.b16 %v4073
  %v4108 = vunpack.c.l.b16 %v4074
  %v4109 = vunpack.c.l.b16 %v4075
  %v4110 = vunpack.c.l.b16 %v4076
  %v4111 = vunpack.c.l.b16 %v4077
  %v4112 = vunpack.c.l.b16 %v4078
  %v4113 = vunpack.c.l.b16 %v4079
  %v4114 = vunpack.c.l.b16 %v4080
  %v4115 = vunpack.c.l.b16 %v4081
  %v4116 = vpack.c.b16 %v4101, %v4100
  %v4117 = vpack.c.b16 %v4103, %v4102
  %v4118 = vpack.c.b16 %v4105, %v4104
  %v4119 = vpack.c.b16 %v4107, %v4106
  %v4120 = vpack.c.b16 %v4109, %v4108
  %v4121 = vpack.c.b16 %v4111, %v4110
  %v4122 = vpack.c.b16 %v4113, %v4112
  %v4123 = vpack.c.b16 %v4115, %v4114
  %v4125 = vsel %vm1096, %v4116, 0
  %v4128 = vsel %vm1096, %v4117, 0
  %v4131 = vsel %vm1096, %v4118, 0
  %v4134 = vsel %vm1096, %v4119, 0
  %v4137 = vsel %vm1096, %v4120, 0
  %v4140 = vsel %vm1096, %v4121, 0
  %v4143 = vsel %vm1096, %v4122, 0
  %v4146 = vsel %vm1096, %v4123, 0
  %v4149 = vsel %vm1121, %v4083, 0
  %4151 = vmatpush.bf16.msra.mxu0 0
  %4152 = vmatpush.bf16.msra.mxu0 0
  %4153 = vmatpush.bf16.msra.mxu0 0
  %4154 = vmatpush.bf16.msra.mxu0 0
  %4155 = vmatpush.bf16.msra.mxu0 0
  %4156 = vmatpush.bf16.msra.mxu0 0
  %4157 = vmatpush.bf16.msra.mxu0 0
  %4158 = vmatpush.bf16.msra.mxu0 %v4149
  %4159 = vmatmul.bf16.gmra.mxu0 %v4125
  %v4160 = vpop.f32.mrf.mxu0
  %v4161 = vadd.f32 0.0, %v4160
  %v4162 = vpop.f32.mrf.mxu0
  %v4163 = vadd.f32 0.0, %v4162
  %4164 = vmatmul.bf16.gmra.mxu0 %v4128
  %v4165 = vpop.f32.mrf.mxu0
  %v4166 = vadd.f32 0.0, %v4165
  %v4167 = vpop.f32.mrf.mxu0
  %v4168 = vadd.f32 0.0, %v4167
  %4169 = vmatmul.bf16.gmra.mxu0 %v4131
  %v4170 = vpop.f32.mrf.mxu0
  %v4171 = vadd.f32 0.0, %v4170
  %v4172 = vpop.f32.mrf.mxu0
  %v4173 = vadd.f32 0.0, %v4172
  %4174 = vmatmul.bf16.gmra.mxu0 %v4134
  %v4175 = vpop.f32.mrf.mxu0
  %v4176 = vadd.f32 0.0, %v4175
  %v4177 = vpop.f32.mrf.mxu0
  %v4178 = vadd.f32 0.0, %v4177
  %4179 = vmatmul.bf16.gmra.mxu0 %v4137
  %v4180 = vpop.f32.mrf.mxu0
  %v4181 = vadd.f32 0.0, %v4180
  %v4182 = vpop.f32.mrf.mxu0
  %v4183 = vadd.f32 0.0, %v4182
  %4184 = vmatmul.bf16.gmra.mxu0 %v4140
  %v4185 = vpop.f32.mrf.mxu0
  %v4186 = vadd.f32 0.0, %v4185
  %v4187 = vpop.f32.mrf.mxu0
  %v4188 = vadd.f32 0.0, %v4187
  %4189 = vmatmul.bf16.gmra.mxu0 %v4143
  %v4190 = vpop.f32.mrf.mxu0
  %v4191 = vadd.f32 0.0, %v4190
  %v4192 = vpop.f32.mrf.mxu0
  %v4193 = vadd.f32 0.0, %v4192
  %4194 = vmatmul.bf16.gmra.mxu0 %v4146
  %v4195 = vpop.f32.mrf.mxu0
  %v4196 = vadd.f32 0.0, %v4195
  %v4197 = vpop.f32.mrf.mxu0
  %v4198 = vadd.f32 0.0, %v4197
  %4199 = vdwg.mxu0
  %v4200 = vadd.f32 %v4050, %v4161
  %v4201 = vadd.f32 %v4051, %v4163
  %v4202 = vadd.f32 %v4052, %v4166
  %v4203 = vadd.f32 %v4053, %v4168
  %v4204 = vadd.f32 %v4054, %v4171
  %v4205 = vadd.f32 %v4055, %v4173
  %v4206 = vadd.f32 %v4056, %v4176
  %v4207 = vadd.f32 %v4057, %v4178
  %v4208 = vadd.f32 %v4058, %v4181
  %v4209 = vadd.f32 %v4059, %v4183
  %v4210 = vadd.f32 %v4060, %v4186
  %v4211 = vadd.f32 %v4061, %v4188
  %v4212 = vadd.f32 %v4062, %v4191
  %v4213 = vadd.f32 %v4063, %v4193
  %v4214 = vadd.f32 %v4064, %v4196
  %v4215 = vadd.f32 %v4065, %v4198
  %v4216 = vld [vmem:[%s3264] sm:$0xf]
  %v4217 = vld [vmem:[%s3264 + $0x4] sm:$0x1]
  %v4218 = vld [vmem:[%s3264 + $0x8] sm:$0xf]
  %v4219 = vld [vmem:[%s3264 + $0xc] sm:$0x1]
  %v4220 = vld [vmem:[%s3264 + $0x10] sm:$0xf]
  %v4221 = vld [vmem:[%s3264 + $0x14] sm:$0x1]
  %v4222 = vld [vmem:[%s3264 + $0x18] sm:$0xf]
  %v4223 = vld [vmem:[%s3264 + $0x1c] sm:$0x1]
  %v4224 = vld [vmem:[%s3264 + $0x20] sm:$0xf]
  %v4225 = vld [vmem:[%s3264 + $0x24] sm:$0x1]
  %v4226 = vld [vmem:[%s3264 + $0x28] sm:$0xf]
  %v4227 = vld [vmem:[%s3264 + $0x2c] sm:$0x1]
  %v4228 = vld [vmem:[%s3264 + $0x30] sm:$0xf]
  %v4229 = vld [vmem:[%s3264 + $0x34] sm:$0x1]
  %v4230 = vld [vmem:[%s3264 + $0x38] sm:$0xf]
  %v4231 = vld [vmem:[%s3264 + $0x3c] sm:$0x1]
  %v4232 = vld [vmem:[%s3264 + $0x50] sm:$0xf]
  %v4233 = vld [vmem:[%s3264 + $0x54] sm:$0x1]
  %v4234 = vld [vmem:[%s3264 + $0x58] sm:$0xf]
  %v4235 = vld [vmem:[%s3264 + $0x5c] sm:$0x1]
  %v4236 = vld [vmem:[%s3264 + $0x60] sm:$0xf]
  %v4237 = vld [vmem:[%s3264 + $0x64] sm:$0x1]
  %v4238 = vld [vmem:[%s3264 + $0x68] sm:$0xf]
  %v4239 = vld [vmem:[%s3264 + $0x6c] sm:$0x1]
  %v4240 = vld [vmem:[%s3264 + $0x70] sm:$0xf]
  %v4241 = vld [vmem:[%s3264 + $0x74] sm:$0x1]
  %v4242 = vld [vmem:[%s3264 + $0x78] sm:$0xf]
  %v4243 = vld [vmem:[%s3264 + $0x7c] sm:$0x1]
  %v4244 = vld [vmem:[%s3264 + $0x80] sm:$0xf]
  %v4245 = vld [vmem:[%s3264 + $0x84] sm:$0x1]
  %v4246 = vld [vmem:[%s3264 + $0x88] sm:$0xf]
  %v4247 = vld [vmem:[%s3264 + $0x8c] sm:$0x1]
  %v4249 = vshrl.u32 %v4216, 16
  %v4251 = vrot.slane %v4249, 4
  %v4252 = vshll.u32 %v4216, 16
  %v4254 = vrot.slane %v4252, 5
  %v4255 = vor.u32 %v4251, %v4254
  %v4256 = vrot.slane %v4255, 4
  %v4258 = vshll.u32 %v4217, 16
  %v4260 = vrot.slane %v4258, 5
  %v4261 = vsel %vm845, %v4256, %v4260
  %v4263 = vshrl.u32 %v4218, 16
  %v4265 = vrot.slane %v4263, 4
  %v4266 = vshll.u32 %v4218, 16
  %v4268 = vrot.slane %v4266, 5
  %v4269 = vor.u32 %v4265, %v4268
  %v4270 = vrot.slane %v4269, 4
  %v4272 = vshll.u32 %v4219, 16
  %v4274 = vrot.slane %v4272, 5
  %v4275 = vsel %vm845, %v4270, %v4274
  %v4277 = vshrl.u32 %v4220, 16
  %v4279 = vrot.slane %v4277, 4
  %v4280 = vshll.u32 %v4220, 16
  %v4282 = vrot.slane %v4280, 5
  %v4283 = vor.u32 %v4279, %v4282
  %v4284 = vrot.slane %v4283, 4
  %v4286 = vshll.u32 %v4221, 16
  %v4288 = vrot.slane %v4286, 5
  %v4289 = vsel %vm845, %v4284, %v4288
  %v4291 = vshrl.u32 %v4222, 16
  %v4293 = vrot.slane %v4291, 4
  %v4294 = vshll.u32 %v4222, 16
  %v4296 = vrot.slane %v4294, 5
  %v4297 = vor.u32 %v4293, %v4296
  %v4298 = vrot.slane %v4297, 4
  %v4300 = vshll.u32 %v4223, 16
  %v4302 = vrot.slane %v4300, 5
  %v4303 = vsel %vm845, %v4298, %v4302
  %v4305 = vshrl.u32 %v4224, 16
  %v4307 = vrot.slane %v4305, 4
  %v4308 = vshll.u32 %v4224, 16
  %v4310 = vrot.slane %v4308, 5
  %v4311 = vor.u32 %v4307, %v4310
  %v4312 = vrot.slane %v4311, 4
  %v4314 = vshll.u32 %v4225, 16
  %v4316 = vrot.slane %v4314, 5
  %v4317 = vsel %vm845, %v4312, %v4316
  %v4319 = vshrl.u32 %v4226, 16
  %v4321 = vrot.slane %v4319, 4
  %v4322 = vshll.u32 %v4226, 16
  %v4324 = vrot.slane %v4322, 5
  %v4325 = vor.u32 %v4321, %v4324
  %v4326 = vrot.slane %v4325, 4
  %v4328 = vshll.u32 %v4227, 16
  %v4330 = vrot.slane %v4328, 5
  %v4331 = vsel %vm845, %v4326, %v4330
  %v4333 = vshrl.u32 %v4228, 16
  %v4335 = vrot.slane %v4333, 4
  %v4336 = vshll.u32 %v4228, 16
  %v4338 = vrot.slane %v4336, 5
  %v4339 = vor.u32 %v4335, %v4338
  %v4340 = vrot.slane %v4339, 4
  %v4342 = vshll.u32 %v4229, 16
  %v4344 = vrot.slane %v4342, 5
  %v4345 = vsel %vm845, %v4340, %v4344
  %v4347 = vshrl.u32 %v4230, 16
  %v4349 = vrot.slane %v4347, 4
  %v4350 = vshll.u32 %v4230, 16
  %v4352 = vrot.slane %v4350, 5
  %v4353 = vor.u32 %v4349, %v4352
  %v4354 = vrot.slane %v4353, 4
  %v4356 = vshll.u32 %v4231, 16
  %v4358 = vrot.slane %v4356, 5
  %v4359 = vsel %vm845, %v4354, %v4358
  %v4361 = vshrl.u32 %v4232, 16
  %v4363 = vrot.slane %v4361, 4
  %v4364 = vshll.u32 %v4232, 16
  %v4366 = vrot.slane %v4364, 5
  %v4367 = vor.u32 %v4363, %v4366
  %v4368 = vrot.slane %v4367, 4
  %v4370 = vshll.u32 %v4233, 16
  %v4372 = vrot.slane %v4370, 5
  %v4373 = vsel %vm845, %v4368, %v4372
  %v4375 = vshrl.u32 %v4234, 16
  %v4377 = vrot.slane %v4375, 4
  %v4378 = vshll.u32 %v4234, 16
  %v4380 = vrot.slane %v4378, 5
  %v4381 = vor.u32 %v4377, %v4380
  %v4382 = vrot.slane %v4381, 4
  %v4384 = vshll.u32 %v4235, 16
  %v4386 = vrot.slane %v4384, 5
  %v4387 = vsel %vm845, %v4382, %v4386
  %v4389 = vshrl.u32 %v4236, 16
  %v4391 = vrot.slane %v4389, 4
  %v4392 = vshll.u32 %v4236, 16
  %v4394 = vrot.slane %v4392, 5
  %v4395 = vor.u32 %v4391, %v4394
  %v4396 = vrot.slane %v4395, 4
  %v4398 = vshll.u32 %v4237, 16
  %v4400 = vrot.slane %v4398, 5
  %v4401 = vsel %vm845, %v4396, %v4400
  %v4403 = vshrl.u32 %v4238, 16
  %v4405 = vrot.slane %v4403, 4
  %v4406 = vshll.u32 %v4238, 16
  %v4408 = vrot.slane %v4406, 5
  %v4409 = vor.u32 %v4405, %v4408
  %v4410 = vrot.slane %v4409, 4
  %v4412 = vshll.u32 %v4239, 16
  %v4414 = vrot.slane %v4412, 5
  %v4415 = vsel %vm845, %v4410, %v4414
  %v4417 = vshrl.u32 %v4240, 16
  %v4419 = vrot.slane %v4417, 4
  %v4420 = vshll.u32 %v4240, 16
  %v4422 = vrot.slane %v4420, 5
  %v4423 = vor.u32 %v4419, %v4422
  %v4424 = vrot.slane %v4423, 4
  %v4426 = vshll.u32 %v4241, 16
  %v4428 = vrot.slane %v4426, 5
  %v4429 = vsel %vm845, %v4424, %v4428
  %v4431 = vshrl.u32 %v4242, 16
  %v4433 = vrot.slane %v4431, 4
  %v4434 = vshll.u32 %v4242, 16
  %v4436 = vrot.slane %v4434, 5
  %v4437 = vor.u32 %v4433, %v4436
  %v4438 = vrot.slane %v4437, 4
  %v4440 = vshll.u32 %v4243, 16
  %v4442 = vrot.slane %v4440, 5
  %v4443 = vsel %vm845, %v4438, %v4442
  %v4445 = vshrl.u32 %v4244, 16
  %v4447 = vrot.slane %v4445, 4
  %v4448 = vshll.u32 %v4244, 16
  %v4450 = vrot.slane %v4448, 5
  %v4451 = vor.u32 %v4447, %v4450
  %v4452 = vrot.slane %v4451, 4
  %v4454 = vshll.u32 %v4245, 16
  %v4456 = vrot.slane %v4454, 5
  %v4457 = vsel %vm845, %v4452, %v4456
  %v4459 = vshrl.u32 %v4246, 16
  %v4461 = vrot.slane %v4459, 4
  %v4462 = vshll.u32 %v4246, 16
  %v4464 = vrot.slane %v4462, 5
  %v4465 = vor.u32 %v4461, %v4464
  %v4466 = vrot.slane %v4465, 4
  %v4468 = vshll.u32 %v4247, 16
  %v4470 = vrot.slane %v4468, 5
  %v4471 = vsel %vm845, %v4466, %v4470
  %s4472 = scalar_lea.vmem %s4, 8
  %v4473 = vld [vmem:[%s4472] sm:$0x3]
  %v4474 = vunpack.c.l.b16 %v4261
  %v4475 = vunpack.c.l.b16 %v4275
  %v4476 = vunpack.c.l.b16 %v4289
  %v4477 = vunpack.c.l.b16 %v4303
  %v4478 = vunpack.c.l.b16 %v4317
  %v4479 = vunpack.c.l.b16 %v4331
  %v4480 = vunpack.c.l.b16 %v4345
  %v4481 = vunpack.c.l.b16 %v4359
  %v4482 = vunpack.c.l.b16 %v4373
  %v4483 = vunpack.c.l.b16 %v4387
  %v4484 = vunpack.c.l.b16 %v4401
  %v4485 = vunpack.c.l.b16 %v4415
  %v4486 = vunpack.c.l.b16 %v4429
  %v4487 = vunpack.c.l.b16 %v4443
  %v4488 = vunpack.c.l.b16 %v4457
  %v4489 = vunpack.c.l.b16 %v4471
  %v4490 = vpack.c.b16 %v4475, %v4474
  %v4491 = vpack.c.b16 %v4477, %v4476
  %v4492 = vpack.c.b16 %v4479, %v4478
  %v4493 = vpack.c.b16 %v4481, %v4480
  %v4494 = vpack.c.b16 %v4483, %v4482
  %v4495 = vpack.c.b16 %v4485, %v4484
  %v4496 = vpack.c.b16 %v4487, %v4486
  %v4497 = vpack.c.b16 %v4489, %v4488
  %v4499 = vsel %vm1096, %v4490, 0
  %v4502 = vsel %vm1096, %v4491, 0
  %v4505 = vsel %vm1096, %v4492, 0
  %v4508 = vsel %vm1096, %v4493, 0
  %v4511 = vsel %vm1096, %v4494, 0
  %v4514 = vsel %vm1096, %v4495, 0
  %v4517 = vsel %vm1096, %v4496, 0
  %v4520 = vsel %vm1096, %v4497, 0
  %v4523 = vsel %vm1121, %v4473, 0
  %4525 = vmatpush.bf16.msra.mxu0 0
  %4526 = vmatpush.bf16.msra.mxu0 0
  %4527 = vmatpush.bf16.msra.mxu0 0
  %4528 = vmatpush.bf16.msra.mxu0 0
  %4529 = vmatpush.bf16.msra.mxu0 0
  %4530 = vmatpush.bf16.msra.mxu0 0
  %4531 = vmatpush.bf16.msra.mxu0 0
  %4532 = vmatpush.bf16.msra.mxu0 %v4523
  %4533 = vmatmul.bf16.gmra.mxu0 %v4499
  %v4534 = vpop.f32.mrf.mxu0
  %v4535 = vadd.f32 0.0, %v4534
  %v4536 = vpop.f32.mrf.mxu0
  %v4537 = vadd.f32 0.0, %v4536
  %4538 = vmatmul.bf16.gmra.mxu0 %v4502
  %v4539 = vpop.f32.mrf.mxu0
  %v4540 = vadd.f32 0.0, %v4539
  %v4541 = vpop.f32.mrf.mxu0
  %v4542 = vadd.f32 0.0, %v4541
  %4543 = vmatmul.bf16.gmra.mxu0 %v4505
  %v4544 = vpop.f32.mrf.mxu0
  %v4545 = vadd.f32 0.0, %v4544
  %v4546 = vpop.f32.mrf.mxu0
  %v4547 = vadd.f32 0.0, %v4546
  %4548 = vmatmul.bf16.gmra.mxu0 %v4508
  %v4549 = vpop.f32.mrf.mxu0
  %v4550 = vadd.f32 0.0, %v4549
  %v4551 = vpop.f32.mrf.mxu0
  %v4552 = vadd.f32 0.0, %v4551
  %4553 = vmatmul.bf16.gmra.mxu0 %v4511
  %v4554 = vpop.f32.mrf.mxu0
  %v4555 = vadd.f32 0.0, %v4554
  %v4556 = vpop.f32.mrf.mxu0
  %v4557 = vadd.f32 0.0, %v4556
  %4558 = vmatmul.bf16.gmra.mxu0 %v4514
  %v4559 = vpop.f32.mrf.mxu0
  %v4560 = vadd.f32 0.0, %v4559
  %v4561 = vpop.f32.mrf.mxu0
  %v4562 = vadd.f32 0.0, %v4561
  %4563 = vmatmul.bf16.gmra.mxu0 %v4517
  %v4564 = vpop.f32.mrf.mxu0
  %v4565 = vadd.f32 0.0, %v4564
  %v4566 = vpop.f32.mrf.mxu0
  %v4567 = vadd.f32 0.0, %v4566
  %4568 = vmatmul.bf16.gmra.mxu0 %v4520
  %v4569 = vpop.f32.mrf.mxu0
  %v4570 = vadd.f32 0.0, %v4569
  %v4571 = vpop.f32.mrf.mxu0
  %v4572 = vadd.f32 0.0, %v4571
  %4573 = vdwg.mxu0
  %v4574 = vadd.f32 %v4200, %v4535
  %v4575 = vadd.f32 %v4201, %v4537
  %v4576 = vadd.f32 %v4202, %v4540
  %v4577 = vadd.f32 %v4203, %v4542
  %v4578 = vadd.f32 %v4204, %v4545
  %v4579 = vadd.f32 %v4205, %v4547
  %v4580 = vadd.f32 %v4206, %v4550
  %v4581 = vadd.f32 %v4207, %v4552
  %v4582 = vadd.f32 %v4208, %v4555
  %v4583 = vadd.f32 %v4209, %v4557
  %v4584 = vadd.f32 %v4210, %v4560
  %v4585 = vadd.f32 %v4211, %v4562
  %v4586 = vadd.f32 %v4212, %v4565
  %v4587 = vadd.f32 %v4213, %v4567
  %v4588 = vadd.f32 %v4214, %v4570
  %v4589 = vadd.f32 %v4215, %v4572
  %v4590 = vld [vmem:[%s3264] sm:$0xe]
  %v4591 = vld [vmem:[%s3264 + $0x8] sm:$0xe]
  %v4592 = vld [vmem:[%s3264 + $0x10] sm:$0xe]
  %v4593 = vld [vmem:[%s3264 + $0x18] sm:$0xe]
  %v4594 = vld [vmem:[%s3264 + $0x20] sm:$0xe]
  %v4595 = vld [vmem:[%s3264 + $0x28] sm:$0xe]
  %v4596 = vld [vmem:[%s3264 + $0x30] sm:$0xe]
  %v4597 = vld [vmem:[%s3264 + $0x38] sm:$0xe]
  %v4598 = vld [vmem:[%s3264 + $0x50] sm:$0xe]
  %v4599 = vld [vmem:[%s3264 + $0x58] sm:$0xe]
  %v4600 = vld [vmem:[%s3264 + $0x60] sm:$0xe]
  %v4601 = vld [vmem:[%s3264 + $0x68] sm:$0xe]
  %v4602 = vld [vmem:[%s3264 + $0x70] sm:$0xe]
  %v4603 = vld [vmem:[%s3264 + $0x78] sm:$0xe]
  %v4604 = vld [vmem:[%s3264 + $0x80] sm:$0xe]
  %v4605 = vld [vmem:[%s3264 + $0x88] sm:$0xe]
  %v4638 = vrot.slane %v4590, 5
  %v4639 = vrot.slane %v4638, 4
  %v4640 = vrot.slane %v4217, 5
  %v4641 = vsel %vm1340, %v4639, %v4640
  %v4642 = vrot.slane %v4591, 5
  %v4643 = vrot.slane %v4642, 4
  %v4644 = vrot.slane %v4219, 5
  %v4645 = vsel %vm1340, %v4643, %v4644
  %v4646 = vrot.slane %v4592, 5
  %v4647 = vrot.slane %v4646, 4
  %v4648 = vrot.slane %v4221, 5
  %v4649 = vsel %vm1340, %v4647, %v4648
  %v4650 = vrot.slane %v4593, 5
  %v4651 = vrot.slane %v4650, 4
  %v4652 = vrot.slane %v4223, 5
  %v4653 = vsel %vm1340, %v4651, %v4652
  %v4654 = vrot.slane %v4594, 5
  %v4655 = vrot.slane %v4654, 4
  %v4656 = vrot.slane %v4225, 5
  %v4657 = vsel %vm1340, %v4655, %v4656
  %v4658 = vrot.slane %v4595, 5
  %v4659 = vrot.slane %v4658, 4
  %v4660 = vrot.slane %v4227, 5
  %v4661 = vsel %vm1340, %v4659, %v4660
  %v4662 = vrot.slane %v4596, 5
  %v4663 = vrot.slane %v4662, 4
  %v4664 = vrot.slane %v4229, 5
  %v4665 = vsel %vm1340, %v4663, %v4664
  %v4666 = vrot.slane %v4597, 5
  %v4667 = vrot.slane %v4666, 4
  %v4668 = vrot.slane %v4231, 5
  %v4669 = vsel %vm1340, %v4667, %v4668
  %v4670 = vrot.slane %v4598, 5
  %v4671 = vrot.slane %v4670, 4
  %v4672 = vrot.slane %v4233, 5
  %v4673 = vsel %vm1340, %v4671, %v4672
  %v4674 = vrot.slane %v4599, 5
  %v4675 = vrot.slane %v4674, 4
  %v4676 = vrot.slane %v4235, 5
  %v4677 = vsel %vm1340, %v4675, %v4676
  %v4678 = vrot.slane %v4600, 5
  %v4679 = vrot.slane %v4678, 4
  %v4680 = vrot.slane %v4237, 5
  %v4681 = vsel %vm1340, %v4679, %v4680
  %v4682 = vrot.slane %v4601, 5
  %v4683 = vrot.slane %v4682, 4
  %v4684 = vrot.slane %v4239, 5
  %v4685 = vsel %vm1340, %v4683, %v4684
  %v4686 = vrot.slane %v4602, 5
  %v4687 = vrot.slane %v4686, 4
  %v4688 = vrot.slane %v4241, 5
  %v4689 = vsel %vm1340, %v4687, %v4688
  %v4690 = vrot.slane %v4603, 5
  %v4691 = vrot.slane %v4690, 4
  %v4692 = vrot.slane %v4243, 5
  %v4693 = vsel %vm1340, %v4691, %v4692
  %v4694 = vrot.slane %v4604, 5
  %v4695 = vrot.slane %v4694, 4
  %v4696 = vrot.slane %v4245, 5
  %v4697 = vsel %vm1340, %v4695, %v4696
  %v4698 = vrot.slane %v4605, 5
  %v4699 = vrot.slane %v4698, 4
  %v4700 = vrot.slane %v4247, 5
  %v4701 = vsel %vm1340, %v4699, %v4700
  %s4702 = scalar_lea.vmem %s4, 10
  %v4703 = vld [vmem:[%s4702] sm:$0x3]
  %v4704 = vunpack.c.l.b16 %v4641
  %v4705 = vunpack.c.l.b16 %v4645
  %v4706 = vunpack.c.l.b16 %v4649
  %v4707 = vunpack.c.l.b16 %v4653
  %v4708 = vunpack.c.l.b16 %v4657
  %v4709 = vunpack.c.l.b16 %v4661
  %v4710 = vunpack.c.l.b16 %v4665
  %v4711 = vunpack.c.l.b16 %v4669
  %v4712 = vunpack.c.l.b16 %v4673
  %v4713 = vunpack.c.l.b16 %v4677
  %v4714 = vunpack.c.l.b16 %v4681
  %v4715 = vunpack.c.l.b16 %v4685
  %v4716 = vunpack.c.l.b16 %v4689
  %v4717 = vunpack.c.l.b16 %v4693
  %v4718 = vunpack.c.l.b16 %v4697
  %v4719 = vunpack.c.l.b16 %v4701
  %v4720 = vpack.c.b16 %v4705, %v4704
  %v4721 = vpack.c.b16 %v4707, %v4706
  %v4722 = vpack.c.b16 %v4709, %v4708
  %v4723 = vpack.c.b16 %v4711, %v4710
  %v4724 = vpack.c.b16 %v4713, %v4712
  %v4725 = vpack.c.b16 %v4715, %v4714
  %v4726 = vpack.c.b16 %v4717, %v4716
  %v4727 = vpack.c.b16 %v4719, %v4718
  %v4729 = vsel %vm1096, %v4720, 0
  %v4732 = vsel %vm1096, %v4721, 0
  %v4735 = vsel %vm1096, %v4722, 0
  %v4738 = vsel %vm1096, %v4723, 0
  %v4741 = vsel %vm1096, %v4724, 0
  %v4744 = vsel %vm1096, %v4725, 0
  %v4747 = vsel %vm1096, %v4726, 0
  %v4750 = vsel %vm1096, %v4727, 0
  %v4753 = vsel %vm1121, %v4703, 0
  %4755 = vmatpush.bf16.msra.mxu0 0
  %4756 = vmatpush.bf16.msra.mxu0 0
  %4757 = vmatpush.bf16.msra.mxu0 0
  %4758 = vmatpush.bf16.msra.mxu0 0
  %4759 = vmatpush.bf16.msra.mxu0 0
  %4760 = vmatpush.bf16.msra.mxu0 0
  %4761 = vmatpush.bf16.msra.mxu0 0
  %4762 = vmatpush.bf16.msra.mxu0 %v4753
  %4763 = vmatmul.bf16.gmra.mxu0 %v4729
  %v4764 = vpop.f32.mrf.mxu0
  %v4765 = vadd.f32 0.0, %v4764
  %v4766 = vpop.f32.mrf.mxu0
  %v4767 = vadd.f32 0.0, %v4766
  %4768 = vmatmul.bf16.gmra.mxu0 %v4732
  %v4769 = vpop.f32.mrf.mxu0
  %v4770 = vadd.f32 0.0, %v4769
  %v4771 = vpop.f32.mrf.mxu0
  %v4772 = vadd.f32 0.0, %v4771
  %4773 = vmatmul.bf16.gmra.mxu0 %v4735
  %v4774 = vpop.f32.mrf.mxu0
  %v4775 = vadd.f32 0.0, %v4774
  %v4776 = vpop.f32.mrf.mxu0
  %v4777 = vadd.f32 0.0, %v4776
  %4778 = vmatmul.bf16.gmra.mxu0 %v4738
  %v4779 = vpop.f32.mrf.mxu0
  %v4780 = vadd.f32 0.0, %v4779
  %v4781 = vpop.f32.mrf.mxu0
  %v4782 = vadd.f32 0.0, %v4781
  %4783 = vmatmul.bf16.gmra.mxu0 %v4741
  %v4784 = vpop.f32.mrf.mxu0
  %v4785 = vadd.f32 0.0, %v4784
  %v4786 = vpop.f32.mrf.mxu0
  %v4787 = vadd.f32 0.0, %v4786
  %4788 = vmatmul.bf16.gmra.mxu0 %v4744
  %v4789 = vpop.f32.mrf.mxu0
  %v4790 = vadd.f32 0.0, %v4789
  %v4791 = vpop.f32.mrf.mxu0
  %v4792 = vadd.f32 0.0, %v4791
  %4793 = vmatmul.bf16.gmra.mxu0 %v4747
  %v4794 = vpop.f32.mrf.mxu0
  %v4795 = vadd.f32 0.0, %v4794
  %v4796 = vpop.f32.mrf.mxu0
  %v4797 = vadd.f32 0.0, %v4796
  %4798 = vmatmul.bf16.gmra.mxu0 %v4750
  %v4799 = vpop.f32.mrf.mxu0
  %v4800 = vadd.f32 0.0, %v4799
  %v4801 = vpop.f32.mrf.mxu0
  %v4802 = vadd.f32 0.0, %v4801
  %4803 = vdwg.mxu0
  %v4804 = vadd.f32 %v4574, %v4765
  %v4805 = vadd.f32 %v4575, %v4767
  %v4806 = vadd.f32 %v4576, %v4770
  %v4807 = vadd.f32 %v4577, %v4772
  %v4808 = vadd.f32 %v4578, %v4775
  %v4809 = vadd.f32 %v4579, %v4777
  %v4810 = vadd.f32 %v4580, %v4780
  %v4811 = vadd.f32 %v4581, %v4782
  %v4812 = vadd.f32 %v4582, %v4785
  %v4813 = vadd.f32 %v4583, %v4787
  %v4814 = vadd.f32 %v4584, %v4790
  %v4815 = vadd.f32 %v4585, %v4792
  %v4816 = vadd.f32 %v4586, %v4795
  %v4817 = vadd.f32 %v4587, %v4797
  %v4818 = vadd.f32 %v4588, %v4800
  %v4819 = vadd.f32 %v4589, %v4802
  %s4820 = scalar_lea.vmem [#allocation3], 16
  %v4821 = vld [vmem:[%s4820] sm:$0xf]
  %v4822 = vld [vmem:[%s4820 + $0x8] sm:$0xf]
  %v4823 = vld [vmem:[%s4820 + $0x10] sm:$0xf]
  %v4824 = vld [vmem:[%s4820 + $0x18] sm:$0xf]
  %v4825 = vld [vmem:[%s4820 + $0x20] sm:$0xf]
  %v4826 = vld [vmem:[%s4820 + $0x28] sm:$0xf]
  %v4827 = vld [vmem:[%s4820 + $0x30] sm:$0xf]
  %v4828 = vld [vmem:[%s4820 + $0x38] sm:$0xf]
  %v4829 = vld [vmem:[%s4820 + $0x50] sm:$0xf]
  %v4830 = vld [vmem:[%s4820 + $0x58] sm:$0xf]
  %v4831 = vld [vmem:[%s4820 + $0x60] sm:$0xf]
  %v4832 = vld [vmem:[%s4820 + $0x68] sm:$0xf]
  %v4833 = vld [vmem:[%s4820 + $0x70] sm:$0xf]
  %v4834 = vld [vmem:[%s4820 + $0x78] sm:$0xf]
  %v4835 = vld [vmem:[%s4820 + $0x80] sm:$0xf]
  %v4836 = vld [vmem:[%s4820 + $0x88] sm:$0xf]
  %s4837 = scalar_lea.vmem %s4, 12
  %v4838 = vld [vmem:[%s4837] sm:$0x3]
  %v4855 = vunpack.c.l.b16 %v4821
  %v4856 = vunpack.c.l.b16 %v4822
  %v4857 = vunpack.c.l.b16 %v4823
  %v4858 = vunpack.c.l.b16 %v4824
  %v4859 = vunpack.c.l.b16 %v4825
  %v4860 = vunpack.c.l.b16 %v4826
  %v4861 = vunpack.c.l.b16 %v4827
  %v4862 = vunpack.c.l.b16 %v4828
  %v4863 = vunpack.c.l.b16 %v4829
  %v4864 = vunpack.c.l.b16 %v4830
  %v4865 = vunpack.c.l.b16 %v4831
  %v4866 = vunpack.c.l.b16 %v4832
  %v4867 = vunpack.c.l.b16 %v4833
  %v4868 = vunpack.c.l.b16 %v4834
  %v4869 = vunpack.c.l.b16 %v4835
  %v4870 = vunpack.c.l.b16 %v4836
  %v4871 = vpack.c.b16 %v4856, %v4855
  %v4872 = vpack.c.b16 %v4858, %v4857
  %v4873 = vpack.c.b16 %v4860, %v4859
  %v4874 = vpack.c.b16 %v4862, %v4861
  %v4875 = vpack.c.b16 %v4864, %v4863
  %v4876 = vpack.c.b16 %v4866, %v4865
  %v4877 = vpack.c.b16 %v4868, %v4867
  %v4878 = vpack.c.b16 %v4870, %v4869
  %v4880 = vsel %vm1096, %v4871, 0
  %v4883 = vsel %vm1096, %v4872, 0
  %v4886 = vsel %vm1096, %v4873, 0
  %v4889 = vsel %vm1096, %v4874, 0
  %v4892 = vsel %vm1096, %v4875, 0
  %v4895 = vsel %vm1096, %v4876, 0
  %v4898 = vsel %vm1096, %v4877, 0
  %v4901 = vsel %vm1096, %v4878, 0
  %v4904 = vsel %vm1121, %v4838, 0
  %4906 = vmatpush.bf16.msra.mxu0 0
  %4907 = vmatpush.bf16.msra.mxu0 0
  %4908 = vmatpush.bf16.msra.mxu0 0
  %4909 = vmatpush.bf16.msra.mxu0 0
  %4910 = vmatpush.bf16.msra.mxu0 0
  %4911 = vmatpush.bf16.msra.mxu0 0
  %4912 = vmatpush.bf16.msra.mxu0 0
  %4913 = vmatpush.bf16.msra.mxu0 %v4904
  %4914 = vmatmul.bf16.gmra.mxu0 %v4880
  %v4915 = vpop.f32.mrf.mxu0
  %v4916 = vadd.f32 0.0, %v4915
  %v4917 = vpop.f32.mrf.mxu0
  %v4918 = vadd.f32 0.0, %v4917
  %4919 = vmatmul.bf16.gmra.mxu0 %v4883
  %v4920 = vpop.f32.mrf.mxu0
  %v4921 = vadd.f32 0.0, %v4920
  %v4922 = vpop.f32.mrf.mxu0
  %v4923 = vadd.f32 0.0, %v4922
  %4924 = vmatmul.bf16.gmra.mxu0 %v4886
  %v4925 = vpop.f32.mrf.mxu0
  %v4926 = vadd.f32 0.0, %v4925
  %v4927 = vpop.f32.mrf.mxu0
  %v4928 = vadd.f32 0.0, %v4927
  %4929 = vmatmul.bf16.gmra.mxu0 %v4889
  %v4930 = vpop.f32.mrf.mxu0
  %v4931 = vadd.f32 0.0, %v4930
  %v4932 = vpop.f32.mrf.mxu0
  %v4933 = vadd.f32 0.0, %v4932
  %4934 = vmatmul.bf16.gmra.mxu0 %v4892
  %v4935 = vpop.f32.mrf.mxu0
  %v4936 = vadd.f32 0.0, %v4935
  %v4937 = vpop.f32.mrf.mxu0
  %v4938 = vadd.f32 0.0, %v4937
  %4939 = vmatmul.bf16.gmra.mxu0 %v4895
  %v4940 = vpop.f32.mrf.mxu0
  %v4941 = vadd.f32 0.0, %v4940
  %v4942 = vpop.f32.mrf.mxu0
  %v4943 = vadd.f32 0.0, %v4942
  %4944 = vmatmul.bf16.gmra.mxu0 %v4898
  %v4945 = vpop.f32.mrf.mxu0
  %v4946 = vadd.f32 0.0, %v4945
  %v4947 = vpop.f32.mrf.mxu0
  %v4948 = vadd.f32 0.0, %v4947
  %4949 = vmatmul.bf16.gmra.mxu0 %v4901
  %v4950 = vpop.f32.mrf.mxu0
  %v4951 = vadd.f32 0.0, %v4950
  %v4952 = vpop.f32.mrf.mxu0
  %v4953 = vadd.f32 0.0, %v4952
  %4954 = vdwg.mxu0
  %v4955 = vadd.f32 %v4804, %v4916
  %v4956 = vadd.f32 %v4805, %v4918
  %v4957 = vadd.f32 %v4806, %v4921
  %v4958 = vadd.f32 %v4807, %v4923
  %v4959 = vadd.f32 %v4808, %v4926
  %v4960 = vadd.f32 %v4809, %v4928
  %v4961 = vadd.f32 %v4810, %v4931
  %v4962 = vadd.f32 %v4811, %v4933
  %v4963 = vadd.f32 %v4812, %v4936
  %v4964 = vadd.f32 %v4813, %v4938
  %v4965 = vadd.f32 %v4814, %v4941
  %v4966 = vadd.f32 %v4815, %v4943
  %v4967 = vadd.f32 %v4816, %v4946
  %v4968 = vadd.f32 %v4817, %v4948
  %v4969 = vadd.f32 %v4818, %v4951
  %v4970 = vadd.f32 %v4819, %v4953
  %v4971 = vld [vmem:[%s4820] sm:$0xf]
  %v4972 = vld [vmem:[%s4820 + $0x4] sm:$0x1]
  %v4973 = vld [vmem:[%s4820 + $0x8] sm:$0xf]
  %v4974 = vld [vmem:[%s4820 + $0xc] sm:$0x1]
  %v4975 = vld [vmem:[%s4820 + $0x10] sm:$0xf]
  %v4976 = vld [vmem:[%s4820 + $0x14] sm:$0x1]
  %v4977 = vld [vmem:[%s4820 + $0x18] sm:$0xf]
  %v4978 = vld [vmem:[%s4820 + $0x1c] sm:$0x1]
  %v4979 = vld [vmem:[%s4820 + $0x20] sm:$0xf]
  %v4980 = vld [vmem:[%s4820 + $0x24] sm:$0x1]
  %v4981 = vld [vmem:[%s4820 + $0x28] sm:$0xf]
  %v4982 = vld [vmem:[%s4820 + $0x2c] sm:$0x1]
  %v4983 = vld [vmem:[%s4820 + $0x30] sm:$0xf]
  %v4984 = vld [vmem:[%s4820 + $0x34] sm:$0x1]
  %v4985 = vld [vmem:[%s4820 + $0x38] sm:$0xf]
  %v4986 = vld [vmem:[%s4820 + $0x3c] sm:$0x1]
  %v4987 = vld [vmem:[%s4820 + $0x50] sm:$0xf]
  %v4988 = vld [vmem:[%s4820 + $0x54] sm:$0x1]
  %v4989 = vld [vmem:[%s4820 + $0x58] sm:$0xf]
  %v4990 = vld [vmem:[%s4820 + $0x5c] sm:$0x1]
  %v4991 = vld [vmem:[%s4820 + $0x60] sm:$0xf]
  %v4992 = vld [vmem:[%s4820 + $0x64] sm:$0x1]
  %v4993 = vld [vmem:[%s4820 + $0x68] sm:$0xf]
  %v4994 = vld [vmem:[%s4820 + $0x6c] sm:$0x1]
  %v4995 = vld [vmem:[%s4820 + $0x70] sm:$0xf]
  %v4996 = vld [vmem:[%s4820 + $0x74] sm:$0x1]
  %v4997 = vld [vmem:[%s4820 + $0x78] sm:$0xf]
  %v4998 = vld [vmem:[%s4820 + $0x7c] sm:$0x1]
  %v4999 = vld [vmem:[%s4820 + $0x80] sm:$0xf]
  %v5000 = vld [vmem:[%s4820 + $0x84] sm:$0x1]
  %v5001 = vld [vmem:[%s4820 + $0x88] sm:$0xf]
  %v5002 = vld [vmem:[%s4820 + $0x8c] sm:$0x1]
  %v5004 = vshrl.u32 %v4971, 16
  %v5006 = vrot.slane %v5004, 4
  %v5007 = vshll.u32 %v4971, 16
  %v5009 = vrot.slane %v5007, 5
  %v5010 = vor.u32 %v5006, %v5009
  %v5011 = vrot.slane %v5010, 4
  %v5013 = vshll.u32 %v4972, 16
  %v5015 = vrot.slane %v5013, 5
  %v5016 = vsel %vm845, %v5011, %v5015
  %v5018 = vshrl.u32 %v4973, 16
  %v5020 = vrot.slane %v5018, 4
  %v5021 = vshll.u32 %v4973, 16
  %v5023 = vrot.slane %v5021, 5
  %v5024 = vor.u32 %v5020, %v5023
  %v5025 = vrot.slane %v5024, 4
  %v5027 = vshll.u32 %v4974, 16
  %v5029 = vrot.slane %v5027, 5
  %v5030 = vsel %vm845, %v5025, %v5029
  %v5032 = vshrl.u32 %v4975, 16
  %v5034 = vrot.slane %v5032, 4
  %v5035 = vshll.u32 %v4975, 16
  %v5037 = vrot.slane %v5035, 5
  %v5038 = vor.u32 %v5034, %v5037
  %v5039 = vrot.slane %v5038, 4
  %v5041 = vshll.u32 %v4976, 16
  %v5043 = vrot.slane %v5041, 5
  %v5044 = vsel %vm845, %v5039, %v5043
  %v5046 = vshrl.u32 %v4977, 16
  %v5048 = vrot.slane %v5046, 4
  %v5049 = vshll.u32 %v4977, 16
  %v5051 = vrot.slane %v5049, 5
  %v5052 = vor.u32 %v5048, %v5051
  %v5053 = vrot.slane %v5052, 4
  %v5055 = vshll.u32 %v4978, 16
  %v5057 = vrot.slane %v5055, 5
  %v5058 = vsel %vm845, %v5053, %v5057
  %v5060 = vshrl.u32 %v4979, 16
  %v5062 = vrot.slane %v5060, 4
  %v5063 = vshll.u32 %v4979, 16
  %v5065 = vrot.slane %v5063, 5
  %v5066 = vor.u32 %v5062, %v5065
  %v5067 = vrot.slane %v5066, 4
  %v5069 = vshll.u32 %v4980, 16
  %v5071 = vrot.slane %v5069, 5
  %v5072 = vsel %vm845, %v5067, %v5071
  %v5074 = vshrl.u32 %v4981, 16
  %v5076 = vrot.slane %v5074, 4
  %v5077 = vshll.u32 %v4981, 16
  %v5079 = vrot.slane %v5077, 5
  %v5080 = vor.u32 %v5076, %v5079
  %v5081 = vrot.slane %v5080, 4
  %v5083 = vshll.u32 %v4982, 16
  %v5085 = vrot.slane %v5083, 5
  %v5086 = vsel %vm845, %v5081, %v5085
  %v5088 = vshrl.u32 %v4983, 16
  %v5090 = vrot.slane %v5088, 4
  %v5091 = vshll.u32 %v4983, 16
  %v5093 = vrot.slane %v5091, 5
  %v5094 = vor.u32 %v5090, %v5093
  %v5095 = vrot.slane %v5094, 4
  %v5097 = vshll.u32 %v4984, 16
  %v5099 = vrot.slane %v5097, 5
  %v5100 = vsel %vm845, %v5095, %v5099
  %v5102 = vshrl.u32 %v4985, 16
  %v5104 = vrot.slane %v5102, 4
  %v5105 = vshll.u32 %v4985, 16
  %v5107 = vrot.slane %v5105, 5
  %v5108 = vor.u32 %v5104, %v5107
  %v5109 = vrot.slane %v5108, 4
  %v5111 = vshll.u32 %v4986, 16
  %v5113 = vrot.slane %v5111, 5
  %v5114 = vsel %vm845, %v5109, %v5113
  %v5116 = vshrl.u32 %v4987, 16
  %v5118 = vrot.slane %v5116, 4
  %v5119 = vshll.u32 %v4987, 16
  %v5121 = vrot.slane %v5119, 5
  %v5122 = vor.u32 %v5118, %v5121
  %v5123 = vrot.slane %v5122, 4
  %v5125 = vshll.u32 %v4988, 16
  %v5127 = vrot.slane %v5125, 5
  %v5128 = vsel %vm845, %v5123, %v5127
  %v5130 = vshrl.u32 %v4989, 16
  %v5132 = vrot.slane %v5130, 4
  %v5133 = vshll.u32 %v4989, 16
  %v5135 = vrot.slane %v5133, 5
  %v5136 = vor.u32 %v5132, %v5135
  %v5137 = vrot.slane %v5136, 4
  %v5139 = vshll.u32 %v4990, 16
  %v5141 = vrot.slane %v5139, 5
  %v5142 = vsel %vm845, %v5137, %v5141
  %v5144 = vshrl.u32 %v4991, 16
  %v5146 = vrot.slane %v5144, 4
  %v5147 = vshll.u32 %v4991, 16
  %v5149 = vrot.slane %v5147, 5
  %v5150 = vor.u32 %v5146, %v5149
  %v5151 = vrot.slane %v5150, 4
  %v5153 = vshll.u32 %v4992, 16
  %v5155 = vrot.slane %v5153, 5
  %v5156 = vsel %vm845, %v5151, %v5155
  %v5158 = vshrl.u32 %v4993, 16
  %v5160 = vrot.slane %v5158, 4
  %v5161 = vshll.u32 %v4993, 16
  %v5163 = vrot.slane %v5161, 5
  %v5164 = vor.u32 %v5160, %v5163
  %v5165 = vrot.slane %v5164, 4
  %v5167 = vshll.u32 %v4994, 16
  %v5169 = vrot.slane %v5167, 5
  %v5170 = vsel %vm845, %v5165, %v5169
  %v5172 = vshrl.u32 %v4995, 16
  %v5174 = vrot.slane %v5172, 4
  %v5175 = vshll.u32 %v4995, 16
  %v5177 = vrot.slane %v5175, 5
  %v5178 = vor.u32 %v5174, %v5177
  %v5179 = vrot.slane %v5178, 4
  %v5181 = vshll.u32 %v4996, 16
  %v5183 = vrot.slane %v5181, 5
  %v5184 = vsel %vm845, %v5179, %v5183
  %v5186 = vshrl.u32 %v4997, 16
  %v5188 = vrot.slane %v5186, 4
  %v5189 = vshll.u32 %v4997, 16
  %v5191 = vrot.slane %v5189, 5
  %v5192 = vor.u32 %v5188, %v5191
  %v5193 = vrot.slane %v5192, 4
  %v5195 = vshll.u32 %v4998, 16
  %v5197 = vrot.slane %v5195, 5
  %v5198 = vsel %vm845, %v5193, %v5197
  %v5200 = vshrl.u32 %v4999, 16
  %v5202 = vrot.slane %v5200, 4
  %v5203 = vshll.u32 %v4999, 16
  %v5205 = vrot.slane %v5203, 5
  %v5206 = vor.u32 %v5202, %v5205
  %v5207 = vrot.slane %v5206, 4
  %v5209 = vshll.u32 %v5000, 16
  %v5211 = vrot.slane %v5209, 5
  %v5212 = vsel %vm845, %v5207, %v5211
  %v5214 = vshrl.u32 %v5001, 16
  %v5216 = vrot.slane %v5214, 4
  %v5217 = vshll.u32 %v5001, 16
  %v5219 = vrot.slane %v5217, 5
  %v5220 = vor.u32 %v5216, %v5219
  %v5221 = vrot.slane %v5220, 4
  %v5223 = vshll.u32 %v5002, 16
  %v5225 = vrot.slane %v5223, 5
  %v5226 = vsel %vm845, %v5221, %v5225
  %s5227 = scalar_lea.vmem %s4, 14
  %v5228 = vld [vmem:[%s5227] sm:$0x3]
  %v5229 = vunpack.c.l.b16 %v5016
  %v5230 = vunpack.c.l.b16 %v5030
  %v5231 = vunpack.c.l.b16 %v5044
  %v5232 = vunpack.c.l.b16 %v5058
  %v5233 = vunpack.c.l.b16 %v5072
  %v5234 = vunpack.c.l.b16 %v5086
  %v5235 = vunpack.c.l.b16 %v5100
  %v5236 = vunpack.c.l.b16 %v5114
  %v5237 = vunpack.c.l.b16 %v5128
  %v5238 = vunpack.c.l.b16 %v5142
  %v5239 = vunpack.c.l.b16 %v5156
  %v5240 = vunpack.c.l.b16 %v5170
  %v5241 = vunpack.c.l.b16 %v5184
  %v5242 = vunpack.c.l.b16 %v5198
  %v5243 = vunpack.c.l.b16 %v5212
  %v5244 = vunpack.c.l.b16 %v5226
  %v5245 = vpack.c.b16 %v5230, %v5229
  %v5246 = vpack.c.b16 %v5232, %v5231
  %v5247 = vpack.c.b16 %v5234, %v5233
  %v5248 = vpack.c.b16 %v5236, %v5235
  %v5249 = vpack.c.b16 %v5238, %v5237
  %v5250 = vpack.c.b16 %v5240, %v5239
  %v5251 = vpack.c.b16 %v5242, %v5241
  %v5252 = vpack.c.b16 %v5244, %v5243
  %v5254 = vsel %vm1096, %v5245, 0
  %v5257 = vsel %vm1096, %v5246, 0
  %v5260 = vsel %vm1096, %v5247, 0
  %v5263 = vsel %vm1096, %v5248, 0
  %v5266 = vsel %vm1096, %v5249, 0
  %v5269 = vsel %vm1096, %v5250, 0
  %v5272 = vsel %vm1096, %v5251, 0
  %v5275 = vsel %vm1096, %v5252, 0
  %v5278 = vsel %vm1121, %v5228, 0
  %5280 = vmatpush.bf16.msra.mxu0 0
  %5281 = vmatpush.bf16.msra.mxu0 0
  %5282 = vmatpush.bf16.msra.mxu0 0
  %5283 = vmatpush.bf16.msra.mxu0 0
  %5284 = vmatpush.bf16.msra.mxu0 0
  %5285 = vmatpush.bf16.msra.mxu0 0
  %5286 = vmatpush.bf16.msra.mxu0 0
  %5287 = vmatpush.bf16.msra.mxu0 %v5278
  %5288 = vmatmul.bf16.gmra.mxu0 %v5254
  %v5289 = vpop.f32.mrf.mxu0
  %v5290 = vadd.f32 0.0, %v5289
  %v5291 = vpop.f32.mrf.mxu0
  %v5292 = vadd.f32 0.0, %v5291
  %5293 = vmatmul.bf16.gmra.mxu0 %v5257
  %v5294 = vpop.f32.mrf.mxu0
  %v5295 = vadd.f32 0.0, %v5294
  %v5296 = vpop.f32.mrf.mxu0
  %v5297 = vadd.f32 0.0, %v5296
  %5298 = vmatmul.bf16.gmra.mxu0 %v5260
  %v5299 = vpop.f32.mrf.mxu0
  %v5300 = vadd.f32 0.0, %v5299
  %v5301 = vpop.f32.mrf.mxu0
  %v5302 = vadd.f32 0.0, %v5301
  %5303 = vmatmul.bf16.gmra.mxu0 %v5263
  %v5304 = vpop.f32.mrf.mxu0
  %v5305 = vadd.f32 0.0, %v5304
  %v5306 = vpop.f32.mrf.mxu0
  %v5307 = vadd.f32 0.0, %v5306
  %5308 = vmatmul.bf16.gmra.mxu0 %v5266
  %v5309 = vpop.f32.mrf.mxu0
  %v5310 = vadd.f32 0.0, %v5309
  %v5311 = vpop.f32.mrf.mxu0
  %v5312 = vadd.f32 0.0, %v5311
  %5313 = vmatmul.bf16.gmra.mxu0 %v5269
  %v5314 = vpop.f32.mrf.mxu0
  %v5315 = vadd.f32 0.0, %v5314
  %v5316 = vpop.f32.mrf.mxu0
  %v5317 = vadd.f32 0.0, %v5316
  %5318 = vmatmul.bf16.gmra.mxu0 %v5272
  %v5319 = vpop.f32.mrf.mxu0
  %v5320 = vadd.f32 0.0, %v5319
  %v5321 = vpop.f32.mrf.mxu0
  %v5322 = vadd.f32 0.0, %v5321
  %5323 = vmatmul.bf16.gmra.mxu0 %v5275
  %v5324 = vpop.f32.mrf.mxu0
  %v5325 = vadd.f32 0.0, %v5324
  %v5326 = vpop.f32.mrf.mxu0
  %v5327 = vadd.f32 0.0, %v5326
  %5328 = vdwg.mxu0
  %v5329 = vadd.f32 %v4955, %v5290
  %v5330 = vadd.f32 %v4956, %v5292
  %v5331 = vadd.f32 %v4957, %v5295
  %v5332 = vadd.f32 %v4958, %v5297
  %v5333 = vadd.f32 %v4959, %v5300
  %v5334 = vadd.f32 %v4960, %v5302
  %v5335 = vadd.f32 %v4961, %v5305
  %v5336 = vadd.f32 %v4962, %v5307
  %v5337 = vadd.f32 %v4963, %v5310
  %v5338 = vadd.f32 %v4964, %v5312
  %v5339 = vadd.f32 %v4965, %v5315
  %v5340 = vadd.f32 %v4966, %v5317
  %v5341 = vadd.f32 %v4967, %v5320
  %v5342 = vadd.f32 %v4968, %v5322
  %v5343 = vadd.f32 %v4969, %v5325
  %v5344 = vadd.f32 %v4970, %v5327
  %v5345 = vld [vmem:[%s4820] sm:$0xe]
  %v5346 = vld [vmem:[%s4820 + $0x8] sm:$0xe]
  %v5347 = vld [vmem:[%s4820 + $0x10] sm:$0xe]
  %v5348 = vld [vmem:[%s4820 + $0x18] sm:$0xe]
  %v5349 = vld [vmem:[%s4820 + $0x20] sm:$0xe]
  %v5350 = vld [vmem:[%s4820 + $0x28] sm:$0xe]
  %v5351 = vld [vmem:[%s4820 + $0x30] sm:$0xe]
  %v5352 = vld [vmem:[%s4820 + $0x38] sm:$0xe]
  %v5353 = vld [vmem:[%s4820 + $0x50] sm:$0xe]
  %v5354 = vld [vmem:[%s4820 + $0x58] sm:$0xe]
  %v5355 = vld [vmem:[%s4820 + $0x60] sm:$0xe]
  %v5356 = vld [vmem:[%s4820 + $0x68] sm:$0xe]
  %v5357 = vld [vmem:[%s4820 + $0x70] sm:$0xe]
  %v5358 = vld [vmem:[%s4820 + $0x78] sm:$0xe]
  %v5359 = vld [vmem:[%s4820 + $0x80] sm:$0xe]
  %v5360 = vld [vmem:[%s4820 + $0x88] sm:$0xe]
  %v5393 = vrot.slane %v5345, 5
  %v5394 = vrot.slane %v5393, 4
  %v5395 = vrot.slane %v4972, 5
  %v5396 = vsel %vm1340, %v5394, %v5395
  %v5397 = vrot.slane %v5346, 5
  %v5398 = vrot.slane %v5397, 4
  %v5399 = vrot.slane %v4974, 5
  %v5400 = vsel %vm1340, %v5398, %v5399
  %v5401 = vrot.slane %v5347, 5
  %v5402 = vrot.slane %v5401, 4
  %v5403 = vrot.slane %v4976, 5
  %v5404 = vsel %vm1340, %v5402, %v5403
  %v5405 = vrot.slane %v5348, 5
  %v5406 = vrot.slane %v5405, 4
  %v5407 = vrot.slane %v4978, 5
  %v5408 = vsel %vm1340, %v5406, %v5407
  %v5409 = vrot.slane %v5349, 5
  %v5410 = vrot.slane %v5409, 4
  %v5411 = vrot.slane %v4980, 5
  %v5412 = vsel %vm1340, %v5410, %v5411
  %v5413 = vrot.slane %v5350, 5
  %v5414 = vrot.slane %v5413, 4
  %v5415 = vrot.slane %v4982, 5
  %v5416 = vsel %vm1340, %v5414, %v5415
  %v5417 = vrot.slane %v5351, 5
  %v5418 = vrot.slane %v5417, 4
  %v5419 = vrot.slane %v4984, 5
  %v5420 = vsel %vm1340, %v5418, %v5419
  %v5421 = vrot.slane %v5352, 5
  %v5422 = vrot.slane %v5421, 4
  %v5423 = vrot.slane %v4986, 5
  %v5424 = vsel %vm1340, %v5422, %v5423
  %v5425 = vrot.slane %v5353, 5
  %v5426 = vrot.slane %v5425, 4
  %v5427 = vrot.slane %v4988, 5
  %v5428 = vsel %vm1340, %v5426, %v5427
  %v5429 = vrot.slane %v5354, 5
  %v5430 = vrot.slane %v5429, 4
  %v5431 = vrot.slane %v4990, 5
  %v5432 = vsel %vm1340, %v5430, %v5431
  %v5433 = vrot.slane %v5355, 5
  %v5434 = vrot.slane %v5433, 4
  %v5435 = vrot.slane %v4992, 5
  %v5436 = vsel %vm1340, %v5434, %v5435
  %v5437 = vrot.slane %v5356, 5
  %v5438 = vrot.slane %v5437, 4
  %v5439 = vrot.slane %v4994, 5
  %v5440 = vsel %vm1340, %v5438, %v5439
  %v5441 = vrot.slane %v5357, 5
  %v5442 = vrot.slane %v5441, 4
  %v5443 = vrot.slane %v4996, 5
  %v5444 = vsel %vm1340, %v5442, %v5443
  %v5445 = vrot.slane %v5358, 5
  %v5446 = vrot.slane %v5445, 4
  %v5447 = vrot.slane %v4998, 5
  %v5448 = vsel %vm1340, %v5446, %v5447
  %v5449 = vrot.slane %v5359, 5
  %v5450 = vrot.slane %v5449, 4
  %v5451 = vrot.slane %v5000, 5
  %v5452 = vsel %vm1340, %v5450, %v5451
  %v5453 = vrot.slane %v5360, 5
  %v5454 = vrot.slane %v5453, 4
  %v5455 = vrot.slane %v5002, 5
  %v5456 = vsel %vm1340, %v5454, %v5455
  %s5457 = scalar_lea.vmem %s4, 16
  %v5458 = vld [vmem:[%s5457] sm:$0x3]
  %v5459 = vunpack.c.l.b16 %v5396
  %v5460 = vunpack.c.l.b16 %v5400
  %v5461 = vunpack.c.l.b16 %v5404
  %v5462 = vunpack.c.l.b16 %v5408
  %v5463 = vunpack.c.l.b16 %v5412
  %v5464 = vunpack.c.l.b16 %v5416
  %v5465 = vunpack.c.l.b16 %v5420
  %v5466 = vunpack.c.l.b16 %v5424
  %v5467 = vunpack.c.l.b16 %v5428
  %v5468 = vunpack.c.l.b16 %v5432
  %v5469 = vunpack.c.l.b16 %v5436
  %v5470 = vunpack.c.l.b16 %v5440
  %v5471 = vunpack.c.l.b16 %v5444
  %v5472 = vunpack.c.l.b16 %v5448
  %v5473 = vunpack.c.l.b16 %v5452
  %v5474 = vunpack.c.l.b16 %v5456
  %v5475 = vpack.c.b16 %v5460, %v5459
  %v5476 = vpack.c.b16 %v5462, %v5461
  %v5477 = vpack.c.b16 %v5464, %v5463
  %v5478 = vpack.c.b16 %v5466, %v5465
  %v5479 = vpack.c.b16 %v5468, %v5467
  %v5480 = vpack.c.b16 %v5470, %v5469
  %v5481 = vpack.c.b16 %v5472, %v5471
  %v5482 = vpack.c.b16 %v5474, %v5473
  %v5484 = vsel %vm1096, %v5475, 0
  %v5487 = vsel %vm1096, %v5476, 0
  %v5490 = vsel %vm1096, %v5477, 0
  %v5493 = vsel %vm1096, %v5478, 0
  %v5496 = vsel %vm1096, %v5479, 0
  %v5499 = vsel %vm1096, %v5480, 0
  %v5502 = vsel %vm1096, %v5481, 0
  %v5505 = vsel %vm1096, %v5482, 0
  %v5508 = vsel %vm1121, %v5458, 0
  %5510 = vmatpush.bf16.msra.mxu0 0
  %5511 = vmatpush.bf16.msra.mxu0 0
  %5512 = vmatpush.bf16.msra.mxu0 0
  %5513 = vmatpush.bf16.msra.mxu0 0
  %5514 = vmatpush.bf16.msra.mxu0 0
  %5515 = vmatpush.bf16.msra.mxu0 0
  %5516 = vmatpush.bf16.msra.mxu0 0
  %5517 = vmatpush.bf16.msra.mxu0 %v5508
  %5518 = vmatmul.bf16.gmra.mxu0 %v5484
  %v5519 = vpop.f32.mrf.mxu0
  %v5520 = vadd.f32 0.0, %v5519
  %v5521 = vpop.f32.mrf.mxu0
  %v5522 = vadd.f32 0.0, %v5521
  %5523 = vmatmul.bf16.gmra.mxu0 %v5487
  %v5524 = vpop.f32.mrf.mxu0
  %v5525 = vadd.f32 0.0, %v5524
  %v5526 = vpop.f32.mrf.mxu0
  %v5527 = vadd.f32 0.0, %v5526
  %5528 = vmatmul.bf16.gmra.mxu0 %v5490
  %v5529 = vpop.f32.mrf.mxu0
  %v5530 = vadd.f32 0.0, %v5529
  %v5531 = vpop.f32.mrf.mxu0
  %v5532 = vadd.f32 0.0, %v5531
  %5533 = vmatmul.bf16.gmra.mxu0 %v5493
  %v5534 = vpop.f32.mrf.mxu0
  %v5535 = vadd.f32 0.0, %v5534
  %v5536 = vpop.f32.mrf.mxu0
  %v5537 = vadd.f32 0.0, %v5536
  %5538 = vmatmul.bf16.gmra.mxu0 %v5496
  %v5539 = vpop.f32.mrf.mxu0
  %v5540 = vadd.f32 0.0, %v5539
  %v5541 = vpop.f32.mrf.mxu0
  %v5542 = vadd.f32 0.0, %v5541
  %5543 = vmatmul.bf16.gmra.mxu0 %v5499
  %v5544 = vpop.f32.mrf.mxu0
  %v5545 = vadd.f32 0.0, %v5544
  %v5546 = vpop.f32.mrf.mxu0
  %v5547 = vadd.f32 0.0, %v5546
  %5548 = vmatmul.bf16.gmra.mxu0 %v5502
  %v5549 = vpop.f32.mrf.mxu0
  %v5550 = vadd.f32 0.0, %v5549
  %v5551 = vpop.f32.mrf.mxu0
  %v5552 = vadd.f32 0.0, %v5551
  %5553 = vmatmul.bf16.gmra.mxu0 %v5505
  %v5554 = vpop.f32.mrf.mxu0
  %v5555 = vadd.f32 0.0, %v5554
  %v5556 = vpop.f32.mrf.mxu0
  %v5557 = vadd.f32 0.0, %v5556
  %5558 = vdwg.mxu0
  %v5559 = vadd.f32 %v5329, %v5520
  %v5560 = vadd.f32 %v5330, %v5522
  %v5561 = vadd.f32 %v5331, %v5525
  %v5562 = vadd.f32 %v5332, %v5527
  %v5563 = vadd.f32 %v5333, %v5530
  %v5564 = vadd.f32 %v5334, %v5532
  %v5565 = vadd.f32 %v5335, %v5535
  %v5566 = vadd.f32 %v5336, %v5537
  %v5567 = vadd.f32 %v5337, %v5540
  %v5568 = vadd.f32 %v5338, %v5542
  %v5569 = vadd.f32 %v5339, %v5545
  %v5570 = vadd.f32 %v5340, %v5547
  %v5571 = vadd.f32 %v5341, %v5550
  %v5572 = vadd.f32 %v5342, %v5552
  %v5573 = vadd.f32 %v5343, %v5555
  %v5574 = vadd.f32 %v5344, %v5557
  %v5575 = vld [vmem:[%s5] sm:$0x1]
  %v5577 = vperm.slane %v5575, 0
  %v5579 = vmul.f32 %v5559, %v5577
  %v5580 = vmul.f32 %v5560, %v5577
  %v5581 = vmul.f32 %v5561, %v5577
  %v5582 = vmul.f32 %v5562, %v5577
  %v5583 = vmul.f32 %v5563, %v5577
  %v5584 = vmul.f32 %v5564, %v5577
  %v5585 = vmul.f32 %v5565, %v5577
  %v5586 = vmul.f32 %v5566, %v5577
  %v5587 = vmul.f32 %v5567, %v5577
  %v5588 = vmul.f32 %v5568, %v5577
  %v5589 = vmul.f32 %v5569, %v5577
  %v5590 = vmul.f32 %v5570, %v5577
  %v5591 = vmul.f32 %v5571, %v5577
  %v5592 = vmul.f32 %v5572, %v5577
  %v5593 = vmul.f32 %v5573, %v5577
  %v5594 = vmul.f32 %v5574, %v5577
  %v5595 = vld [vmem:[%s6] sm:$0x1]
  %v5597 = vperm.slane %v5595, 0
  %v5599 = vadd.f32 %v5579, %v5597
  %v5600 = vadd.f32 %v5580, %v5597
  %v5601 = vadd.f32 %v5581, %v5597
  %v5602 = vadd.f32 %v5582, %v5597
  %v5603 = vadd.f32 %v5583, %v5597
  %v5604 = vadd.f32 %v5584, %v5597
  %v5605 = vadd.f32 %v5585, %v5597
  %v5606 = vadd.f32 %v5586, %v5597
  %v5607 = vadd.f32 %v5587, %v5597
  %v5608 = vadd.f32 %v5588, %v5597
  %v5609 = vadd.f32 %v5589, %v5597
  %v5610 = vadd.f32 %v5590, %v5597
  %v5611 = vadd.f32 %v5591, %v5597
  %v5612 = vadd.f32 %v5592, %v5597
  %v5613 = vadd.f32 %v5593, %v5597
  %v5614 = vadd.f32 %v5594, %v5597
  %v5615 = vmax.f32 %v5599, 0.0
  %v5616 = vmax.f32 %v5600, 0.0
  %v5617 = vmax.f32 %v5601, 0.0
  %v5618 = vmax.f32 %v5602, 0.0
  %v5619 = vmax.f32 %v5603, 0.0
  %v5620 = vmax.f32 %v5604, 0.0
  %v5621 = vmax.f32 %v5605, 0.0
  %v5622 = vmax.f32 %v5606, 0.0
  %v5623 = vmax.f32 %v5607, 0.0
  %v5624 = vmax.f32 %v5608, 0.0
  %v5625 = vmax.f32 %v5609, 0.0
  %v5626 = vmax.f32 %v5610, 0.0
  %v5627 = vmax.f32 %v5611, 0.0
  %v5628 = vmax.f32 %v5612, 0.0
  %v5629 = vmax.f32 %v5613, 0.0
  %v5630 = vmax.f32 %v5614, 0.0
  %vm5631 = vcmask 64512
  %5632 = vst.msk [vmem:[%s7] sm:$0xff] %vm5631, %v5615
  %5633 = vst.msk [vmem:[%s7 + $0x8] sm:$0xff] %vm5631, %v5616
  %5634 = vst.msk [vmem:[%s7 + $0x10] sm:$0xff] %vm5631, %v5617
  %5635 = vst.msk [vmem:[%s7 + $0x18] sm:$0xff] %vm5631, %v5618
  %5636 = vst.msk [vmem:[%s7 + $0x20] sm:$0xff] %vm5631, %v5619
  %5637 = vst.msk [vmem:[%s7 + $0x28] sm:$0xff] %vm5631, %v5620
  %5638 = vst.msk [vmem:[%s7 + $0x30] sm:$0xff] %vm5631, %v5621
  %5639 = vst.msk [vmem:[%s7 + $0x38] sm:$0xff] %vm5631, %v5622
  %5640 = vst.msk [vmem:[%s7 + $0x40] sm:$0xff] %vm5631, %v5623
  %5641 = vst.msk [vmem:[%s7 + $0x48] sm:$0xff] %vm5631, %v5624
  %5642 = vst.msk [vmem:[%s7 + $0x50] sm:$0xff] %vm5631, %v5625
  %5643 = vst.msk [vmem:[%s7 + $0x58] sm:$0xff] %vm5631, %v5626
  %5644 = vst.msk [vmem:[%s7 + $0x60] sm:$0xff] %vm5631, %v5627
  %5645 = vst.msk [vmem:[%s7 + $0x68] sm:$0xff] %vm5631, %v5628
  %5646 = vst.msk [vmem:[%s7 + $0x70] sm:$0xff] %vm5631, %v5629
  %5647 = vst.msk [vmem:[%s7 + $0x78] sm:$0xff] %vm5631, %v5630
  // Predicated region
  $region30: #{tpu_custom_call.1} parent=0 // pred_check
    _
  $region31: #{tpu_custom_call.1} parent=0 // pred_check_branch
    %5649 = sbr.rel (0) target = $region33
  $region32: #{tpu_custom_call.1} parent=0 // pred_region
    _
  $region33: #{tpu_custom_call.1} parent=0 // pred_fallthru
    _
  // Predicated region
  $region34: #{tpu_custom_call.1} parent=0 // pred_check
    _
  $region35: #{tpu_custom_call.1} parent=0 // pred_check_branch
    %5651 = sbr.rel (0) target = $region37
  $region36: #{tpu_custom_call.1} parent=0 // pred_region
    _
  $region37: #{tpu_custom_call.1} parent=0 // pred_fallthru
    _

</llo_original>
